<compile_context>
chip_gen: v7x
topology: tpu7x:2x2x1
jax: 0.10.0
libtpu: 0.0.40
codegen_flags: <defaults>
</compile_context>

<pallas_src>
import numpy as np
import jax
import jax.numpy as jnp
from jax import lax
from jax.experimental import pallas as pl
from jax.experimental.pallas import tpu as pltpu

INV_SQRT2 = 0.7071067811865476


# ----------------------------------------------------------------------------
# Pallas kernel: one BiGaBP unfolding iteration for one block of batch elements.
# ----------------------------------------------------------------------------
def _bigabp_kernel(scal_ref,      # SMEM (6,): [alpha, beta-alpha, sqrt(2)/gamma, eta, phi, N0]
                   state_ref,     # (6, Bb, N, M, K): h_re, h_im, x_re, x_im, vx, vh
                   y_ref,         # (2, Bb, N, 1, K): y_re, y_im
                   pm_ref,        # (Bb, 1, 1, K)
                   out_ref):      # (6, Bb, N, M, K)
    alpha = scal_ref[0]
    dba = scal_ref[1]            # beta - alpha
    tanh_scale = scal_ref[2]     # sqrt(2) / gamma
    eta = scal_ref[3]
    phi = scal_ref[4]
    n0 = scal_ref[5]

    _, Bb, N, M, K = state_ref.shape

    # Zero-cost views into the packed state.
    h_re_ref = state_ref.at[0]
    h_im_ref = state_ref.at[1]
    x_re_ref = state_ref.at[2]
    x_im_ref = state_ref.at[3]
    vx_ref = state_ref.at[4]
    vh_ref = state_ref.at[5]
    h_re_o = out_ref.at[0]
    h_im_o = out_ref.at[1]
    x_re_o = out_ref.at[2]
    x_im_o = out_ref.at[3]
    vx_o = out_ref.at[4]
    vh_o = out_ref.at[5]
    y_re_ref = y_ref.at[0]
    y_im_ref = y_ref.at[1]

    ones_kk = jnp.ones((K, K), jnp.float32)

    def sum_k(x):
        # Lane-axis (K) sum, returned already broadcast across all K lanes,
        # computed on the otherwise-idle MXU (frees the XLU / VPU).
        s = jnp.dot(x.reshape(N * M, K), ones_kk,
                    precision=lax.Precision.HIGHEST,
                    preferred_element_type=jnp.float32)
        return s.reshape(N, M, K)

    def body(b, carry):
        h_re = h_re_ref[b]           # (N, M, K)
        h_im = h_im_ref[b]
        x_re = x_re_ref[b]
        x_im = x_im_ref[b]
        vx = vx_ref[b]
        vh = vh_ref[b]
        y_re = y_re_ref[b]           # (N, 1, K)
        y_im = y_im_ref[b]
        pm = pm_ref[b]               # (1, 1, K)

        # ---------------- FN / Y_est ----------------
        hx_re = h_re * x_re - h_im * x_im
        hx_im = h_re * x_im + h_im * x_re
        err_re = y_re - jnp.sum(hx_re, axis=1, keepdims=True) + hx_re
        err_im = y_im - jnp.sum(hx_im, axis=1, keepdims=True) + hx_im

        habs2 = h_re * h_re + h_im * h_im
        xabs2 = x_re * x_re + x_im * x_im
        tmp = habs2 * vx + vh * (xabs2 + vx)
        xi_y = jnp.sum(tmp, axis=1, keepdims=True) - tmp + n0
        xi_x = xi_y + vh
        xi_h = xi_y + phi * vx

        # ---------------- VN_X ----------------
        inv_xi_x = pl.reciprocal(xi_x, approx=True)
        t_re = h_re * inv_xi_x               # conj(H) / xi_x
        t_im = -h_im * inv_xi_x
        var_tmp = habs2 * inv_xi_x           # real(conj(H) * H / xi_x)
        var = pl.reciprocal(
            jnp.sum(var_tmp, axis=0, keepdims=True) - var_tmp, approx=True)
        te_re = t_re * err_re - t_im * err_im
        te_im = t_re * err_im + t_im * err_re
        est_re = (jnp.sum(te_re, axis=0, keepdims=True) - te_re) * var
        est_im = (jnp.sum(te_im, axis=0, keepdims=True) - te_im) * var

        # QPSK soft demod with temperature gamma
        ep_re = INV_SQRT2 * jnp.tanh(est_re * tanh_scale)
        ep_im = INV_SQRT2 * jnp.tanh(est_im * tanh_scale)
        vp = 1.0 - (ep_re * ep_re + ep_im * ep_im)

        eta_pm = eta * pm
        x_re_o[b] = x_re + (ep_re - x_re) * eta_pm
        x_im_o[b] = x_im + (ep_im - x_im) * eta_pm
        vx_o[b] = vx + (vp - vx) * eta_pm

        # ---------------- VN_H ----------------
        inv_xi_h = pl.reciprocal(xi_h, approx=True)
        mask_inv = (alpha + dba * pm) * inv_xi_h     # mask / xi_h
        th_re = x_re * mask_inv                      # mask * conj(X) / xi_h
        th_im = -x_im * mask_inv
        xabs2_h = x_re * x_re + x_im * x_im          # recompute: shorter live range
        var_tmp_h = xabs2_h * mask_inv
        var_h = pl.reciprocal(sum_k(var_tmp_h) - var_tmp_h, approx=True)
        teh_re = th_re * err_re - th_im * err_im
        teh_im = th_re * err_im + th_im * err_re
        esth_re = (sum_k(teh_re) - teh_re) * var_h
        esth_im = (sum_k(teh_im) - teh_im) * var_h

        # Gaussian-prior channel shrinkage (demod_H): prior CN(0, phi)
        g = phi * pl.reciprocal(phi + var_h, approx=True)
        h_re_o[b] = h_re + (g * esth_re - h_re) * eta
        h_im_o[b] = h_im + (g * esth_im - h_im) * eta
        vh_o[b] = vh + (g * var_h - vh) * eta
        return carry

    lax.fori_loop(0, Bb, body, 0)


# ----------------------------------------------------------------------------
# Wrapper
# ----------------------------------------------------------------------------
@jax.jit
def bigabp_unfolding_iter(H_est, X_est, var_X, var_H, Y, N0,
                          alpha, beta, gamma, eta, phi, pilot_mask):
    """One BiGaBP unfolding iteration (first_data_layer=False path)."""
    B, N, M, K = H_est.shape
    f32 = jnp.float32

    alpha = jnp.asarray(alpha, f32)
    beta = jnp.asarray(beta, f32)
    gamma = jnp.asarray(gamma, f32)
    eta = jnp.asarray(eta, f32)
    phi = jnp.asarray(phi, f32)
    N0 = jnp.asarray(N0, f32)

    scalars = jnp.stack([alpha, beta - alpha,
                         jnp.float32(2.0 * INV_SQRT2) / gamma,   # sqrt(2)/gamma
                         eta, phi, N0]).astype(f32)

    # Pack the six state planes into one array -> 2 large DMAs instead of 12.
    state_in = jnp.stack([jnp.real(H_est), jnp.imag(H_est),
                          jnp.real(X_est), jnp.imag(X_est),
                          var_X, var_H]).astype(f32)             # (6, B, N, M, K)
    y_in = jnp.stack([jnp.real(Y), jnp.imag(Y)]).astype(f32)[:, :, :, None, :]
    # (2, B, N, 1, K)
    pm = pilot_mask.astype(f32)                                  # (B, 1, 1, K)

    # 2 parallel steps (keeps both v7x TensorCores busy) while amortizing the
    # per-grid-step overhead on single-TC v5e/v6e; fall back to grid=(B,) for
    # odd B.
    G = 2 if (B % 2 == 0) else B
    Bb = B // G

    smem_spec = pl.BlockSpec(memory_space=pltpu.MemorySpace.SMEM)
    state_spec = pl.BlockSpec((6, Bb, N, M, K), lambda g: (0, g, 0, 0, 0))
    y_spec = pl.BlockSpec((2, Bb, N, 1, K), lambda g: (0, g, 0, 0, 0))
    pm_spec = pl.BlockSpec((Bb, 1, 1, K), lambda g: (g, 0, 0, 0))

    out = pl.pallas_call(
        _bigabp_kernel,
        grid=(G,),
        in_specs=[smem_spec, state_spec, y_spec, pm_spec],
        out_specs=state_spec,
        out_shape=jax.ShapeDtypeStruct((6, B, N, M, K), f32),
        input_output_aliases={1: 0},   # state updated in place
        compiler_params=pltpu.CompilerParams(
            dimension_semantics=("parallel",)),
    )(scalars, state_in, y_in, pm)

    H_new = out[0] + 1j * out[1]
    X_new = out[2] + 1j * out[3]
    return H_new, X_new, out[4], out[5]


# ----------------------------------------------------------------------------
# Pure-JAX reference (mirrors the PyTorch module with complex arithmetic)
# ----------------------------------------------------------------------------
def reference_forward(Hc, Xc, vX, vH, Yc, N0, alpha, beta, gamma, eta, phi, pm):
    pmi = 1.0 - pm
    HX = Hc * Xc
    HX_ = jnp.sum(HX, axis=2, keepdims=True)
    err = Yc[:, :, None, :] - HX_ + HX
    tmp = (Hc * jnp.conj(Hc)).real * vX + vH * ((Xc * jnp.conj(Xc)).real + vX)
    xi_y = jnp.sum(tmp, axis=2, keepdims=True) - tmp + N0
    xi_x = xi_y + vH
    xi_h = xi_y + phi * vX

    # VN_X
    t = jnp.conj(Hc) / xi_x
    var_tmp = (t * Hc).real
    var = 1.0 / (jnp.sum(var_tmp, axis=1, keepdims=True) - var_tmp)
    te = t * err
    est = (jnp.sum(te, axis=1, keepdims=True) - te) * var
    ep_re = INV_SQRT2 * jnp.tanh(np.sqrt(2.0).astype(np.float32) * est.real / gamma)
    ep_im = INV_SQRT2 * jnp.tanh(np.sqrt(2.0).astype(np.float32) * est.imag / gamma)
    vp = 1.0 - (ep_re ** 2 + ep_im ** 2)
    ep = ep_re + 1j * ep_im
    X_new = Xc + eta * ((ep - Xc) * pm)
    vX_new = vX + eta * ((vp - vX) * pm)

    # VN_H
    mask = alpha * pmi + beta * pm
    th = mask * jnp.conj(Xc) / xi_h
    vth = (th * Xc).real
    varh = 1.0 / (jnp.sum(vth, axis=3, keepdims=True) - vth)
    teh = th * err
    esth = (jnp.sum(teh, axis=3, keepdims=True) - teh) * varh
    g = phi / (phi + varh)
    eph = g * esth
    vph = g * varh
    H_new = Hc + (eph - Hc) * eta
    vH_new = vH + (vph - vH) * eta
    return H_new, X_new, vX_new, vH_new


# ----------------------------------------------------------------------------
# Main
# ----------------------------------------------------------------------------
if __name__ == "__main__":
    # Module hyper-parameters (deterministic, chosen in-script)
    bs, c, cp = 1, 4, 2
    k, kp = 128, 16
    N, M = 4, 8                 # rx antennas, users
    B = bs * c
    phi = 1.0
    alpha_init, beta_init, gamma_init, eta_init = 0.9, 1.1, 0.5, 0.7
    N0 = 0.1

    # pilot mask exactly as the PyTorch __init__ builds it
    pm_np = np.ones((c, 1, 1, k), np.float32)
    pm_np[:cp, :, :, :kp] = 0.0
    pm_np = np.tile(pm_np, (bs, 1, 1, 1))
    pilot_mask = jnp.asarray(pm_np)

    key = jax.random.PRNGKey(0)
    ks = jax.random.split(key, 8)
    shape4 = (B, N, M, k)
    H_est = (jax.random.normal(ks[0], shape4, jnp.float32)
             + 1j * jax.random.normal(ks[1], shape4, jnp.float32)) * 0.5
    X_est = (jax.random.normal(ks[2], shape4, jnp.float32)
             + 1j * jax.random.normal(ks[3], shape4, jnp.float32)) * INV_SQRT2
    var_X = 0.3 + 0.2 * jax.random.uniform(ks[4], shape4, jnp.float32)
    var_H = 0.2 + 0.2 * jax.random.uniform(ks[5], shape4, jnp.float32)
    Y = (jax.random.normal(ks[6], (B, N, k), jnp.float32)
         + 1j * jax.random.normal(ks[7], (B, N, k), jnp.float32))

    alpha = jnp.float32(alpha_init)
    beta = jnp.float32(beta_init)
    gamma = jnp.float32(gamma_init)
    eta = jnp.float32(eta_init)
    phi_j = jnp.float32(phi)
    N0_j = jnp.float32(N0)

    outs = bigabp_unfolding_iter(H_est, X_est, var_X, var_H, Y, N0_j,
                                 alpha, beta, gamma, eta, phi_j, pilot_mask)
    outs = jax.block_until_ready(outs)
    H_new, X_new, vX_new, vH_new = outs

    # Cross-check against pure-JAX reference of the module semantics.
    # Tolerance is slightly relaxed vs. bit-exact divides because the kernel
    # uses approx reciprocals (EUP) and MXU-based K-sums.
    H_r, X_r, vX_r, vH_r = reference_forward(
        H_est, X_est, var_X, var_H, Y, N0_j,
        alpha, beta, gamma, eta, phi_j, pilot_mask)

    np.testing.assert_allclose(np.asarray(H_new), np.asarray(H_r), rtol=1e-2, atol=1e-2)
    np.testing.assert_allclose(np.asarray(X_new), np.asarray(X_r), rtol=1e-2, atol=1e-2)
    np.testing.assert_allclose(np.asarray(vX_new), np.asarray(vX_r), rtol=1e-2, atol=1e-2)
    np.testing.assert_allclose(np.asarray(vH_new), np.asarray(vH_r), rtol=1e-2, atol=1e-2)

    print("KERNEL_OK")
</pallas_src>

<mosaic_0001>
module attributes {stable_mosaic.version = 11 : i64} {
  func.func @_bigabp_kernel(%arg0: i32, %arg1: memref<6xf32, #tpu.memory_space<smem>>, %arg2: memref<6x2x4x8x128xf32, #tpu.memory_space<vmem>>, %arg3: memref<2x2x4x1x128xf32, #tpu.memory_space<vmem>>, %arg4: memref<2x1x1x128xf32, #tpu.memory_space<vmem>>, %arg5: memref<6x2x4x8x128xf32, #tpu.memory_space<vmem>>) attributes {dimension_semantics = [#tpu.dimension_semantics<parallel>], iteration_bounds = array<i64: 2>, scalar_prefetch = 0 : i64, scratch_operands = 0 : i64, tpu.core_type = #tpu.core_type<tc>, window_params = [{transform_indices = @transform_0, window_bounds = array<i64: 6>}, {transform_indices = @transform_1, window_bounds = array<i64: 6, 2, 4, 8, 128>}, {transform_indices = @transform_2, window_bounds = array<i64: 2, 2, 4, 1, 128>}, {transform_indices = @transform_3, window_bounds = array<i64: 2, 1, 1, 128>}, {transform_indices = @transform_4, window_bounds = array<i64: 6, 2, 4, 8, 128>}]} {
    %c0 = arith.constant 0 : index
    %0 = memref.load %arg1[%c0] : memref<6xf32, #tpu.memory_space<smem>>
    %c1 = arith.constant 1 : index
    %1 = memref.load %arg1[%c1] : memref<6xf32, #tpu.memory_space<smem>>
    %c2 = arith.constant 2 : index
    %2 = memref.load %arg1[%c2] : memref<6xf32, #tpu.memory_space<smem>>
    %c3 = arith.constant 3 : index
    %3 = memref.load %arg1[%c3] : memref<6xf32, #tpu.memory_space<smem>>
    %c4 = arith.constant 4 : index
    %4 = memref.load %arg1[%c4] : memref<6xf32, #tpu.memory_space<smem>>
    %c5 = arith.constant 5 : index
    %5 = memref.load %arg1[%c5] : memref<6xf32, #tpu.memory_space<smem>>
    %cst = arith.constant 1.000000e+00 : f32
    %6 = vector.broadcast %cst : f32 to vector<128x128xf32>
    %c0_i32 = arith.constant 0 : i32
    %c1_i32 = arith.constant 1 : i32
    %c2_i32 = arith.constant 2 : i32
    %c3_i32 = arith.constant 3 : i32
    %c4_i32 = arith.constant 4 : i32
    %c5_i32 = arith.constant 5 : i32
    %c0_i32_0 = arith.constant 0 : i32
    %c1_i32_1 = arith.constant 1 : i32
    %c2_i32_2 = arith.constant 2 : i32
    %c3_i32_3 = arith.constant 3 : i32
    %c4_i32_4 = arith.constant 4 : i32
    %c0_i32_5 = arith.constant 0 : i32
    %c1_i32_6 = arith.constant 1 : i32
    %c5_i32_7 = arith.constant 5 : i32
    %c0_i32_8 = arith.constant 0 : i32
    %c2_i32_9 = arith.constant 2 : i32
    %7 = arith.addi %c0_i32_8, %c2_i32_9 : i32
    %c1_i32_10 = arith.constant 1 : i32
    scf.for %arg6 = %c0_i32_8 to %7 step %c1_i32_10  : i32 {
      %c0_i32_12 = arith.constant 0 : i32
      %c0_i32_13 = arith.constant 0 : i32
      %c0_i32_14 = arith.constant 0 : i32
      %c0_i32_15 = arith.constant 0 : i32
      %8 = tpu.memref_slice %arg2[%c0_i32, %c0_i32_12, %c0_i32_13, %c0_i32_14, %c0_i32_15] : memref<6x2x4x8x128xf32, #tpu.memory_space<vmem>> -> memref<1x2x4x8x128xf32, #tpu.memory_space<vmem>>
      %9 = tpu.memref_squeeze %8 : memref<1x2x4x8x128xf32, #tpu.memory_space<vmem>> -> memref<2x4x8x128xf32, #tpu.memory_space<vmem>>
      %10 = arith.index_cast %arg6 : i32 to index
      %c0_16 = arith.constant 0 : index
      %c0_17 = arith.constant 0 : index
      %c0_18 = arith.constant 0 : index
      %11 = vector.load %9[%10, %c0_16, %c0_17, %c0_18] : memref<2x4x8x128xf32, #tpu.memory_space<vmem>>, vector<1x4x8x128xf32>
      %12 = vector.shape_cast %11 : vector<1x4x8x128xf32> to vector<4x8x128xf32>
      %c0_i32_19 = arith.constant 0 : i32
      %c0_i32_20 = arith.constant 0 : i32
      %c0_i32_21 = arith.constant 0 : i32
      %c0_i32_22 = arith.constant 0 : i32
      %13 = tpu.memref_slice %arg2[%c1_i32, %c0_i32_19, %c0_i32_20, %c0_i32_21, %c0_i32_22] : memref<6x2x4x8x128xf32, #tpu.memory_space<vmem>> -> memref<1x2x4x8x128xf32, #tpu.memory_space<vmem>>
      %14 = tpu.memref_squeeze %13 : memref<1x2x4x8x128xf32, #tpu.memory_space<vmem>> -> memref<2x4x8x128xf32, #tpu.memory_space<vmem>>
      %15 = arith.index_cast %arg6 : i32 to index
      %c0_23 = arith.constant 0 : index
      %c0_24 = arith.constant 0 : index
      %c0_25 = arith.constant 0 : index
      %16 = vector.load %14[%15, %c0_23, %c0_24, %c0_25] : memref<2x4x8x128xf32, #tpu.memory_space<vmem>>, vector<1x4x8x128xf32>
      %17 = vector.shape_cast %16 : vector<1x4x8x128xf32> to vector<4x8x128xf32>
      %c0_i32_26 = arith.constant 0 : i32
      %c0_i32_27 = arith.constant 0 : i32
      %c0_i32_28 = arith.constant 0 : i32
      %c0_i32_29 = arith.constant 0 : i32
      %18 = tpu.memref_slice %arg2[%c2_i32, %c0_i32_26, %c0_i32_27, %c0_i32_28, %c0_i32_29] : memref<6x2x4x8x128xf32, #tpu.memory_space<vmem>> -> memref<1x2x4x8x128xf32, #tpu.memory_space<vmem>>
      %19 = tpu.memref_squeeze %18 : memref<1x2x4x8x128xf32, #tpu.memory_space<vmem>> -> memref<2x4x8x128xf32, #tpu.memory_space<vmem>>
      %20 = arith.index_cast %arg6 : i32 to index
      %c0_30 = arith.constant 0 : index
      %c0_31 = arith.constant 0 : index
      %c0_32 = arith.constant 0 : index
      %21 = vector.load %19[%20, %c0_30, %c0_31, %c0_32] : memref<2x4x8x128xf32, #tpu.memory_space<vmem>>, vector<1x4x8x128xf32>
      %22 = vector.shape_cast %21 : vector<1x4x8x128xf32> to vector<4x8x128xf32>
      %c0_i32_33 = arith.constant 0 : i32
      %c0_i32_34 = arith.constant 0 : i32
      %c0_i32_35 = arith.constant 0 : i32
      %c0_i32_36 = arith.constant 0 : i32
      %23 = tpu.memref_slice %arg2[%c3_i32, %c0_i32_33, %c0_i32_34, %c0_i32_35, %c0_i32_36] : memref<6x2x4x8x128xf32, #tpu.memory_space<vmem>> -> memref<1x2x4x8x128xf32, #tpu.memory_space<vmem>>
      %24 = tpu.memref_squeeze %23 : memref<1x2x4x8x128xf32, #tpu.memory_space<vmem>> -> memref<2x4x8x128xf32, #tpu.memory_space<vmem>>
      %25 = arith.index_cast %arg6 : i32 to index
      %c0_37 = arith.constant 0 : index
      %c0_38 = arith.constant 0 : index
      %c0_39 = arith.constant 0 : index
      %26 = vector.load %24[%25, %c0_37, %c0_38, %c0_39] : memref<2x4x8x128xf32, #tpu.memory_space<vmem>>, vector<1x4x8x128xf32>
      %27 = vector.shape_cast %26 : vector<1x4x8x128xf32> to vector<4x8x128xf32>
      %c0_i32_40 = arith.constant 0 : i32
      %c0_i32_41 = arith.constant 0 : i32
      %c0_i32_42 = arith.constant 0 : i32
      %c0_i32_43 = arith.constant 0 : i32
      %28 = tpu.memref_slice %arg2[%c4_i32, %c0_i32_40, %c0_i32_41, %c0_i32_42, %c0_i32_43] : memref<6x2x4x8x128xf32, #tpu.memory_space<vmem>> -> memref<1x2x4x8x128xf32, #tpu.memory_space<vmem>>
      %29 = tpu.memref_squeeze %28 : memref<1x2x4x8x128xf32, #tpu.memory_space<vmem>> -> memref<2x4x8x128xf32, #tpu.memory_space<vmem>>
      %30 = arith.index_cast %arg6 : i32 to index
      %c0_44 = arith.constant 0 : index
      %c0_45 = arith.constant 0 : index
      %c0_46 = arith.constant 0 : index
      %31 = vector.load %29[%30, %c0_44, %c0_45, %c0_46] : memref<2x4x8x128xf32, #tpu.memory_space<vmem>>, vector<1x4x8x128xf32>
      %32 = vector.shape_cast %31 : vector<1x4x8x128xf32> to vector<4x8x128xf32>
      %c0_i32_47 = arith.constant 0 : i32
      %c0_i32_48 = arith.constant 0 : i32
      %c0_i32_49 = arith.constant 0 : i32
      %c0_i32_50 = arith.constant 0 : i32
      %33 = tpu.memref_slice %arg2[%c5_i32, %c0_i32_47, %c0_i32_48, %c0_i32_49, %c0_i32_50] : memref<6x2x4x8x128xf32, #tpu.memory_space<vmem>> -> memref<1x2x4x8x128xf32, #tpu.memory_space<vmem>>
      %34 = tpu.memref_squeeze %33 : memref<1x2x4x8x128xf32, #tpu.memory_space<vmem>> -> memref<2x4x8x128xf32, #tpu.memory_space<vmem>>
      %35 = arith.index_cast %arg6 : i32 to index
      %c0_51 = arith.constant 0 : index
      %c0_52 = arith.constant 0 : index
      %c0_53 = arith.constant 0 : index
      %36 = vector.load %34[%35, %c0_51, %c0_52, %c0_53] : memref<2x4x8x128xf32, #tpu.memory_space<vmem>>, vector<1x4x8x128xf32>
      %37 = vector.shape_cast %36 : vector<1x4x8x128xf32> to vector<4x8x128xf32>
      %c0_i32_54 = arith.constant 0 : i32
      %c0_i32_55 = arith.constant 0 : i32
      %c0_i32_56 = arith.constant 0 : i32
      %c0_i32_57 = arith.constant 0 : i32
      %38 = tpu.memref_slice %arg3[%c0_i32_0, %c0_i32_54, %c0_i32_55, %c0_i32_56, %c0_i32_57] : memref<2x2x4x1x128xf32, #tpu.memory_space<vmem>> -> memref<1x2x4x1x128xf32, #tpu.memory_space<vmem>>
      %39 = tpu.memref_squeeze %38 : memref<1x2x4x1x128xf32, #tpu.memory_space<vmem>> -> memref<2x4x1x128xf32, #tpu.memory_space<vmem>>
      %40 = arith.index_cast %arg6 : i32 to index
      %c0_58 = arith.constant 0 : index
      %c0_59 = arith.constant 0 : index
      %c0_60 = arith.constant 0 : index
      %41 = vector.load %39[%40, %c0_58, %c0_59, %c0_60] : memref<2x4x1x128xf32, #tpu.memory_space<vmem>>, vector<1x4x1x128xf32>
      %42 = vector.shape_cast %41 : vector<1x4x1x128xf32> to vector<4x1x128xf32>
      %c0_i32_61 = arith.constant 0 : i32
      %c0_i32_62 = arith.constant 0 : i32
      %c0_i32_63 = arith.constant 0 : i32
      %c0_i32_64 = arith.constant 0 : i32
      %43 = tpu.memref_slice %arg3[%c1_i32_1, %c0_i32_61, %c0_i32_62, %c0_i32_63, %c0_i32_64] : memref<2x2x4x1x128xf32, #tpu.memory_space<vmem>> -> memref<1x2x4x1x128xf32, #tpu.memory_space<vmem>>
      %44 = tpu.memref_squeeze %43 : memref<1x2x4x1x128xf32, #tpu.memory_space<vmem>> -> memref<2x4x1x128xf32, #tpu.memory_space<vmem>>
      %45 = arith.index_cast %arg6 : i32 to index
      %c0_65 = arith.constant 0 : index
      %c0_66 = arith.constant 0 : index
      %c0_67 = arith.constant 0 : index
      %46 = vector.load %44[%45, %c0_65, %c0_66, %c0_67] : memref<2x4x1x128xf32, #tpu.memory_space<vmem>>, vector<1x4x1x128xf32>
      %47 = vector.shape_cast %46 : vector<1x4x1x128xf32> to vector<4x1x128xf32>
      %48 = arith.index_cast %arg6 : i32 to index
      %c0_68 = arith.constant 0 : index
      %c0_69 = arith.constant 0 : index
      %c0_70 = arith.constant 0 : index
      %49 = vector.load %arg4[%48, %c0_68, %c0_69, %c0_70] : memref<2x1x1x128xf32, #tpu.memory_space<vmem>>, vector<1x1x1x128xf32>
      %50 = vector.shape_cast %49 : vector<1x1x1x128xf32> to vector<1x1x128xf32>
      %51 = arith.mulf %12, %22 : vector<4x8x128xf32>
      %52 = arith.mulf %17, %27 : vector<4x8x128xf32>
      %53 = arith.subf %51, %52 : vector<4x8x128xf32>
      %54 = arith.mulf %12, %27 : vector<4x8x128xf32>
      %55 = arith.mulf %17, %22 : vector<4x8x128xf32>
      %56 = arith.addf %54, %55 : vector<4x8x128xf32>
      %cst_71 = arith.constant dense<0.000000e+00> : vector<4x128xf32>
      %57 = vector.multi_reduction <add>, %53, %cst_71 [1] : vector<4x8x128xf32> to vector<4x128xf32>
      %58 = vector.shape_cast %57 : vector<4x128xf32> to vector<4x1x128xf32>
      %59 = arith.subf %42, %58 : vector<4x1x128xf32>
      %60 = vector.broadcast %59 : vector<4x1x128xf32> to vector<4x8x128xf32>
      %61 = arith.addf %60, %53 : vector<4x8x128xf32>
      %cst_72 = arith.constant dense<0.000000e+00> : vector<4x128xf32>
      %62 = vector.multi_reduction <add>, %56, %cst_72 [1] : vector<4x8x128xf32> to vector<4x128xf32>
      %63 = vector.shape_cast %62 : vector<4x128xf32> to vector<4x1x128xf32>
      %64 = arith.subf %47, %63 : vector<4x1x128xf32>
      %65 = vector.broadcast %64 : vector<4x1x128xf32> to vector<4x8x128xf32>
      %66 = arith.addf %65, %56 : vector<4x8x128xf32>
      %67 = arith.mulf %12, %12 : vector<4x8x128xf32>
      %68 = arith.mulf %17, %17 : vector<4x8x128xf32>
      %69 = arith.addf %67, %68 : vector<4x8x128xf32>
      %70 = arith.mulf %22, %22 : vector<4x8x128xf32>
      %71 = arith.mulf %27, %27 : vector<4x8x128xf32>
      %72 = arith.addf %70, %71 : vector<4x8x128xf32>
      %73 = arith.mulf %69, %32 : vector<4x8x128xf32>
      %74 = arith.addf %72, %32 : vector<4x8x128xf32>
      %75 = arith.mulf %37, %74 : vector<4x8x128xf32>
      %76 = arith.addf %73, %75 : vector<4x8x128xf32>
      %cst_73 = arith.constant dense<0.000000e+00> : vector<4x128xf32>
      %77 = vector.multi_reduction <add>, %76, %cst_73 [1] : vector<4x8x128xf32> to vector<4x128xf32>
      %78 = vector.shape_cast %77 : vector<4x128xf32> to vector<4x1x128xf32>
      %79 = vector.broadcast %78 : vector<4x1x128xf32> to vector<4x8x128xf32>
      %80 = arith.subf %79, %76 : vector<4x8x128xf32>
      %81 = vector.broadcast %5 : f32 to vector<4x8x128xf32>
      %82 = arith.addf %80, %81 : vector<4x8x128xf32>
      %83 = arith.addf %82, %37 : vector<4x8x128xf32>
      %84 = vector.broadcast %4 : f32 to vector<4x8x128xf32>
      %85 = arith.mulf %84, %32 : vector<4x8x128xf32>
      %86 = arith.addf %82, %85 : vector<4x8x128xf32>
      %87 = tpu.reciprocal %83 {approx = true} : vector<4x8x128xf32> -> vector<4x8x128xf32>
      %88 = arith.mulf %12, %87 : vector<4x8x128xf32>
      %cst_74 = arith.constant 0.000000e+00 : f32
      %89 = vector.broadcast %cst_74 : f32 to vector<4x8x128xf32>
      %90 = arith.subf %89, %17 : vector<4x8x128xf32>
      %91 = arith.mulf %90, %87 : vector<4x8x128xf32>
      %92 = arith.mulf %69, %87 : vector<4x8x128xf32>
      %cst_75 = arith.constant dense<0.000000e+00> : vector<8x128xf32>
      %93 = vector.multi_reduction <add>, %92, %cst_75 [0] : vector<4x8x128xf32> to vector<8x128xf32>
      %94 = vector.shape_cast %93 : vector<8x128xf32> to vector<1x8x128xf32>
      %95 = vector.broadcast %94 : vector<1x8x128xf32> to vector<4x8x128xf32>
      %96 = arith.subf %95, %92 : vector<4x8x128xf32>
      %97 = tpu.reciprocal %96 {approx = true} : vector<4x8x128xf32> -> vector<4x8x128xf32>
      %98 = arith.mulf %88, %61 : vector<4x8x128xf32>
      %99 = arith.mulf %91, %66 : vector<4x8x128xf32>
      %100 = arith.subf %98, %99 : vector<4x8x128xf32>
      %101 = arith.mulf %88, %66 : vector<4x8x128xf32>
      %102 = arith.mulf %91, %61 : vector<4x8x128xf32>
      %103 = arith.addf %101, %102 : vector<4x8x128xf32>
      %cst_76 = arith.constant dense<0.000000e+00> : vector<8x128xf32>
      %104 = vector.multi_reduction <add>, %100, %cst_76 [0] : vector<4x8x128xf32> to vector<8x128xf32>
      %105 = vector.shape_cast %104 : vector<8x128xf32> to vector<1x8x128xf32>
      %106 = vector.broadcast %105 : vector<1x8x128xf32> to vector<4x8x128xf32>
      %107 = arith.subf %106, %100 : vector<4x8x128xf32>
      %108 = arith.mulf %107, %97 : vector<4x8x128xf32>
      %cst_77 = arith.constant dense<0.000000e+00> : vector<8x128xf32>
      %109 = vector.multi_reduction <add>, %103, %cst_77 [0] : vector<4x8x128xf32> to vector<8x128xf32>
      %110 = vector.shape_cast %109 : vector<8x128xf32> to vector<1x8x128xf32>
      %111 = vector.broadcast %110 : vector<1x8x128xf32> to vector<4x8x128xf32>
      %112 = arith.subf %111, %103 : vector<4x8x128xf32>
      %113 = arith.mulf %112, %97 : vector<4x8x128xf32>
      %114 = vector.broadcast %2 : f32 to vector<4x8x128xf32>
      %115 = arith.mulf %108, %114 : vector<4x8x128xf32>
      %116 = math.tanh %115 : vector<4x8x128xf32>
      %cst_78 = arith.constant 0.707106769 : f32
      %117 = vector.broadcast %cst_78 : f32 to vector<4x8x128xf32>
      %118 = arith.mulf %117, %116 : vector<4x8x128xf32>
      %119 = vector.broadcast %2 : f32 to vector<4x8x128xf32>
      %120 = arith.mulf %113, %119 : vector<4x8x128xf32>
      %121 = math.tanh %120 : vector<4x8x128xf32>
      %cst_79 = arith.constant 0.707106769 : f32
      %122 = vector.broadcast %cst_79 : f32 to vector<4x8x128xf32>
      %123 = arith.mulf %122, %121 : vector<4x8x128xf32>
      %124 = arith.mulf %118, %118 : vector<4x8x128xf32>
      %125 = arith.mulf %123, %123 : vector<4x8x128xf32>
      %126 = arith.addf %124, %125 : vector<4x8x128xf32>
      %cst_80 = arith.constant 1.000000e+00 : f32
      %127 = vector.broadcast %cst_80 : f32 to vector<4x8x128xf32>
      %128 = arith.subf %127, %126 : vector<4x8x128xf32>
      %129 = vector.broadcast %3 : f32 to vector<1x1x128xf32>
      %130 = arith.mulf %129, %50 : vector<1x1x128xf32>
      %131 = arith.subf %118, %22 : vector<4x8x128xf32>
      %132 = vector.broadcast %130 : vector<1x1x128xf32> to vector<4x8x128xf32>
      %133 = arith.mulf %131, %132 : vector<4x8x128xf32>
      %134 = arith.addf %22, %133 : vector<4x8x128xf32>
      %c0_i32_81 = arith.constant 0 : i32
      %c0_i32_82 = arith.constant 0 : i32
      %c0_i32_83 = arith.constant 0 : i32
      %c0_i32_84 = arith.constant 0 : i32
      %135 = tpu.memref_slice %arg5[%c2_i32_2, %c0_i32_81, %c0_i32_82, %c0_i32_83, %c0_i32_84] : memref<6x2x4x8x128xf32, #tpu.memory_space<vmem>> -> memref<1x2x4x8x128xf32, #tpu.memory_space<vmem>>
      %136 = tpu.memref_squeeze %135 : memref<1x2x4x8x128xf32, #tpu.memory_space<vmem>> -> memref<2x4x8x128xf32, #tpu.memory_space<vmem>>
      %137 = arith.index_cast %arg6 : i32 to index
      %c0_85 = arith.constant 0 : index
      %c0_86 = arith.constant 0 : index
      %c0_87 = arith.constant 0 : index
      %138 = vector.load %136[%137, %c0_85, %c0_86, %c0_87] : memref<2x4x8x128xf32, #tpu.memory_space<vmem>>, vector<1x4x8x128xf32>
      %139 = vector.shape_cast %138 : vector<1x4x8x128xf32> to vector<4x8x128xf32>
      %140 = vector.shape_cast %134 : vector<4x8x128xf32> to vector<1x4x8x128xf32>
      tpu.vector_store %136[%137, %c0_85, %c0_86, %c0_87], %140 {strides = array<i32>} : memref<2x4x8x128xf32, #tpu.memory_space<vmem>>, vector<1x4x8x128xf32>,
      %141 = arith.subf %123, %27 : vector<4x8x128xf32>
      %142 = vector.broadcast %130 : vector<1x1x128xf32> to vector<4x8x128xf32>
      %143 = arith.mulf %141, %142 : vector<4x8x128xf32>
      %144 = arith.addf %27, %143 : vector<4x8x128xf32>
      %c0_i32_88 = arith.constant 0 : i32
      %c0_i32_89 = arith.constant 0 : i32
      %c0_i32_90 = arith.constant 0 : i32
      %c0_i32_91 = arith.constant 0 : i32
      %145 = tpu.memref_slice %arg5[%c3_i32_3, %c0_i32_88, %c0_i32_89, %c0_i32_90, %c0_i32_91] : memref<6x2x4x8x128xf32, #tpu.memory_space<vmem>> -> memref<1x2x4x8x128xf32, #tpu.memory_space<vmem>>
      %146 = tpu.memref_squeeze %145 : memref<1x2x4x8x128xf32, #tpu.memory_space<vmem>> -> memref<2x4x8x128xf32, #tpu.memory_space<vmem>>
      %147 = arith.index_cast %arg6 : i32 to index
      %c0_92 = arith.constant 0 : index
      %c0_93 = arith.constant 0 : index
      %c0_94 = arith.constant 0 : index
      %148 = vector.load %146[%147, %c0_92, %c0_93, %c0_94] : memref<2x4x8x128xf32, #tpu.memory_space<vmem>>, vector<1x4x8x128xf32>
      %149 = vector.shape_cast %148 : vector<1x4x8x128xf32> to vector<4x8x128xf32>
      %150 = vector.shape_cast %144 : vector<4x8x128xf32> to vector<1x4x8x128xf32>
      tpu.vector_store %146[%147, %c0_92, %c0_93, %c0_94], %150 {strides = array<i32>} : memref<2x4x8x128xf32, #tpu.memory_space<vmem>>, vector<1x4x8x128xf32>,
      %151 = arith.subf %128, %32 : vector<4x8x128xf32>
      %152 = vector.broadcast %130 : vector<1x1x128xf32> to vector<4x8x128xf32>
      %153 = arith.mulf %151, %152 : vector<4x8x128xf32>
      %154 = arith.addf %32, %153 : vector<4x8x128xf32>
      %c0_i32_95 = arith.constant 0 : i32
      %c0_i32_96 = arith.constant 0 : i32
      %c0_i32_97 = arith.constant 0 : i32
      %c0_i32_98 = arith.constant 0 : i32
      %155 = tpu.memref_slice %arg5[%c4_i32_4, %c0_i32_95, %c0_i32_96, %c0_i32_97, %c0_i32_98] : memref<6x2x4x8x128xf32, #tpu.memory_space<vmem>> -> memref<1x2x4x8x128xf32, #tpu.memory_space<vmem>>
      %156 = tpu.memref_squeeze %155 : memref<1x2x4x8x128xf32, #tpu.memory_space<vmem>> -> memref<2x4x8x128xf32, #tpu.memory_space<vmem>>
      %157 = arith.index_cast %arg6 : i32 to index
      %c0_99 = arith.constant 0 : index
      %c0_100 = arith.constant 0 : index
      %c0_101 = arith.constant 0 : index
      %158 = vector.load %156[%157, %c0_99, %c0_100, %c0_101] : memref<2x4x8x128xf32, #tpu.memory_space<vmem>>, vector<1x4x8x128xf32>
      %159 = vector.shape_cast %158 : vector<1x4x8x128xf32> to vector<4x8x128xf32>
      %160 = vector.shape_cast %154 : vector<4x8x128xf32> to vector<1x4x8x128xf32>
      tpu.vector_store %156[%157, %c0_99, %c0_100, %c0_101], %160 {strides = array<i32>} : memref<2x4x8x128xf32, #tpu.memory_space<vmem>>, vector<1x4x8x128xf32>,
      %161 = tpu.reciprocal %86 {approx = true} : vector<4x8x128xf32> -> vector<4x8x128xf32>
      %162 = vector.broadcast %1 : f32 to vector<1x1x128xf32>
      %163 = arith.mulf %162, %50 : vector<1x1x128xf32>
      %164 = vector.broadcast %0 : f32 to vector<1x1x128xf32>
      %165 = arith.addf %164, %163 : vector<1x1x128xf32>
      %166 = vector.broadcast %165 : vector<1x1x128xf32> to vector<4x8x128xf32>
      %167 = arith.mulf %166, %161 : vector<4x8x128xf32>
      %168 = arith.mulf %22, %167 : vector<4x8x128xf32>
      %cst_102 = arith.constant 0.000000e+00 : f32
      %169 = vector.broadcast %cst_102 : f32 to vector<4x8x128xf32>
      %170 = arith.subf %169, %27 : vector<4x8x128xf32>
      %171 = arith.mulf %170, %167 : vector<4x8x128xf32>
      %172 = arith.mulf %22, %22 : vector<4x8x128xf32>
      %173 = arith.mulf %27, %27 : vector<4x8x128xf32>
      %174 = arith.addf %172, %173 : vector<4x8x128xf32>
      %175 = arith.mulf %174, %167 : vector<4x8x128xf32>
      %176 = vector.shape_cast %175 : vector<4x8x128xf32> to vector<32x128xf32>
      %cst_103 = arith.constant dense<0.000000e+00> : vector<32x128xf32>
      %177 = tpu.matmul %176, %6, %cst_103 {dimension_numbers = #tpu.dot_dimension_numbers<[1], [0], [0], [1], [0, 0, 1, 1], [], []>, precision = #tpu.contract_precision<fp32>} : vector<32x128xf32>, vector<128x128xf32>, vector<32x128xf32> -> vector<32x128xf32>
      %178 = vector.shape_cast %177 : vector<32x128xf32> to vector<4x8x128xf32>
      %179 = arith.subf %178, %175 : vector<4x8x128xf32>
      %180 = tpu.reciprocal %179 {approx = true} : vector<4x8x128xf32> -> vector<4x8x128xf32>
      %181 = arith.mulf %168, %61 : vector<4x8x128xf32>
      %182 = arith.mulf %171, %66 : vector<4x8x128xf32>
      %183 = arith.subf %181, %182 : vector<4x8x128xf32>
      %184 = arith.mulf %168, %66 : vector<4x8x128xf32>
      %185 = arith.mulf %171, %61 : vector<4x8x128xf32>
      %186 = arith.addf %184, %185 : vector<4x8x128xf32>
      %187 = vector.shape_cast %183 : vector<4x8x128xf32> to vector<32x128xf32>
      %cst_104 = arith.constant dense<0.000000e+00> : vector<32x128xf32>
      %188 = tpu.matmul %187, %6, %cst_104 {dimension_numbers = #tpu.dot_dimension_numbers<[1], [0], [0], [1], [0, 0, 1, 1], [], []>, precision = #tpu.contract_precision<fp32>} : vector<32x128xf32>, vector<128x128xf32>, vector<32x128xf32> -> vector<32x128xf32>
      %189 = vector.shape_cast %188 : vector<32x128xf32> to vector<4x8x128xf32>
      %190 = arith.subf %189, %183 : vector<4x8x128xf32>
      %191 = arith.mulf %190, %180 : vector<4x8x128xf32>
      %192 = vector.shape_cast %186 : vector<4x8x128xf32> to vector<32x128xf32>
      %cst_105 = arith.constant dense<0.000000e+00> : vector<32x128xf32>
      %193 = tpu.matmul %192, %6, %cst_105 {dimension_numbers = #tpu.dot_dimension_numbers<[1], [0], [0], [1], [0, 0, 1, 1], [], []>, precision = #tpu.contract_precision<fp32>} : vector<32x128xf32>, vector<128x128xf32>, vector<32x128xf32> -> vector<32x128xf32>
      %194 = vector.shape_cast %193 : vector<32x128xf32> to vector<4x8x128xf32>
      %195 = arith.subf %194, %186 : vector<4x8x128xf32>
      %196 = arith.mulf %195, %180 : vector<4x8x128xf32>
      %197 = vector.broadcast %4 : f32 to vector<4x8x128xf32>
      %198 = arith.addf %197, %180 : vector<4x8x128xf32>
      %199 = tpu.reciprocal %198 {approx = true} : vector<4x8x128xf32> -> vector<4x8x128xf32>
      %200 = vector.broadcast %4 : f32 to vector<4x8x128xf32>
      %201 = arith.mulf %200, %199 : vector<4x8x128xf32>
      %202 = arith.mulf %201, %191 : vector<4x8x128xf32>
      %203 = arith.subf %202, %12 : vector<4x8x128xf32>
      %204 = vector.broadcast %3 : f32 to vector<4x8x128xf32>
      %205 = arith.mulf %203, %204 : vector<4x8x128xf32>
      %206 = arith.addf %12, %205 : vector<4x8x128xf32>
      %c0_i32_106 = arith.constant 0 : i32
      %c0_i32_107 = arith.constant 0 : i32
      %c0_i32_108 = arith.constant 0 : i32
      %c0_i32_109 = arith.constant 0 : i32
      %207 = tpu.memref_slice %arg5[%c0_i32_5, %c0_i32_106, %c0_i32_107, %c0_i32_108, %c0_i32_109] : memref<6x2x4x8x128xf32, #tpu.memory_space<vmem>> -> memref<1x2x4x8x128xf32, #tpu.memory_space<vmem>>
      %208 = tpu.memref_squeeze %207 : memref<1x2x4x8x128xf32, #tpu.memory_space<vmem>> -> memref<2x4x8x128xf32, #tpu.memory_space<vmem>>
      %209 = arith.index_cast %arg6 : i32 to index
      %c0_110 = arith.constant 0 : index
      %c0_111 = arith.constant 0 : index
      %c0_112 = arith.constant 0 : index
      %210 = vector.load %208[%209, %c0_110, %c0_111, %c0_112] : memref<2x4x8x128xf32, #tpu.memory_space<vmem>>, vector<1x4x8x128xf32>
      %211 = vector.shape_cast %210 : vector<1x4x8x128xf32> to vector<4x8x128xf32>
      %212 = vector.shape_cast %206 : vector<4x8x128xf32> to vector<1x4x8x128xf32>
      tpu.vector_store %208[%209, %c0_110, %c0_111, %c0_112], %212 {strides = array<i32>} : memref<2x4x8x128xf32, #tpu.memory_space<vmem>>, vector<1x4x8x128xf32>,
      %213 = arith.mulf %201, %196 : vector<4x8x128xf32>
      %214 = arith.subf %213, %17 : vector<4x8x128xf32>
      %215 = vector.broadcast %3 : f32 to vector<4x8x128xf32>
      %216 = arith.mulf %214, %215 : vector<4x8x128xf32>
      %217 = arith.addf %17, %216 : vector<4x8x128xf32>
      %c0_i32_113 = arith.constant 0 : i32
      %c0_i32_114 = arith.constant 0 : i32
      %c0_i32_115 = arith.constant 0 : i32
      %c0_i32_116 = arith.constant 0 : i32
      %218 = tpu.memref_slice %arg5[%c1_i32_6, %c0_i32_113, %c0_i32_114, %c0_i32_115, %c0_i32_116] : memref<6x2x4x8x128xf32, #tpu.memory_space<vmem>> -> memref<1x2x4x8x128xf32, #tpu.memory_space<vmem>>
      %219 = tpu.memref_squeeze %218 : memref<1x2x4x8x128xf32, #tpu.memory_space<vmem>> -> memref<2x4x8x128xf32, #tpu.memory_space<vmem>>
      %220 = arith.index_cast %arg6 : i32 to index
      %c0_117 = arith.constant 0 : index
      %c0_118 = arith.constant 0 : index
      %c0_119 = arith.constant 0 : index
      %221 = vector.load %219[%220, %c0_117, %c0_118, %c0_119] : memref<2x4x8x128xf32, #tpu.memory_space<vmem>>, vector<1x4x8x128xf32>
      %222 = vector.shape_cast %221 : vector<1x4x8x128xf32> to vector<4x8x128xf32>
      %223 = vector.shape_cast %217 : vector<4x8x128xf32> to vector<1x4x8x128xf32>
      tpu.vector_store %219[%220, %c0_117, %c0_118, %c0_119], %223 {strides = array<i32>} : memref<2x4x8x128xf32, #tpu.memory_space<vmem>>, vector<1x4x8x128xf32>,
      %224 = arith.mulf %201, %180 : vector<4x8x128xf32>
      %225 = arith.subf %224, %37 : vector<4x8x128xf32>
      %226 = vector.broadcast %3 : f32 to vector<4x8x128xf32>
      %227 = arith.mulf %225, %226 : vector<4x8x128xf32>
      %228 = arith.addf %37, %227 : vector<4x8x128xf32>
      %c0_i32_120 = arith.constant 0 : i32
      %c0_i32_121 = arith.constant 0 : i32
      %c0_i32_122 = arith.constant 0 : i32
      %c0_i32_123 = arith.constant 0 : i32
      %229 = tpu.memref_slice %arg5[%c5_i32_7, %c0_i32_120, %c0_i32_121, %c0_i32_122, %c0_i32_123] : memref<6x2x4x8x128xf32, #tpu.memory_space<vmem>> -> memref<1x2x4x8x128xf32, #tpu.memory_space<vmem>>
      %230 = tpu.memref_squeeze %229 : memref<1x2x4x8x128xf32, #tpu.memory_space<vmem>> -> memref<2x4x8x128xf32, #tpu.memory_space<vmem>>
      %231 = arith.index_cast %arg6 : i32 to index
      %c0_124 = arith.constant 0 : index
      %c0_125 = arith.constant 0 : index
      %c0_126 = arith.constant 0 : index
      %232 = vector.load %230[%231, %c0_124, %c0_125, %c0_126] : memref<2x4x8x128xf32, #tpu.memory_space<vmem>>, vector<1x4x8x128xf32>
      %233 = vector.shape_cast %232 : vector<1x4x8x128xf32> to vector<4x8x128xf32>
      %234 = vector.shape_cast %228 : vector<4x8x128xf32> to vector<1x4x8x128xf32>
      tpu.vector_store %230[%231, %c0_124, %c0_125, %c0_126], %234 {strides = array<i32>} : memref<2x4x8x128xf32, #tpu.memory_space<vmem>>, vector<1x4x8x128xf32>,
    }
    %c2_i32_11 = arith.constant 2 : i32
    return
  }
  func.func @transform_0(%arg0: i32) -> i32 {
    %c0_i32 = arith.constant 0 : i32
    %c0_i32_0 = arith.constant 0 : i32
    return %c0_i32 : i32
  }
  func.func @transform_1(%arg0: i32) -> (i32, i32, i32, i32, i32) {
    %c0_i32 = arith.constant 0 : i32
    %c0_i32_0 = arith.constant 0 : i32
    %c0_i32_1 = arith.constant 0 : i32
    %c0_i32_2 = arith.constant 0 : i32
    %c0_i32_3 = arith.constant 0 : i32
    return %c0_i32, %arg0, %c0_i32_0, %c0_i32_1, %c0_i32_2 : i32, i32, i32, i32, i32
  }
  func.func @transform_2(%arg0: i32) -> (i32, i32, i32, i32, i32) {
    %c0_i32 = arith.constant 0 : i32
    %c0_i32_0 = arith.constant 0 : i32
    %c0_i32_1 = arith.constant 0 : i32
    %c0_i32_2 = arith.constant 0 : i32
    %c0_i32_3 = arith.constant 0 : i32
    return %c0_i32, %arg0, %c0_i32_0, %c0_i32_1, %c0_i32_2 : i32, i32, i32, i32, i32
  }
  func.func @transform_3(%arg0: i32) -> (i32, i32, i32, i32) {
    %c0_i32 = arith.constant 0 : i32
    %c0_i32_0 = arith.constant 0 : i32
    %c0_i32_1 = arith.constant 0 : i32
    %c0_i32_2 = arith.constant 0 : i32
    return %arg0, %c0_i32, %c0_i32_0, %c0_i32_1 : i32, i32, i32, i32
  }
  func.func @transform_4(%arg0: i32) -> (i32, i32, i32, i32, i32) {
    %c0_i32 = arith.constant 0 : i32
    %c0_i32_0 = arith.constant 0 : i32
    %c0_i32_1 = arith.constant 0 : i32
    %c0_i32_2 = arith.constant 0 : i32
    %c0_i32_3 = arith.constant 0 : i32
    return %c0_i32, %arg0, %c0_i32_0, %c0_i32_1, %c0_i32_2 : i32, i32, i32, i32, i32
  }
}

</mosaic_0001>

<llo_original>
// kernel: custom-call.1
$region0: #{custom-call.1}
  %s0 = inlined_call_operand.hbm [shape: c64[4,4,8,128], index: 0, kind: input, shape index: {}]
  %s1 = inlined_call_operand.vmem [shape: f32[4,4,8,128], index: 1, kind: output, shape index: {}]
  %s2 = scalar_lea.hbm %s0, 2048
  $region1: #{custom-call.1} parent=0
    #allocation0 [shape = 's32[1]{0}', space=sflag, size = 0x4, scoped, tag = 'scoped memory for custom-call.1']
    %3 = vsyncpa [#allocation0], 0
    %s4 = sshll.u32 %s1, 4
    %s5 = int_to_ptr.vmem [resolvable:$true] %s4
    %7 = dma.hbm_to_vmem [thread:$0]  %s2, 2048, %s5, [#allocation0]
    %8 = dma.done [#allocation0], 2048
    %9 = vsyncpa [#allocation0], 1

// kernel: custom-call
$region0: #{custom-call}
  %s0 = inlined_call_operand.hbm [shape: c64[4,4,8,128], index: 0, kind: input, shape index: {}]
  %s1 = inlined_call_operand.vmem [shape: f32[4,4,8,128], index: 1, kind: output, shape index: {}]
  $region1: #{custom-call} parent=0
    #allocation0 [shape = 's32[1]{0}', space=sflag, size = 0x4, scoped, tag = 'scoped memory for custom-call']
    %2 = vsyncpa [#allocation0], 0
    %s3 = sshll.u32 %s1, 4
    %s4 = int_to_ptr.vmem [resolvable:$true] %s3
    %6 = dma.hbm_to_vmem [thread:$0]  %s0, 2048, %s4, [#allocation0]
    %7 = dma.done [#allocation0], 2048
    %8 = vsyncpa [#allocation0], 1

// kernel: custom-call.4
$region0: #{custom-call.4}
  %s0 = inlined_call_operand.hbm [shape: c64[4,4,128], index: 0, kind: input, shape index: {}]
  %s1 = inlined_call_operand.vmem [shape: f32[4,4,128], index: 1, kind: output, shape index: {}]
  $region1: #{custom-call.4} parent=0
    #allocation0 [shape = 's32[1]{0}', space=sflag, size = 0x4, scoped, tag = 'scoped memory for custom-call.4']
    %2 = vsyncpa [#allocation0], 0
    %s3 = sshll.u32 %s1, 4
    %s4 = int_to_ptr.vmem [resolvable:$true] %s3
    %6 = dma.hbm_to_vmem [thread:$0]  %s0, 256, %s4, [#allocation0]
    %7 = dma.done [#allocation0], 256
    %8 = vsyncpa [#allocation0], 1

// kernel: custom-call.5
$region0: #{custom-call.5}
  %s0 = inlined_call_operand.hbm [shape: c64[4,4,128], index: 0, kind: input, shape index: {}]
  %s1 = inlined_call_operand.vmem [shape: f32[4,4,128], index: 1, kind: output, shape index: {}]
  %s2 = scalar_lea.hbm %s0, 256
  $region1: #{custom-call.5} parent=0
    #allocation0 [shape = 's32[1]{0}', space=sflag, size = 0x4, scoped, tag = 'scoped memory for custom-call.5']
    %3 = vsyncpa [#allocation0], 0
    %s4 = sshll.u32 %s1, 4
    %s5 = int_to_ptr.vmem [resolvable:$true] %s4
    %7 = dma.hbm_to_vmem [thread:$0]  %s2, 256, %s5, [#allocation0]
    %8 = dma.done [#allocation0], 256
    %9 = vsyncpa [#allocation0], 1

// kernel: custom-call.7
$region0: #{custom-call.7}
  %s0 = inlined_call_operand.vmem [shape: f32[4,4,8,128], index: 0, kind: input, shape index: {}]
  %s1 = inlined_call_operand.vmem [shape: f32[4,4,8,128], index: 1, kind: input, shape index: {}]
  %s2 = inlined_call_operand.hbm [shape: c64[4,4,8,128], index: 2, kind: output, shape index: {}]
  %s3 = scalar_lea.hbm %s2, 2048
  $region1: #{custom-call.7} parent=0
    #allocation0 [shape = 's32[1]{0}', space=sflag, size = 0x4, scoped, tag = 'scoped memory for custom-call.7']
    %4 = vsyncpa [#allocation0], 0
    %s5 = sshll.u32 %s0, 4
    %s6 = int_to_ptr.vmem [resolvable:$true] %s5
    %8 = dma.vmem_to_hbm [thread:$0]  %s6, 2048, %s2, [#allocation0]
    %9 = dma.done [#allocation0], 2048
    %10 = vsyncpa [#allocation0], 1
  $region2: #{custom-call.7} parent=0
    #allocation1 [shape = 's32[1]{0}', space=sflag, size = 0x4, scoped, tag = 'scoped memory for custom-call.7']
    %11 = vsyncpa [#allocation1], 0
    %s12 = sshll.u32 %s1, 4
    %s13 = int_to_ptr.vmem [resolvable:$true] %s12
    %15 = dma.vmem_to_hbm [thread:$0]  %s13, 2048, %s3, [#allocation1]
    %16 = dma.done [#allocation1], 2048
    %17 = vsyncpa [#allocation1], 1

// kernel: bigabp_unfolding_iter.1
$region0: #{bigabp_unfolding_iter.1}
  #allocation0 [shape = 'u32[]', space=smem, size = 0x4, offset = 0x4, fixed_abs, tag = 'smem constant byte address 0x4 - core index']
  #allocation1 [shape = 'u32[144,128]{1,0:T(1,128)}', space=vmem, size = 0x12000, scoped, tag = 'internal scratch']
  %s0 = inlined_call_operand.vmem [shape: f32[6], index: 0, kind: input, shape index: {}]
  %s1 = inlined_call_operand.vmem [shape: f32[6,4,4,8,128], index: 1, kind: input, shape index: {}, may-alias: {1,4}]
  %s2 = inlined_call_operand.vmem [shape: f32[2,4,4,1,128], index: 2, kind: input, shape index: {}]
  %s3 = inlined_call_operand.vmem [shape: f32[4,1,1,128], index: 3, kind: input, shape index: {}]
  %s4 = inlined_call_operand.vmem [shape: f32[6,4,4,8,128], index: 4, kind: output, shape index: {}, may-alias: {1,4}]
  %s5 = sld [smem:[#allocation0]]
  $region170: #{bigabp_unfolding_iter.1} parent=0
    _
  %s7 = ssub.s32 1, %s5
  %s8 = scalar_select 0, %s7, %s5
  $region1: #{bigabp_unfolding_iter.1} parent=0
    #allocation2 [shape = 'u8[512]{0}', space=smem, size = 0x200, scoped, tag = 'input window, operand 0, single buffered']
    #allocation3 [shape = 's32[2]{0}', space=sflag, size = 0x8, scoped, tag = 'scoped memory for bigabp_unfolding_iter.1']
    #allocation4 [shape = 'u8[393216]{0}', space=vmem, size = 0x60000, scoped, tag = 'input window, operand 1']
    #allocation5 [shape = 'u8[16384]{0}', space=vmem, size = 0x4000, scoped, tag = 'input window, operand 2']
    #allocation6 [shape = 'u8[393216]{0}', space=vmem, size = 0x60000, scoped, tag = 'output window, operand 0']
    %9 = vsyncpa [#allocation3], 0
    loop: start=0, step=1, limit=4
    $region2: #{bigabp_unfolding_iter.1} parent=1 // loop_pre_header
      _
    $region3: #{bigabp_unfolding_iter.1} parent=1 // loop_header
      %s11 = sphi 0, %s15
      %p12 = scmp.ge.s32.totalorder %s11, 4
      %s19 = sphi 0, %s19
      %s21 = sphi 0, %s19
      %s22 = sphi 0, %s21
      %s36 = sphi 0, %s22
      %s42 = sphi 0, %s44
      %s45 = sphi 0, %s42
      %s46 = sphi 0, %s45
      %s62 = sphi 0, %s46
      %s68 = sphi 0, %s70
      %s71 = sphi 0, %s68
      %s72 = sphi 0, %s71
      %s88 = sphi 0, %s72
      %s94 = sphi 0, %s96
      %s97 = sphi 0, %s94
      %s98 = sphi 0, %s97
      %s114 = sphi 0, %s98
      %s120 = sphi 0, %s122
      %s123 = sphi 0, %s120
      %s124 = sphi 0, %s123
      %s140 = sphi 0, %s124
    $region4: #{bigabp_unfolding_iter.1} parent=1 // loop_header_branch
      %14 = sbr.rel (%p12) target = $region8
    $region5: #{bigabp_unfolding_iter.1} parent=1 // loop_body
      %s16 = ssub.s32 %s11, 1
      %s17 = ssub.s32 %s11, 2
      %s18 = sadd.s32 %s11, 1
      %s20 = sadd.s32 %s19, 1
      %p23 = scmp.eq.s32.totalorder %s11, 1
      %p24 = scmp.ne.s32.totalorder %s19, %s21
      %p25 = scmp.eq.s32.totalorder %s11, 0
      %p26 = por %p24, %p25
      %p27 = scmp.ne.s32.totalorder %s19, %s21
      %p28 = scmp.eq.s32.totalorder %s16, 1
      %p29 = por %p27, %p28
      %p30 = scmp.ne.s32.totalorder %s21, %s22
      %p31 = scmp.eq.s32.totalorder %s16, 0
      %p32 = por %p30, %p31
      %p33 = scmp.ne.s32.totalorder %s21, %s22
      %p34 = scmp.eq.s32.totalorder %s17, 1
      %p35 = por %p33, %p34
      %p37 = scmp.ne.s32.totalorder %s22, %s36
      %p38 = scmp.eq.s32.totalorder %s17, 0
      %p39 = por %p37, %p38
      %s40 = ssub.s32 %s11, %s18
      %p41 = scmp.eq.s32.totalorder %s40, 0
      %s43 = sadd.s32 %s42, 1
      %s44 = scalar_select %p41, %s42, %s43
      %p47 = pneg %p41
      %p48 = scmp.eq.s32.totalorder %s11, 1
      %p49 = por %p47, %p48
      %p50 = scmp.ne.s32.totalorder %s42, %s45
      %p51 = scmp.eq.s32.totalorder %s11, 0
      %p52 = por %p50, %p51
      %p53 = scmp.ne.s32.totalorder %s42, %s45
      %p54 = scmp.eq.s32.totalorder %s16, 1
      %p55 = por %p53, %p54
      %p56 = scmp.ne.s32.totalorder %s45, %s46
      %p57 = scmp.eq.s32.totalorder %s16, 0
      %p58 = por %p56, %p57
      %p59 = scmp.ne.s32.totalorder %s45, %s46
      %p60 = scmp.eq.s32.totalorder %s17, 1
      %p61 = por %p59, %p60
      %p63 = scmp.ne.s32.totalorder %s46, %s62
      %p64 = scmp.eq.s32.totalorder %s17, 0
      %p65 = por %p63, %p64
      %s66 = ssub.s32 %s11, %s18
      %p67 = scmp.eq.s32.totalorder %s66, 0
      %s69 = sadd.s32 %s68, 1
      %s70 = scalar_select %p67, %s68, %s69
      %p73 = pneg %p67
      %p74 = scmp.eq.s32.totalorder %s11, 1
      %p75 = por %p73, %p74
      %p76 = scmp.ne.s32.totalorder %s68, %s71
      %p77 = scmp.eq.s32.totalorder %s11, 0
      %p78 = por %p76, %p77
      %p79 = scmp.ne.s32.totalorder %s68, %s71
      %p80 = scmp.eq.s32.totalorder %s16, 1
      %p81 = por %p79, %p80
      %p82 = scmp.ne.s32.totalorder %s71, %s72
      %p83 = scmp.eq.s32.totalorder %s16, 0
      %p84 = por %p82, %p83
      %p85 = scmp.ne.s32.totalorder %s71, %s72
      %p86 = scmp.eq.s32.totalorder %s17, 1
      %p87 = por %p85, %p86
      %p89 = scmp.ne.s32.totalorder %s72, %s88
      %p90 = scmp.eq.s32.totalorder %s17, 0
      %p91 = por %p89, %p90
      %s92 = ssub.s32 %s11, %s18
      %p93 = scmp.eq.s32.totalorder %s92, 0
      %s95 = sadd.s32 %s94, 1
      %s96 = scalar_select %p93, %s94, %s95
      %p99 = pneg %p93
      %p100 = scmp.eq.s32.totalorder %s11, 1
      %p101 = por %p99, %p100
      %p102 = scmp.ne.s32.totalorder %s94, %s97
      %p103 = scmp.eq.s32.totalorder %s11, 0
      %p104 = por %p102, %p103
      %p105 = scmp.ne.s32.totalorder %s94, %s97
      %p106 = scmp.eq.s32.totalorder %s16, 1
      %p107 = por %p105, %p106
      %p108 = scmp.ne.s32.totalorder %s97, %s98
      %p109 = scmp.eq.s32.totalorder %s16, 0
      %p110 = por %p108, %p109
      %p111 = scmp.ne.s32.totalorder %s97, %s98
      %p112 = scmp.eq.s32.totalorder %s17, 1
      %p113 = por %p111, %p112
      %p115 = scmp.ne.s32.totalorder %s98, %s114
      %p116 = scmp.eq.s32.totalorder %s17, 0
      %p117 = por %p115, %p116
      %s118 = ssub.s32 %s11, %s18
      %p119 = scmp.eq.s32.totalorder %s118, 0
      %s121 = sadd.s32 %s120, 1
      %s122 = scalar_select %p119, %s120, %s121
      %p125 = pneg %p119
      %p126 = scmp.eq.s32.totalorder %s11, 1
      %p127 = por %p125, %p126
      %p128 = scmp.ne.s32.totalorder %s120, %s123
      %p129 = scmp.eq.s32.totalorder %s11, 0
      %p130 = por %p128, %p129
      %p131 = scmp.ne.s32.totalorder %s120, %s123
      %p132 = scmp.eq.s32.totalorder %s16, 1
      %p133 = por %p131, %p132
      %p134 = scmp.ne.s32.totalorder %s123, %s124
      %p135 = scmp.eq.s32.totalorder %s16, 0
      %p136 = por %p134, %p135
      %p137 = scmp.ne.s32.totalorder %s123, %s124
      %p138 = scmp.eq.s32.totalorder %s17, 1
      %p139 = por %p137, %p138
      %p141 = scmp.ne.s32.totalorder %s124, %s140
      %p142 = scmp.eq.s32.totalorder %s17, 0
      %p143 = por %p141, %p142
      %p144 = scmp.le.s32.totalorder 1, %s11
      %p145 = scmp.lt.s32.totalorder %s11, 3
      %p146 = pnand %p144, %p145
      %p147 = pneg %p146
      // Predicated region
      $region9: #{bigabp_unfolding_iter.1} parent=5 // pred_check
        _
      $region10: #{bigabp_unfolding_iter.1} parent=5 // pred_check_branch
        %149 = sbr.rel (%p146) target = $region12
      $region11: #{bigabp_unfolding_iter.1} parent=5 // pred_region
        %s150 = ssub.s32 %s11, 1
        // Predicated region
        $region13: #{bigabp_unfolding_iter.1} parent=11 // pred_check
          %p151 = pneg %p32
        $region14: #{bigabp_unfolding_iter.1} parent=11 // pred_check_branch
          %153 = sbr.rel (%p151) target = $region16
        $region15: #{bigabp_unfolding_iter.1} parent=11 // pred_region
          %s155 = ssub.s32 16, 16
          %156 = vsyncadd [#allocation3], %s155
          %s158 = sshll.u32 %s0, 4
          %s159 = int_to_ptr.vmem [resolvable:$true] %s158
          %161 = dma.vmem_to_smem %s159, 16, [#allocation2], [#allocation3]
        $region16: #{bigabp_unfolding_iter.1} parent=11 // pred_fallthru
          _
      $region12: #{bigabp_unfolding_iter.1} parent=5 // pred_fallthru
        _
      %p162 = scmp.lt.s32.totalorder %s11, 2
      // Predicated region
      $region17: #{bigabp_unfolding_iter.1} parent=5 // pred_check
        %p163 = pneg %p162
      $region18: #{bigabp_unfolding_iter.1} parent=5 // pred_check_branch
        %165 = sbr.rel (%p163) target = $region20
      $region19: #{bigabp_unfolding_iter.1} parent=5 // pred_region
        // Predicated region
        $region21: #{bigabp_unfolding_iter.1} parent=19 // pred_check
          %p166 = pneg %p52
        $region22: #{bigabp_unfolding_iter.1} parent=19 // pred_check_branch
          %168 = sbr.rel (%p166) target = $region24
        $region23: #{bigabp_unfolding_iter.1} parent=19 // pred_region
          %s169 = sand.u32 %s42, 1
          %s170 = sand.u32 %s42, 1
          %s171 = smul.addr %s170, 384
          %s172 = scalar_lea.vmem [#allocation4], %s171
          %s173 = smul.u32 2, %s11
          %s174 = smul.addr %s173, 4
          %s175 = smul.addr %s174, 8
          %s176 = scalar_lea.vmem %s1, %s175
          // Predicated region
          $region25: #{bigabp_unfolding_iter.1} parent=23 // pred_check
            _
          $region26: #{bigabp_unfolding_iter.1} parent=23 // pred_check_branch
            %178 = sbr.rel (0) target = $region28
          $region27: #{bigabp_unfolding_iter.1} parent=23 // pred_region
            // Predicated region
            $region29: #{bigabp_unfolding_iter.1} parent=27 // pred_check
              _
            $region30: #{bigabp_unfolding_iter.1} parent=27 // pred_check_branch
              %180 = sbr.rel (0) target = $region32
            $region31: #{bigabp_unfolding_iter.1} parent=27 // pred_region
              // Predicated region
              $region44: #{bigabp_unfolding_iter.1} parent=31 // pred_check
                _
              $region45: #{bigabp_unfolding_iter.1} parent=31 // pred_check_branch
                %289 = sbr.rel (0) target = $region47
              $region46: #{bigabp_unfolding_iter.1} parent=31 // pred_region
                loop: start=0, step=1, limit=1
                $region48: #{bigabp_unfolding_iter.1} parent=46 // loop_pre_header
                  _
                $region49: #{bigabp_unfolding_iter.1} parent=46 // loop_header
                  %s291 = sphi 0, %s295
                  %p292 = scmp.ge.s32.totalorder %s291, 1
                  %s296 = sphi %s176, %s176
                  %s297 = sphi %s172, %s172
                $region50: #{bigabp_unfolding_iter.1} parent=46 // loop_header_branch
                  %294 = sbr.rel (%p292) target = $region54
                $region51: #{bigabp_unfolding_iter.1} parent=46 // loop_body
                  %v298 = vld [vmem:[%s296] sm:$0xff]
                  %299 = vst [vmem:[%s297] sm:$0xff] %v298
                  %v300 = vld [vmem:[%s296 + $0x8] sm:$0xff]
                  %301 = vst [vmem:[%s297 + $0x8] sm:$0xff] %v300
                  %v302 = vld [vmem:[%s296 + $0x10] sm:$0xff]
                  %303 = vst [vmem:[%s297 + $0x10] sm:$0xff] %v302
                  %v304 = vld [vmem:[%s296 + $0x18] sm:$0xff]
                  %305 = vst [vmem:[%s297 + $0x18] sm:$0xff] %v304
                  %v306 = vld [vmem:[%s296 + $0x20] sm:$0xff]
                  %307 = vst [vmem:[%s297 + $0x20] sm:$0xff] %v306
                  %v308 = vld [vmem:[%s296 + $0x28] sm:$0xff]
                  %309 = vst [vmem:[%s297 + $0x28] sm:$0xff] %v308
                  %v310 = vld [vmem:[%s296 + $0x30] sm:$0xff]
                  %311 = vst [vmem:[%s297 + $0x30] sm:$0xff] %v310
                  %v312 = vld [vmem:[%s296 + $0x38] sm:$0xff]
                  %313 = vst [vmem:[%s297 + $0x38] sm:$0xff] %v312
                  %v314 = vld [vmem:[%s296 + $0x80] sm:$0xff]
                  %315 = vst [vmem:[%s297 + $0x40] sm:$0xff] %v314
                  %v316 = vld [vmem:[%s296 + $0x88] sm:$0xff]
                  %317 = vst [vmem:[%s297 + $0x48] sm:$0xff] %v316
                  %v318 = vld [vmem:[%s296 + $0x90] sm:$0xff]
                  %319 = vst [vmem:[%s297 + $0x50] sm:$0xff] %v318
                  %v320 = vld [vmem:[%s296 + $0x98] sm:$0xff]
                  %321 = vst [vmem:[%s297 + $0x58] sm:$0xff] %v320
                  %v322 = vld [vmem:[%s296 + $0xa0] sm:$0xff]
                  %323 = vst [vmem:[%s297 + $0x60] sm:$0xff] %v322
                  %v324 = vld [vmem:[%s296 + $0xa8] sm:$0xff]
                  %325 = vst [vmem:[%s297 + $0x68] sm:$0xff] %v324
                  %v326 = vld [vmem:[%s296 + $0xb0] sm:$0xff]
                  %327 = vst [vmem:[%s297 + $0x70] sm:$0xff] %v326
                  %v328 = vld [vmem:[%s296 + $0xb8] sm:$0xff]
                  %329 = vst [vmem:[%s297 + $0x78] sm:$0xff] %v328
                  %v330 = vld [vmem:[%s296 + $0x100] sm:$0xff]
                  %331 = vst [vmem:[%s297 + $0x80] sm:$0xff] %v330
                  %v332 = vld [vmem:[%s296 + $0x108] sm:$0xff]
                  %333 = vst [vmem:[%s297 + $0x88] sm:$0xff] %v332
                  %v334 = vld [vmem:[%s296 + $0x110] sm:$0xff]
                  %335 = vst [vmem:[%s297 + $0x90] sm:$0xff] %v334
                  %v336 = vld [vmem:[%s296 + $0x118] sm:$0xff]
                  %337 = vst [vmem:[%s297 + $0x98] sm:$0xff] %v336
                  %v338 = vld [vmem:[%s296 + $0x120] sm:$0xff]
                  %339 = vst [vmem:[%s297 + $0xa0] sm:$0xff] %v338
                  %v340 = vld [vmem:[%s296 + $0x128] sm:$0xff]
                  %341 = vst [vmem:[%s297 + $0xa8] sm:$0xff] %v340
                  %v342 = vld [vmem:[%s296 + $0x130] sm:$0xff]
                  %343 = vst [vmem:[%s297 + $0xb0] sm:$0xff] %v342
                  %v344 = vld [vmem:[%s296 + $0x138] sm:$0xff]
                  %345 = vst [vmem:[%s297 + $0xb8] sm:$0xff] %v344
                  %v346 = vld [vmem:[%s296 + $0x180] sm:$0xff]
                  %347 = vst [vmem:[%s297 + $0xc0] sm:$0xff] %v346
                  %v348 = vld [vmem:[%s296 + $0x188] sm:$0xff]
                  %349 = vst [vmem:[%s297 + $0xc8] sm:$0xff] %v348
                  %v350 = vld [vmem:[%s296 + $0x190] sm:$0xff]
                  %351 = vst [vmem:[%s297 + $0xd0] sm:$0xff] %v350
                  %v352 = vld [vmem:[%s296 + $0x198] sm:$0xff]
                  %353 = vst [vmem:[%s297 + $0xd8] sm:$0xff] %v352
                  %v354 = vld [vmem:[%s296 + $0x1a0] sm:$0xff]
                  %355 = vst [vmem:[%s297 + $0xe0] sm:$0xff] %v354
                  %v356 = vld [vmem:[%s296 + $0x1a8] sm:$0xff]
                  %357 = vst [vmem:[%s297 + $0xe8] sm:$0xff] %v356
                  %v358 = vld [vmem:[%s296 + $0x1b0] sm:$0xff]
                  %359 = vst [vmem:[%s297 + $0xf0] sm:$0xff] %v358
                  %v360 = vld [vmem:[%s296 + $0x1b8] sm:$0xff]
                  %361 = vst [vmem:[%s297 + $0xf8] sm:$0xff] %v360
                  %v362 = vld [vmem:[%s296 + $0x200] sm:$0xff]
                  %363 = vst [vmem:[%s297 + $0x100] sm:$0xff] %v362
                  %v364 = vld [vmem:[%s296 + $0x208] sm:$0xff]
                  %365 = vst [vmem:[%s297 + $0x108] sm:$0xff] %v364
                  %v366 = vld [vmem:[%s296 + $0x210] sm:$0xff]
                  %367 = vst [vmem:[%s297 + $0x110] sm:$0xff] %v366
                  %v368 = vld [vmem:[%s296 + $0x218] sm:$0xff]
                  %369 = vst [vmem:[%s297 + $0x118] sm:$0xff] %v368
                  %v370 = vld [vmem:[%s296 + $0x220] sm:$0xff]
                  %371 = vst [vmem:[%s297 + $0x120] sm:$0xff] %v370
                  %v372 = vld [vmem:[%s296 + $0x228] sm:$0xff]
                  %373 = vst [vmem:[%s297 + $0x128] sm:$0xff] %v372
                  %v374 = vld [vmem:[%s296 + $0x230] sm:$0xff]
                  %375 = vst [vmem:[%s297 + $0x130] sm:$0xff] %v374
                  %v376 = vld [vmem:[%s296 + $0x238] sm:$0xff]
                  %377 = vst [vmem:[%s297 + $0x138] sm:$0xff] %v376
                  %v378 = vld [vmem:[%s296 + $0x280] sm:$0xff]
                  %379 = vst [vmem:[%s297 + $0x140] sm:$0xff] %v378
                  %v380 = vld [vmem:[%s296 + $0x288] sm:$0xff]
                  %381 = vst [vmem:[%s297 + $0x148] sm:$0xff] %v380
                  %v382 = vld [vmem:[%s296 + $0x290] sm:$0xff]
                  %383 = vst [vmem:[%s297 + $0x150] sm:$0xff] %v382
                  %v384 = vld [vmem:[%s296 + $0x298] sm:$0xff]
                  %385 = vst [vmem:[%s297 + $0x158] sm:$0xff] %v384
                  %v386 = vld [vmem:[%s296 + $0x2a0] sm:$0xff]
                  %387 = vst [vmem:[%s297 + $0x160] sm:$0xff] %v386
                  %v388 = vld [vmem:[%s296 + $0x2a8] sm:$0xff]
                  %389 = vst [vmem:[%s297 + $0x168] sm:$0xff] %v388
                  %v390 = vld [vmem:[%s296 + $0x2b0] sm:$0xff]
                  %391 = vst [vmem:[%s297 + $0x170] sm:$0xff] %v390
                  %v392 = vld [vmem:[%s296 + $0x2b8] sm:$0xff]
                  %393 = vst [vmem:[%s297 + $0x178] sm:$0xff] %v392
                $region52: #{bigabp_unfolding_iter.1} parent=46 // loop_footer
                  %s295 = sadd.s32 1, %s291
                $region53: #{bigabp_unfolding_iter.1} parent=46 // loop_footer_branch
                  %290 = sbr.rel target = $region49
                $region54: #{bigabp_unfolding_iter.1} parent=46 // loop_exit
                  _
              $region47: #{bigabp_unfolding_iter.1} parent=31 // pred_fallthru
                _
              // Predicated region
              $region55: #{bigabp_unfolding_iter.1} parent=31 // pred_check
                _
              $region56: #{bigabp_unfolding_iter.1} parent=31 // pred_check_branch
                %395 = sbr.rel target = $region58
              $region57: #{bigabp_unfolding_iter.1} parent=31 // pred_region
                _
              $region58: #{bigabp_unfolding_iter.1} parent=31 // pred_fallthru
                _
            $region32: #{bigabp_unfolding_iter.1} parent=27 // pred_fallthru
              _
            // Predicated region
            $region33: #{bigabp_unfolding_iter.1} parent=27 // pred_check
              _
            $region34: #{bigabp_unfolding_iter.1} parent=27 // pred_check_branch
              %182 = sbr.rel target = $region36
            $region35: #{bigabp_unfolding_iter.1} parent=27 // pred_region
              loop: start=0, step=1, limit=1
              $region37: #{bigabp_unfolding_iter.1} parent=35 // loop_pre_header
                _
              $region38: #{bigabp_unfolding_iter.1} parent=35 // loop_header
                %s185 = sphi 0, %s189
                %p186 = scmp.ge.s32.totalorder %s185, 1
                %s190 = sphi %s176, %s176
                %s191 = sphi %s172, %s172
              $region39: #{bigabp_unfolding_iter.1} parent=35 // loop_header_branch
                %188 = sbr.rel (%p186) target = $region43
              $region40: #{bigabp_unfolding_iter.1} parent=35 // loop_body
                %v192 = vld [vmem:[%s190] sm:$0xff]
                %193 = vst [vmem:[%s191] sm:$0xff] %v192
                %v194 = vld [vmem:[%s190 + $0x8] sm:$0xff]
                %195 = vst [vmem:[%s191 + $0x8] sm:$0xff] %v194
                %v196 = vld [vmem:[%s190 + $0x10] sm:$0xff]
                %197 = vst [vmem:[%s191 + $0x10] sm:$0xff] %v196
                %v198 = vld [vmem:[%s190 + $0x18] sm:$0xff]
                %199 = vst [vmem:[%s191 + $0x18] sm:$0xff] %v198
                %v200 = vld [vmem:[%s190 + $0x20] sm:$0xff]
                %201 = vst [vmem:[%s191 + $0x20] sm:$0xff] %v200
                %v202 = vld [vmem:[%s190 + $0x28] sm:$0xff]
                %203 = vst [vmem:[%s191 + $0x28] sm:$0xff] %v202
                %v204 = vld [vmem:[%s190 + $0x30] sm:$0xff]
                %205 = vst [vmem:[%s191 + $0x30] sm:$0xff] %v204
                %v206 = vld [vmem:[%s190 + $0x38] sm:$0xff]
                %207 = vst [vmem:[%s191 + $0x38] sm:$0xff] %v206
                %v208 = vld [vmem:[%s190 + $0x80] sm:$0xff]
                %209 = vst [vmem:[%s191 + $0x40] sm:$0xff] %v208
                %v210 = vld [vmem:[%s190 + $0x88] sm:$0xff]
                %211 = vst [vmem:[%s191 + $0x48] sm:$0xff] %v210
                %v212 = vld [vmem:[%s190 + $0x90] sm:$0xff]
                %213 = vst [vmem:[%s191 + $0x50] sm:$0xff] %v212
                %v214 = vld [vmem:[%s190 + $0x98] sm:$0xff]
                %215 = vst [vmem:[%s191 + $0x58] sm:$0xff] %v214
                %v216 = vld [vmem:[%s190 + $0xa0] sm:$0xff]
                %217 = vst [vmem:[%s191 + $0x60] sm:$0xff] %v216
                %v218 = vld [vmem:[%s190 + $0xa8] sm:$0xff]
                %219 = vst [vmem:[%s191 + $0x68] sm:$0xff] %v218
                %v220 = vld [vmem:[%s190 + $0xb0] sm:$0xff]
                %221 = vst [vmem:[%s191 + $0x70] sm:$0xff] %v220
                %v222 = vld [vmem:[%s190 + $0xb8] sm:$0xff]
                %223 = vst [vmem:[%s191 + $0x78] sm:$0xff] %v222
                %v224 = vld [vmem:[%s190 + $0x100] sm:$0xff]
                %225 = vst [vmem:[%s191 + $0x80] sm:$0xff] %v224
                %v226 = vld [vmem:[%s190 + $0x108] sm:$0xff]
                %227 = vst [vmem:[%s191 + $0x88] sm:$0xff] %v226
                %v228 = vld [vmem:[%s190 + $0x110] sm:$0xff]
                %229 = vst [vmem:[%s191 + $0x90] sm:$0xff] %v228
                %v230 = vld [vmem:[%s190 + $0x118] sm:$0xff]
                %231 = vst [vmem:[%s191 + $0x98] sm:$0xff] %v230
                %v232 = vld [vmem:[%s190 + $0x120] sm:$0xff]
                %233 = vst [vmem:[%s191 + $0xa0] sm:$0xff] %v232
                %v234 = vld [vmem:[%s190 + $0x128] sm:$0xff]
                %235 = vst [vmem:[%s191 + $0xa8] sm:$0xff] %v234
                %v236 = vld [vmem:[%s190 + $0x130] sm:$0xff]
                %237 = vst [vmem:[%s191 + $0xb0] sm:$0xff] %v236
                %v238 = vld [vmem:[%s190 + $0x138] sm:$0xff]
                %239 = vst [vmem:[%s191 + $0xb8] sm:$0xff] %v238
                %v240 = vld [vmem:[%s190 + $0x180] sm:$0xff]
                %241 = vst [vmem:[%s191 + $0xc0] sm:$0xff] %v240
                %v242 = vld [vmem:[%s190 + $0x188] sm:$0xff]
                %243 = vst [vmem:[%s191 + $0xc8] sm:$0xff] %v242
                %v244 = vld [vmem:[%s190 + $0x190] sm:$0xff]
                %245 = vst [vmem:[%s191 + $0xd0] sm:$0xff] %v244
                %v246 = vld [vmem:[%s190 + $0x198] sm:$0xff]
                %247 = vst [vmem:[%s191 + $0xd8] sm:$0xff] %v246
                %v248 = vld [vmem:[%s190 + $0x1a0] sm:$0xff]
                %249 = vst [vmem:[%s191 + $0xe0] sm:$0xff] %v248
                %v250 = vld [vmem:[%s190 + $0x1a8] sm:$0xff]
                %251 = vst [vmem:[%s191 + $0xe8] sm:$0xff] %v250
                %v252 = vld [vmem:[%s190 + $0x1b0] sm:$0xff]
                %253 = vst [vmem:[%s191 + $0xf0] sm:$0xff] %v252
                %v254 = vld [vmem:[%s190 + $0x1b8] sm:$0xff]
                %255 = vst [vmem:[%s191 + $0xf8] sm:$0xff] %v254
                %v256 = vld [vmem:[%s190 + $0x200] sm:$0xff]
                %257 = vst [vmem:[%s191 + $0x100] sm:$0xff] %v256
                %v258 = vld [vmem:[%s190 + $0x208] sm:$0xff]
                %259 = vst [vmem:[%s191 + $0x108] sm:$0xff] %v258
                %v260 = vld [vmem:[%s190 + $0x210] sm:$0xff]
                %261 = vst [vmem:[%s191 + $0x110] sm:$0xff] %v260
                %v262 = vld [vmem:[%s190 + $0x218] sm:$0xff]
                %263 = vst [vmem:[%s191 + $0x118] sm:$0xff] %v262
                %v264 = vld [vmem:[%s190 + $0x220] sm:$0xff]
                %265 = vst [vmem:[%s191 + $0x120] sm:$0xff] %v264
                %v266 = vld [vmem:[%s190 + $0x228] sm:$0xff]
                %267 = vst [vmem:[%s191 + $0x128] sm:$0xff] %v266
                %v268 = vld [vmem:[%s190 + $0x230] sm:$0xff]
                %269 = vst [vmem:[%s191 + $0x130] sm:$0xff] %v268
                %v270 = vld [vmem:[%s190 + $0x238] sm:$0xff]
                %271 = vst [vmem:[%s191 + $0x138] sm:$0xff] %v270
                %v272 = vld [vmem:[%s190 + $0x280] sm:$0xff]
                %273 = vst [vmem:[%s191 + $0x140] sm:$0xff] %v272
                %v274 = vld [vmem:[%s190 + $0x288] sm:$0xff]
                %275 = vst [vmem:[%s191 + $0x148] sm:$0xff] %v274
                %v276 = vld [vmem:[%s190 + $0x290] sm:$0xff]
                %277 = vst [vmem:[%s191 + $0x150] sm:$0xff] %v276
                %v278 = vld [vmem:[%s190 + $0x298] sm:$0xff]
                %279 = vst [vmem:[%s191 + $0x158] sm:$0xff] %v278
                %v280 = vld [vmem:[%s190 + $0x2a0] sm:$0xff]
                %281 = vst [vmem:[%s191 + $0x160] sm:$0xff] %v280
                %v282 = vld [vmem:[%s190 + $0x2a8] sm:$0xff]
                %283 = vst [vmem:[%s191 + $0x168] sm:$0xff] %v282
                %v284 = vld [vmem:[%s190 + $0x2b0] sm:$0xff]
                %285 = vst [vmem:[%s191 + $0x170] sm:$0xff] %v284
                %v286 = vld [vmem:[%s190 + $0x2b8] sm:$0xff]
                %287 = vst [vmem:[%s191 + $0x178] sm:$0xff] %v286
              $region41: #{bigabp_unfolding_iter.1} parent=35 // loop_footer
                %s189 = sadd.s32 1, %s185
              $region42: #{bigabp_unfolding_iter.1} parent=35 // loop_footer_branch
                %184 = sbr.rel target = $region38
              $region43: #{bigabp_unfolding_iter.1} parent=35 // loop_exit
                _
            $region36: #{bigabp_unfolding_iter.1} parent=27 // pred_fallthru
              _
          $region28: #{bigabp_unfolding_iter.1} parent=23 // pred_fallthru
            _
          %396 = vnop
        $region24: #{bigabp_unfolding_iter.1} parent=19 // pred_fallthru
          _
        // Predicated region
        $region59: #{bigabp_unfolding_iter.1} parent=19 // pred_check
          %p397 = pneg %p78
        $region60: #{bigabp_unfolding_iter.1} parent=19 // pred_check_branch
          %399 = sbr.rel (%p397) target = $region62
        $region61: #{bigabp_unfolding_iter.1} parent=19 // pred_region
          %s400 = sand.u32 %s68, 1
          %s401 = sand.u32 %s68, 1
          %s402 = smul.addr %s401, 16
          %s403 = scalar_lea.vmem [#allocation5], %s402
          %s404 = smul.u32 2, %s11
          %s405 = smul.addr %s404, 4
          %s406 = scalar_lea.vmem %s2, %s405
          // Predicated region
          $region63: #{bigabp_unfolding_iter.1} parent=61 // pred_check
            _
          $region64: #{bigabp_unfolding_iter.1} parent=61 // pred_check_branch
            %408 = sbr.rel (0) target = $region66
          $region65: #{bigabp_unfolding_iter.1} parent=61 // pred_region
            // Predicated region
            $region67: #{bigabp_unfolding_iter.1} parent=65 // pred_check
              _
            $region68: #{bigabp_unfolding_iter.1} parent=65 // pred_check_branch
              %410 = sbr.rel (0) target = $region70
            $region69: #{bigabp_unfolding_iter.1} parent=65 // pred_region
              // Predicated region
              $region82: #{bigabp_unfolding_iter.1} parent=69 // pred_check
                _
              $region83: #{bigabp_unfolding_iter.1} parent=69 // pred_check_branch
                %427 = sbr.rel (0) target = $region85
              $region84: #{bigabp_unfolding_iter.1} parent=69 // pred_region
                loop: start=0, step=1, limit=1
                $region86: #{bigabp_unfolding_iter.1} parent=84 // loop_pre_header
                  _
                $region87: #{bigabp_unfolding_iter.1} parent=84 // loop_header
                  %s429 = sphi 0, %s433
                  %p430 = scmp.ge.s32.totalorder %s429, 1
                  %s434 = sphi %s406, %s406
                  %s435 = sphi %s403, %s403
                $region88: #{bigabp_unfolding_iter.1} parent=84 // loop_header_branch
                  %432 = sbr.rel (%p430) target = $region92
                $region89: #{bigabp_unfolding_iter.1} parent=84 // loop_body
                  %v436 = vld [vmem:[%s434] sm:$0xff]
                  %437 = vst [vmem:[%s435] sm:$0xff] %v436
                  %v438 = vld [vmem:[%s434 + $0x10] sm:$0xff]
                  %439 = vst [vmem:[%s435 + $0x8] sm:$0xff] %v438
                $region90: #{bigabp_unfolding_iter.1} parent=84 // loop_footer
                  %s433 = sadd.s32 1, %s429
                $region91: #{bigabp_unfolding_iter.1} parent=84 // loop_footer_branch
                  %428 = sbr.rel target = $region87
                $region92: #{bigabp_unfolding_iter.1} parent=84 // loop_exit
                  _
              $region85: #{bigabp_unfolding_iter.1} parent=69 // pred_fallthru
                _
              // Predicated region
              $region93: #{bigabp_unfolding_iter.1} parent=69 // pred_check
                _
              $region94: #{bigabp_unfolding_iter.1} parent=69 // pred_check_branch
                %441 = sbr.rel target = $region96
              $region95: #{bigabp_unfolding_iter.1} parent=69 // pred_region
                _
              $region96: #{bigabp_unfolding_iter.1} parent=69 // pred_fallthru
                _
            $region70: #{bigabp_unfolding_iter.1} parent=65 // pred_fallthru
              _
            // Predicated region
            $region71: #{bigabp_unfolding_iter.1} parent=65 // pred_check
              _
            $region72: #{bigabp_unfolding_iter.1} parent=65 // pred_check_branch
              %412 = sbr.rel target = $region74
            $region73: #{bigabp_unfolding_iter.1} parent=65 // pred_region
              loop: start=0, step=1, limit=1
              $region75: #{bigabp_unfolding_iter.1} parent=73 // loop_pre_header
                _
              $region76: #{bigabp_unfolding_iter.1} parent=73 // loop_header
                %s415 = sphi 0, %s419
                %p416 = scmp.ge.s32.totalorder %s415, 1
                %s420 = sphi %s406, %s406
                %s421 = sphi %s403, %s403
              $region77: #{bigabp_unfolding_iter.1} parent=73 // loop_header_branch
                %418 = sbr.rel (%p416) target = $region81
              $region78: #{bigabp_unfolding_iter.1} parent=73 // loop_body
                %v422 = vld [vmem:[%s420] sm:$0xff]
                %423 = vst [vmem:[%s421] sm:$0xff] %v422
                %v424 = vld [vmem:[%s420 + $0x10] sm:$0xff]
                %425 = vst [vmem:[%s421 + $0x8] sm:$0xff] %v424
              $region79: #{bigabp_unfolding_iter.1} parent=73 // loop_footer
                %s419 = sadd.s32 1, %s415
              $region80: #{bigabp_unfolding_iter.1} parent=73 // loop_footer_branch
                %414 = sbr.rel target = $region76
              $region81: #{bigabp_unfolding_iter.1} parent=73 // loop_exit
                _
            $region74: #{bigabp_unfolding_iter.1} parent=65 // pred_fallthru
              _
          $region66: #{bigabp_unfolding_iter.1} parent=61 // pred_fallthru
            _
          %442 = vnop
        $region62: #{bigabp_unfolding_iter.1} parent=19 // pred_fallthru
          _
        // Predicated region
        $region97: #{bigabp_unfolding_iter.1} parent=19 // pred_check
          %p443 = pneg %p104
        $region98: #{bigabp_unfolding_iter.1} parent=19 // pred_check_branch
          %445 = sbr.rel (%p443) target = $region100
        $region99: #{bigabp_unfolding_iter.1} parent=19 // pred_region
          %s446 = smul.u32 2, %s11
          %p447 = scmp.lt.s32.totalorder %s446, 3
          %s448 = scalar_select %p447, %s446, 3
          %s449 = scalar_lea.vmem %s3, %s448
          %s450 = smul.u32 2, %s11
        $region100: #{bigabp_unfolding_iter.1} parent=19 // pred_fallthru
          _
      $region20: #{bigabp_unfolding_iter.1} parent=5 // pred_fallthru
        _
      %p451 = scmp.le.s32.totalorder 1, %s11
      %p452 = scmp.lt.s32.totalorder %s11, 3
      %p453 = pnand %p451, %p452
      %p454 = pneg %p453
      // Predicated region
      $region101: #{bigabp_unfolding_iter.1} parent=5 // pred_check
        _
      $region102: #{bigabp_unfolding_iter.1} parent=5 // pred_check_branch
        %456 = sbr.rel (%p453) target = $region104
      $region103: #{bigabp_unfolding_iter.1} parent=5 // pred_region
        %s457 = ssub.s32 %s11, 1
        // Predicated region
        $region105: #{bigabp_unfolding_iter.1} parent=103 // pred_check
          %p458 = pneg %p32
        $region106: #{bigabp_unfolding_iter.1} parent=103 // pred_check_branch
          %460 = sbr.rel (%p458) target = $region108
        $region107: #{bigabp_unfolding_iter.1} parent=103 // pred_region
          %461 = dma.done [#allocation3], 16
        $region108: #{bigabp_unfolding_iter.1} parent=103 // pred_fallthru
          _
        %s462 = sand.u32 %s45, 1
        %s463 = sand.u32 %s45, 1
        %s464 = smul.addr %s463, 384
        %s465 = scalar_lea.vmem [#allocation4], %s464
        // Predicated region
        $region109: #{bigabp_unfolding_iter.1} parent=103 // pred_check
          %p466 = pneg %p58
        $region110: #{bigabp_unfolding_iter.1} parent=103 // pred_check_branch
          %468 = sbr.rel (%p466) target = $region112
        $region111: #{bigabp_unfolding_iter.1} parent=103 // pred_region
          _
        $region112: #{bigabp_unfolding_iter.1} parent=103 // pred_fallthru
          _
        %s469 = sand.u32 %s71, 1
        %s470 = sand.u32 %s71, 1
        %s471 = smul.addr %s470, 16
        %s472 = scalar_lea.vmem [#allocation5], %s471
        // Predicated region
        $region113: #{bigabp_unfolding_iter.1} parent=103 // pred_check
          %p473 = pneg %p84
        $region114: #{bigabp_unfolding_iter.1} parent=103 // pred_check_branch
          %475 = sbr.rel (%p473) target = $region116
        $region115: #{bigabp_unfolding_iter.1} parent=103 // pred_region
          _
        $region116: #{bigabp_unfolding_iter.1} parent=103 // pred_fallthru
          _
        %476 = sfence
        %p477 = pneg %p32
        %p478 = pneg %p29
        %s479 = sand.u32 %s45, 1
        %s480 = sand.u32 %s45, 1
        %s481 = smul.addr %s480, 384
        %s482 = scalar_lea.vmem [#allocation4], %s481
        %p483 = pneg %p58
        %p484 = pneg %p55
        %s485 = sand.u32 %s71, 1
        %s486 = sand.u32 %s71, 1
        %s487 = smul.addr %s486, 16
        %s488 = scalar_lea.vmem [#allocation5], %s487
        %p489 = pneg %p84
        %p490 = pneg %p81
        %s491 = smul.u32 2, %s16
        %p492 = scmp.lt.s32.totalorder %s491, 3
        %s493 = scalar_select %p492, %s491, 3
        %s494 = scalar_lea.vmem %s3, %s493
        %p495 = pneg %p110
        %p496 = pneg %p107
        %p497 = pneg %p136
        %p498 = pneg %p133
        %s499 = sand.u32 %s123, 1
        %s500 = sand.u32 %s123, 1
        %s501 = smul.addr %s500, 384
        %s502 = scalar_lea.vmem [#allocation6], %s501
        %s503 = smul.u32 2, %s16
        %s504 = smul.u32 2, %s16
        %s505 = smul.u32 2, %s16
        %p506 = scmp.lt.s32.totalorder %s505, 3
        %s507 = scalar_select %p506, %s505, 3
        %s508 = scalar_lea.vmem %s3, %s507
        %s509 = smul.u32 2, %s16
        %s510 = smul.u32 2, %s16
        %s511 = sld [smem:[#allocation2]]
        %s512 = sld [smem:[#allocation2 + $0x1]]
        %s513 = sld [smem:[#allocation2 + $0x2]]
        %s514 = sld [smem:[#allocation2 + $0x3]]
        %s515 = sld [smem:[#allocation2 + $0x4]]
        %s516 = sld [smem:[#allocation2 + $0x5]]
        loop: start=0, step=1, limit=2
        $region117: #{bigabp_unfolding_iter.1} parent=103 // loop_pre_header
          _
        $region118: #{bigabp_unfolding_iter.1} parent=103 // loop_header
          %s518 = sphi 0, %s522
          %p519 = scmp.ge.s32.totalorder %s518, 2
        $region119: #{bigabp_unfolding_iter.1} parent=103 // loop_header_branch
          %521 = sbr.rel (%p519) target = $region123
        $region120: #{bigabp_unfolding_iter.1} parent=103 // loop_body
          %s523 = smul.u32 %s518, 32
          %s524 = scalar_lea.vmem %s465, %s523 [#allocation4]
          %v525 = vld [vmem:[%s524] sm:$0xff]
          %v526 = vld [vmem:[%s524 + $0x8] sm:$0xff]
          %v527 = vld [vmem:[%s524 + $0x10] sm:$0xff]
          %v528 = vld [vmem:[%s524 + $0x18] sm:$0xff]
          %s529 = scalar_lea.vmem %s465, 64 [#allocation4]
          %s530 = scalar_lea.vmem %s529, %s523 [#allocation4]
          %v531 = vld [vmem:[%s530] sm:$0xff]
          %v532 = vld [vmem:[%s530 + $0x8] sm:$0xff]
          %v533 = vld [vmem:[%s530 + $0x10] sm:$0xff]
          %v534 = vld [vmem:[%s530 + $0x18] sm:$0xff]
          %s535 = scalar_lea.vmem %s465, 128 [#allocation4]
          %s536 = scalar_lea.vmem %s535, %s523 [#allocation4]
          %v537 = vld [vmem:[%s536] sm:$0xff]
          %v538 = vld [vmem:[%s536 + $0x8] sm:$0xff]
          %v539 = vld [vmem:[%s536 + $0x10] sm:$0xff]
          %v540 = vld [vmem:[%s536 + $0x18] sm:$0xff]
          %s541 = scalar_lea.vmem %s465, 192 [#allocation4]
          %s542 = scalar_lea.vmem %s541, %s523 [#allocation4]
          %v543 = vld [vmem:[%s542] sm:$0xff]
          %v544 = vld [vmem:[%s542 + $0x8] sm:$0xff]
          %v545 = vld [vmem:[%s542 + $0x10] sm:$0xff]
          %v546 = vld [vmem:[%s542 + $0x18] sm:$0xff]
          %s547 = scalar_lea.vmem %s465, 256 [#allocation4]
          %s548 = scalar_lea.vmem %s547, %s523 [#allocation4]
          %v549 = vld [vmem:[%s548] sm:$0xff]
          %v550 = vld [vmem:[%s548 + $0x8] sm:$0xff]
          %v551 = vld [vmem:[%s548 + $0x10] sm:$0xff]
          %v552 = vld [vmem:[%s548 + $0x18] sm:$0xff]
          %s553 = scalar_lea.vmem %s465, 320 [#allocation4]
          %s554 = scalar_lea.vmem %s553, %s523 [#allocation4]
          %v555 = vld [vmem:[%s554] sm:$0xff]
          %v556 = vld [vmem:[%s554 + $0x8] sm:$0xff]
          %v557 = vld [vmem:[%s554 + $0x10] sm:$0xff]
          %v558 = vld [vmem:[%s554 + $0x18] sm:$0xff]
          %s559 = smul.u32 %s518, 4
          %s560 = scalar_lea.vmem %s472, %s559 [#allocation5]
          %v561 = vld [vmem:[%s560] sm:$0x1]
          %v562 = vld [vmem:[%s560 + $0x1] sm:$0x1]
          %v563 = vld [vmem:[%s560 + $0x2] sm:$0x1]
          %v564 = vld [vmem:[%s560 + $0x3] sm:$0x1]
          %s565 = scalar_lea.vmem %s472, 8 [#allocation5]
          %s566 = scalar_lea.vmem %s565, %s559 [#allocation5]
          %v567 = vld [vmem:[%s566] sm:$0x1]
          %v568 = vld [vmem:[%s566 + $0x1] sm:$0x1]
          %v569 = vld [vmem:[%s566 + $0x2] sm:$0x1]
          %v570 = vld [vmem:[%s566 + $0x3] sm:$0x1]
          %s571 = scalar_lea.vmem %s508, %s518
          %v572 = vld [vmem:[%s571] sm:$0x1]
          %v573 = vmul.f32 %v525, %v537
          %v574 = vmul.f32 %v526, %v538
          %v575 = vmul.f32 %v527, %v539
          %v576 = vmul.f32 %v528, %v540
          %v577 = vmul.f32 %v531, %v543
          %v578 = vmul.f32 %v532, %v544
          %v579 = vmul.f32 %v533, %v545
          %v580 = vmul.f32 %v534, %v546
          %v581 = vsub.f32 %v573, %v577
          %v582 = vsub.f32 %v574, %v578
          %v583 = vsub.f32 %v575, %v579
          %v584 = vsub.f32 %v576, %v580
          %v585 = vmul.f32 %v525, %v543
          %v586 = vmul.f32 %v526, %v544
          %v587 = vmul.f32 %v527, %v545
          %v588 = vmul.f32 %v528, %v546
          %v589 = vmul.f32 %v531, %v537
          %v590 = vmul.f32 %v532, %v538
          %v591 = vmul.f32 %v533, %v539
          %v592 = vmul.f32 %v534, %v540
          %v593 = vadd.f32 %v585, %v589
          %v594 = vadd.f32 %v586, %v590
          %v595 = vadd.f32 %v587, %v591
          %v596 = vadd.f32 %v588, %v592
          %v597 = vrot.slane %v581, 4
          %v598 = vadd.f32 %v581, %v597
          %v599 = vrot.slane %v598, 2
          %v600 = vadd.f32 %v598, %v599
          %v601 = vrot.slane %v600, 1
          %v602 = vadd.f32 %v600, %v601
          %v603 = vrot.slane %v582, 4
          %v604 = vadd.f32 %v582, %v603
          %v605 = vrot.slane %v604, 2
          %v606 = vadd.f32 %v604, %v605
          %v607 = vrot.slane %v606, 1
          %v608 = vadd.f32 %v606, %v607
          %v609 = vrot.slane %v583, 4
          %v610 = vadd.f32 %v583, %v609
          %v611 = vrot.slane %v610, 2
          %v612 = vadd.f32 %v610, %v611
          %v613 = vrot.slane %v612, 1
          %v614 = vadd.f32 %v612, %v613
          %v615 = vrot.slane %v584, 4
          %v616 = vadd.f32 %v584, %v615
          %v617 = vrot.slane %v616, 2
          %v618 = vadd.f32 %v616, %v617
          %v619 = vrot.slane %v618, 1
          %v620 = vadd.f32 %v618, %v619
          %v621 = vsub.f32 %v561, %v602
          %v622 = vsub.f32 %v562, %v608
          %v623 = vsub.f32 %v563, %v614
          %v624 = vsub.f32 %v564, %v620
          %v629 = vlaneseq
          %v630 = vshrl.u32 %v629, 7
          %v631 = vsub.s32 0, %v630
          %v632 = vrot.slane %v621, %v631
          %v633 = vlaneseq
          %v634 = vshrl.u32 %v633, 7
          %v635 = vsub.s32 0, %v634
          %v636 = vrot.slane %v622, %v635
          %v637 = vlaneseq
          %v638 = vshrl.u32 %v637, 7
          %v639 = vsub.s32 0, %v638
          %v640 = vrot.slane %v623, %v639
          %v641 = vlaneseq
          %v642 = vshrl.u32 %v641, 7
          %v643 = vsub.s32 0, %v642
          %v644 = vrot.slane %v624, %v643
          %v649 = vadd.f32 %v632, %v581
          %v650 = vadd.f32 %v636, %v582
          %v651 = vadd.f32 %v640, %v583
          %v652 = vadd.f32 %v644, %v584
          %v653 = vrot.slane %v593, 4
          %v654 = vadd.f32 %v593, %v653
          %v655 = vrot.slane %v654, 2
          %v656 = vadd.f32 %v654, %v655
          %v657 = vrot.slane %v656, 1
          %v658 = vadd.f32 %v656, %v657
          %v659 = vrot.slane %v594, 4
          %v660 = vadd.f32 %v594, %v659
          %v661 = vrot.slane %v660, 2
          %v662 = vadd.f32 %v660, %v661
          %v663 = vrot.slane %v662, 1
          %v664 = vadd.f32 %v662, %v663
          %v665 = vrot.slane %v595, 4
          %v666 = vadd.f32 %v595, %v665
          %v667 = vrot.slane %v666, 2
          %v668 = vadd.f32 %v666, %v667
          %v669 = vrot.slane %v668, 1
          %v670 = vadd.f32 %v668, %v669
          %v671 = vrot.slane %v596, 4
          %v672 = vadd.f32 %v596, %v671
          %v673 = vrot.slane %v672, 2
          %v674 = vadd.f32 %v672, %v673
          %v675 = vrot.slane %v674, 1
          %v676 = vadd.f32 %v674, %v675
          %v677 = vsub.f32 %v567, %v658
          %v678 = vsub.f32 %v568, %v664
          %v679 = vsub.f32 %v569, %v670
          %v680 = vsub.f32 %v570, %v676
          %v685 = vlaneseq
          %v686 = vshrl.u32 %v685, 7
          %v687 = vsub.s32 0, %v686
          %v688 = vrot.slane %v677, %v687
          %v689 = vlaneseq
          %v690 = vshrl.u32 %v689, 7
          %v691 = vsub.s32 0, %v690
          %v692 = vrot.slane %v678, %v691
          %v693 = vlaneseq
          %v694 = vshrl.u32 %v693, 7
          %v695 = vsub.s32 0, %v694
          %v696 = vrot.slane %v679, %v695
          %v697 = vlaneseq
          %v698 = vshrl.u32 %v697, 7
          %v699 = vsub.s32 0, %v698
          %v700 = vrot.slane %v680, %v699
          %v705 = vadd.f32 %v688, %v593
          %v706 = vadd.f32 %v692, %v594
          %v707 = vadd.f32 %v696, %v595
          %v708 = vadd.f32 %v700, %v596
          %v709 = vmul.f32 %v525, %v525
          %v710 = vmul.f32 %v526, %v526
          %v711 = vmul.f32 %v527, %v527
          %v712 = vmul.f32 %v528, %v528
          %v713 = vmul.f32 %v531, %v531
          %v714 = vmul.f32 %v532, %v532
          %v715 = vmul.f32 %v533, %v533
          %v716 = vmul.f32 %v534, %v534
          %v717 = vadd.f32 %v709, %v713
          %v718 = vadd.f32 %v710, %v714
          %v719 = vadd.f32 %v711, %v715
          %v720 = vadd.f32 %v712, %v716
          %v721 = vmul.f32 %v537, %v537
          %v722 = vmul.f32 %v538, %v538
          %v723 = vmul.f32 %v539, %v539
          %v724 = vmul.f32 %v540, %v540
          %v725 = vmul.f32 %v543, %v543
          %v726 = vmul.f32 %v544, %v544
          %v727 = vmul.f32 %v545, %v545
          %v728 = vmul.f32 %v546, %v546
          %v729 = vadd.f32 %v721, %v725
          %v730 = vadd.f32 %v722, %v726
          %v731 = vadd.f32 %v723, %v727
          %v732 = vadd.f32 %v724, %v728
          %v733 = vmul.f32 %v717, %v549
          %v734 = vmul.f32 %v718, %v550
          %v735 = vmul.f32 %v719, %v551
          %v736 = vmul.f32 %v720, %v552
          %v737 = vadd.f32 %v729, %v549
          %v738 = vadd.f32 %v730, %v550
          %v739 = vadd.f32 %v731, %v551
          %v740 = vadd.f32 %v732, %v552
          %v741 = vmul.f32 %v555, %v737
          %v742 = vmul.f32 %v556, %v738
          %v743 = vmul.f32 %v557, %v739
          %v744 = vmul.f32 %v558, %v740
          %v745 = vadd.f32 %v733, %v741
          %v746 = vadd.f32 %v734, %v742
          %v747 = vadd.f32 %v735, %v743
          %v748 = vadd.f32 %v736, %v744
          %v749 = vrot.slane %v745, 4
          %v750 = vadd.f32 %v745, %v749
          %v751 = vrot.slane %v750, 2
          %v752 = vadd.f32 %v750, %v751
          %v753 = vrot.slane %v752, 1
          %v754 = vadd.f32 %v752, %v753
          %v755 = vrot.slane %v746, 4
          %v756 = vadd.f32 %v746, %v755
          %v757 = vrot.slane %v756, 2
          %v758 = vadd.f32 %v756, %v757
          %v759 = vrot.slane %v758, 1
          %v760 = vadd.f32 %v758, %v759
          %v761 = vrot.slane %v747, 4
          %v762 = vadd.f32 %v747, %v761
          %v763 = vrot.slane %v762, 2
          %v764 = vadd.f32 %v762, %v763
          %v765 = vrot.slane %v764, 1
          %v766 = vadd.f32 %v764, %v765
          %v767 = vrot.slane %v748, 4
          %v768 = vadd.f32 %v748, %v767
          %v769 = vrot.slane %v768, 2
          %v770 = vadd.f32 %v768, %v769
          %v771 = vrot.slane %v770, 1
          %v772 = vadd.f32 %v770, %v771
          %v773 = vsub.f32 %v754, %v745
          %v774 = vsub.f32 %v760, %v746
          %v775 = vsub.f32 %v766, %v747
          %v776 = vsub.f32 %v772, %v748
          %v777 = vstv %s516
          %v778 = vadd.f32 %v773, %v777
          %v779 = vadd.f32 %v774, %v777
          %v780 = vadd.f32 %v775, %v777
          %v781 = vadd.f32 %v776, %v777
          %v782 = vadd.f32 %v778, %v555
          %v783 = vadd.f32 %v779, %v556
          %v784 = vadd.f32 %v780, %v557
          %v785 = vadd.f32 %v781, %v558
          %v786 = vstv %s515
          %v787 = vmul.f32 %v786, %v549
          %v788 = vmul.f32 %v786, %v550
          %v789 = vmul.f32 %v786, %v551
          %v790 = vmul.f32 %v786, %v552
          %v791 = vadd.f32 %v778, %v787
          %v792 = vadd.f32 %v779, %v788
          %v793 = vadd.f32 %v780, %v789
          %v794 = vadd.f32 %v781, %v790
          %v795 = vrcp.pop %v782
          %v796 = vrcp.pop %v783
          %v797 = vrcp.pop %v784
          %v798 = vrcp.pop %v785
          %v799 = vmul.f32 %v525, %v795
          %v800 = vmul.f32 %v526, %v796
          %v801 = vmul.f32 %v527, %v797
          %v802 = vmul.f32 %v528, %v798
          %v803 = vsub.f32 0.0, %v531
          %v804 = vsub.f32 0.0, %v532
          %v805 = vsub.f32 0.0, %v533
          %v806 = vsub.f32 0.0, %v534
          %v807 = vmul.f32 %v803, %v795
          %v808 = vmul.f32 %v804, %v796
          %v809 = vmul.f32 %v805, %v797
          %v810 = vmul.f32 %v806, %v798
          %v811 = vmul.f32 %v717, %v795
          %v812 = vmul.f32 %v718, %v796
          %v813 = vmul.f32 %v719, %v797
          %v814 = vmul.f32 %v720, %v798
          %v815 = vadd.f32 %v811, %v812
          %v816 = vadd.f32 %v815, %v813
          %v817 = vadd.f32 %v816, %v814
          %v818 = vsub.f32 %v817, %v811
          %v819 = vsub.f32 %v817, %v812
          %v820 = vsub.f32 %v817, %v813
          %v821 = vsub.f32 %v817, %v814
          %v822 = vrcp.pop %v818
          %v823 = vrcp.pop %v819
          %v824 = vrcp.pop %v820
          %v825 = vrcp.pop %v821
          %v826 = vmul.f32 %v799, %v649
          %v827 = vmul.f32 %v800, %v650
          %v828 = vmul.f32 %v801, %v651
          %v829 = vmul.f32 %v802, %v652
          %v830 = vmul.f32 %v807, %v705
          %v831 = vmul.f32 %v808, %v706
          %v832 = vmul.f32 %v809, %v707
          %v833 = vmul.f32 %v810, %v708
          %v834 = vsub.f32 %v826, %v830
          %v835 = vsub.f32 %v827, %v831
          %v836 = vsub.f32 %v828, %v832
          %v837 = vsub.f32 %v829, %v833
          %v838 = vmul.f32 %v799, %v705
          %v839 = vmul.f32 %v800, %v706
          %v840 = vmul.f32 %v801, %v707
          %v841 = vmul.f32 %v802, %v708
          %v842 = vmul.f32 %v807, %v649
          %v843 = vmul.f32 %v808, %v650
          %v844 = vmul.f32 %v809, %v651
          %v845 = vmul.f32 %v810, %v652
          %v846 = vadd.f32 %v838, %v842
          %v847 = vadd.f32 %v839, %v843
          %v848 = vadd.f32 %v840, %v844
          %v849 = vadd.f32 %v841, %v845
          %v850 = vadd.f32 %v834, %v835
          %v851 = vadd.f32 %v850, %v836
          %v852 = vadd.f32 %v851, %v837
          %v853 = vsub.f32 %v852, %v834
          %v854 = vsub.f32 %v852, %v835
          %v855 = vsub.f32 %v852, %v836
          %v856 = vsub.f32 %v852, %v837
          %v857 = vmul.f32 %v853, %v822
          %v858 = vmul.f32 %v854, %v823
          %v859 = vmul.f32 %v855, %v824
          %v860 = vmul.f32 %v856, %v825
          %v861 = vadd.f32 %v846, %v847
          %v862 = vadd.f32 %v861, %v848
          %v863 = vadd.f32 %v862, %v849
          %v864 = vsub.f32 %v863, %v846
          %v865 = vsub.f32 %v863, %v847
          %v866 = vsub.f32 %v863, %v848
          %v867 = vsub.f32 %v863, %v849
          %v868 = vmul.f32 %v864, %v822
          %v869 = vmul.f32 %v865, %v823
          %v870 = vmul.f32 %v866, %v824
          %v871 = vmul.f32 %v867, %v825
          %v872 = vstv %s513
          %v873 = vmul.f32 %v857, %v872
          %v874 = vmul.f32 %v858, %v872
          %v875 = vmul.f32 %v859, %v872
          %v876 = vmul.f32 %v860, %v872
          %v877 = vtanh.pop %v873
          %v878 = vtanh.pop %v874
          %v879 = vtanh.pop %v875
          %v880 = vtanh.pop %v876
          %v881 = vmul.f32 %v877, 0.70710677
          %v882 = vmul.f32 %v878, 0.70710677
          %v883 = vmul.f32 %v879, 0.70710677
          %v884 = vmul.f32 %v880, 0.70710677
          %v885 = vmul.f32 %v868, %v872
          %v886 = vmul.f32 %v869, %v872
          %v887 = vmul.f32 %v870, %v872
          %v888 = vmul.f32 %v871, %v872
          %v889 = vtanh.pop %v885
          %v890 = vtanh.pop %v886
          %v891 = vtanh.pop %v887
          %v892 = vtanh.pop %v888
          %v893 = vmul.f32 %v889, 0.70710677
          %v894 = vmul.f32 %v890, 0.70710677
          %v895 = vmul.f32 %v891, 0.70710677
          %v896 = vmul.f32 %v892, 0.70710677
          %v897 = vmul.f32 %v881, %v881
          %v898 = vmul.f32 %v882, %v882
          %v899 = vmul.f32 %v883, %v883
          %v900 = vmul.f32 %v884, %v884
          %v901 = vmul.f32 %v893, %v893
          %v902 = vmul.f32 %v894, %v894
          %v903 = vmul.f32 %v895, %v895
          %v904 = vmul.f32 %v896, %v896
          %v905 = vadd.f32 %v897, %v901
          %v906 = vadd.f32 %v898, %v902
          %v907 = vadd.f32 %v899, %v903
          %v908 = vadd.f32 %v900, %v904
          %v909 = vsub.f32 1.0, %v905
          %v910 = vsub.f32 1.0, %v906
          %v911 = vsub.f32 1.0, %v907
          %v912 = vsub.f32 1.0, %v908
          %v913 = vstv %s514
          %v914 = vmul.f32 %v913, %v572
          %v915 = vsub.f32 %v881, %v537
          %v916 = vsub.f32 %v882, %v538
          %v917 = vsub.f32 %v883, %v539
          %v918 = vsub.f32 %v884, %v540
          %v920 = vlaneseq
          %v921 = vshrl.u32 %v920, 7
          %v922 = vsub.s32 0, %v921
          %v923 = vrot.slane %v914, %v922
          %v925 = vmul.f32 %v915, %v923
          %v926 = vmul.f32 %v916, %v923
          %v927 = vmul.f32 %v917, %v923
          %v928 = vmul.f32 %v918, %v923
          %v929 = vadd.f32 %v537, %v925
          %v930 = vadd.f32 %v538, %v926
          %v931 = vadd.f32 %v539, %v927
          %v932 = vadd.f32 %v540, %v928
          %s933 = scalar_lea.vmem %s502, 128 [#allocation6]
          %s934 = scalar_lea.vmem %s933, %s523 [#allocation6]
          %935 = vst [vmem:[%s934] sm:$0xff] %v929
          %936 = vst [vmem:[%s934 + $0x8] sm:$0xff] %v930
          %937 = vst [vmem:[%s934 + $0x10] sm:$0xff] %v931
          %938 = vst [vmem:[%s934 + $0x18] sm:$0xff] %v932
          %v939 = vsub.f32 %v893, %v543
          %v940 = vsub.f32 %v894, %v544
          %v941 = vsub.f32 %v895, %v545
          %v942 = vsub.f32 %v896, %v546
          %v943 = vmul.f32 %v939, %v923
          %v944 = vmul.f32 %v940, %v923
          %v945 = vmul.f32 %v941, %v923
          %v946 = vmul.f32 %v942, %v923
          %v947 = vadd.f32 %v543, %v943
          %v948 = vadd.f32 %v544, %v944
          %v949 = vadd.f32 %v545, %v945
          %v950 = vadd.f32 %v546, %v946
          %s951 = scalar_lea.vmem %s502, 192 [#allocation6]
          %s952 = scalar_lea.vmem %s951, %s523 [#allocation6]
          %953 = vst [vmem:[%s952] sm:$0xff] %v947
          %954 = vst [vmem:[%s952 + $0x8] sm:$0xff] %v948
          %955 = vst [vmem:[%s952 + $0x10] sm:$0xff] %v949
          %956 = vst [vmem:[%s952 + $0x18] sm:$0xff] %v950
          %v957 = vsub.f32 %v909, %v549
          %v958 = vsub.f32 %v910, %v550
          %v959 = vsub.f32 %v911, %v551
          %v960 = vsub.f32 %v912, %v552
          %v961 = vmul.f32 %v957, %v923
          %v962 = vmul.f32 %v958, %v923
          %v963 = vmul.f32 %v959, %v923
          %v964 = vmul.f32 %v960, %v923
          %v965 = vadd.f32 %v549, %v961
          %v966 = vadd.f32 %v550, %v962
          %v967 = vadd.f32 %v551, %v963
          %v968 = vadd.f32 %v552, %v964
          %s969 = scalar_lea.vmem %s502, 256 [#allocation6]
          %s970 = scalar_lea.vmem %s969, %s523 [#allocation6]
          %971 = vst [vmem:[%s970] sm:$0xff] %v965
          %972 = vst [vmem:[%s970 + $0x8] sm:$0xff] %v966
          %973 = vst [vmem:[%s970 + $0x10] sm:$0xff] %v967
          %974 = vst [vmem:[%s970 + $0x18] sm:$0xff] %v968
          %v975 = vrcp.pop %v791
          %v976 = vrcp.pop %v792
          %v977 = vrcp.pop %v793
          %v978 = vrcp.pop %v794
          %v979 = vstv %s512
          %v980 = vmul.f32 %v979, %v572
          %v981 = vstv %s511
          %v982 = vadd.f32 %v981, %v980
          %v984 = vlaneseq
          %v985 = vshrl.u32 %v984, 7
          %v986 = vsub.s32 0, %v985
          %v987 = vrot.slane %v982, %v986
          %v989 = vmul.f32 %v987, %v975
          %v990 = vmul.f32 %v987, %v976
          %v991 = vmul.f32 %v987, %v977
          %v992 = vmul.f32 %v987, %v978
          %v993 = vmul.f32 %v537, %v989
          %v994 = vmul.f32 %v538, %v990
          %v995 = vmul.f32 %v539, %v991
          %v996 = vmul.f32 %v540, %v992
          %v997 = vsub.f32 0.0, %v543
          %v998 = vsub.f32 0.0, %v544
          %v999 = vsub.f32 0.0, %v545
          %v1000 = vsub.f32 0.0, %v546
          %v1001 = vmul.f32 %v997, %v989
          %v1002 = vmul.f32 %v998, %v990
          %v1003 = vmul.f32 %v999, %v991
          %v1004 = vmul.f32 %v1000, %v992
          %v1005 = vmul.f32 %v729, %v989
          %v1006 = vmul.f32 %v730, %v990
          %v1007 = vmul.f32 %v731, %v991
          %v1008 = vmul.f32 %v732, %v992
          %1009 = vmatprep.subr.mxu0 0.0
          %1010 = vmatpush1.msra.mxu0 1.0
          %1011 = vmatprep.subr.mxu0 0.0
          %1012 = vmatpush1.msra.mxu0 1.0
          %1013 = vmatprep.subr.mxu0 0.0
          %1014 = vmatpush1.msra.mxu0 1.0
          %1015 = vmatprep.subr.mxu0 0.0
          %1016 = vmatpush1.msra.mxu0 1.0
          %1017 = vmatprep.subr.mxu0 0.0
          %1018 = vmatpush1.msra.mxu0 1.0
          %1019 = vmatprep.subr.mxu0 0.0
          %1020 = vmatpush1.msra.mxu0 1.0
          %1021 = vmatprep.subr.mxu0 0.0
          %1022 = vmatpush1.msra.mxu0 1.0
          %1023 = vmatprep.subr.mxu0 0.0
          %1024 = vmatpush1.msra.mxu0 1.0
          %1025 = vmatprep.subr.mxu0 0.0
          %1026 = vmatpush1.msra.mxu0 1.0
          %1027 = vmatprep.subr.mxu0 0.0
          %1028 = vmatpush1.msra.mxu0 1.0
          %1029 = vmatprep.subr.mxu0 0.0
          %1030 = vmatpush1.msra.mxu0 1.0
          %1031 = vmatprep.subr.mxu0 0.0
          %1032 = vmatpush1.msra.mxu0 1.0
          %1033 = vmatprep.subr.mxu0 0.0
          %1034 = vmatpush1.msra.mxu0 1.0
          %1035 = vmatprep.subr.mxu0 0.0
          %1036 = vmatpush1.msra.mxu0 1.0
          %1037 = vmatprep.subr.mxu0 0.0
          %1038 = vmatpush1.msra.mxu0 1.0
          %1039 = vmatprep.subr.mxu0 0.0
          %1040 = vmatpush1.msra.mxu0 1.0
          %1041 = vmatprep.subr.mxu0 0.0
          %1042 = vmatpush1.msra.mxu0 0.0
          %1043 = vmatprep.subr.mxu0 0.0
          %1044 = vmatpush1.msra.mxu0 0.0
          %1045 = vmatprep.subr.mxu0 0.0
          %1046 = vmatpush1.msra.mxu0 0.0
          %1047 = vmatprep.subr.mxu0 0.0
          %1048 = vmatpush1.msra.mxu0 0.0
          %1049 = vmatprep.subr.mxu0 0.0
          %1050 = vmatpush1.msra.mxu0 0.0
          %1051 = vmatprep.subr.mxu0 0.0
          %1052 = vmatpush1.msra.mxu0 0.0
          %1053 = vmatprep.subr.mxu0 0.0
          %1054 = vmatpush1.msra.mxu0 0.0
          %1055 = vmatprep.subr.mxu0 0.0
          %1056 = vmatpush1.msra.mxu0 0.0
          %1057 = vmatprep.subr.mxu0 0.0
          %1058 = vmatpush1.msra.mxu0 0.0
          %1059 = vmatprep.subr.mxu0 0.0
          %1060 = vmatpush1.msra.mxu0 0.0
          %1061 = vmatprep.subr.mxu0 0.0
          %1062 = vmatpush1.msra.mxu0 0.0
          %1063 = vmatprep.subr.mxu0 0.0
          %1064 = vmatpush1.msra.mxu0 0.0
          %1065 = vmatprep.subr.mxu0 0.0
          %1066 = vmatpush1.msra.mxu0 0.0
          %1067 = vmatprep.subr.mxu0 0.0
          %1068 = vmatpush1.msra.mxu0 0.0
          %1069 = vmatprep.subr.mxu0 0.0
          %1070 = vmatpush1.msra.mxu0 0.0
          %1071 = vmatprep.subr.mxu0 0.0
          %1072 = vmatpush1.msra.mxu0 0.0
          %1073 = vmatprep.mubr.f32.mxu0 0.0
          %v1074 = vand.u32 %v1005, 4294901760
          %v1075 = vsub.f32 %v1005, %v1074
          %v1076 = vand.u32 %v1075, 4294901760
          %v1077 = vsub.f32 %v1075, %v1076
          %v1078 = vand.u32 %v1077, 4294901760
          %1079 = vmatmul.mubr.f32.gmra.mrb[0].mxu0 %v1078
          %v1080 = vpop.f32.mrb[0].mxu0
          %v1081 = vadd.f32 0.0, %v1080
          %v1082 = vpop.f32.mrb[0].mxu0
          %1083 = vmatprep.mubr.f32.mxu0 0.0
          %v1084 = vand.u32 %v1006, 4294901760
          %v1085 = vsub.f32 %v1006, %v1084
          %v1086 = vand.u32 %v1085, 4294901760
          %v1087 = vsub.f32 %v1085, %v1086
          %v1088 = vand.u32 %v1087, 4294901760
          %1089 = vmatmul.mubr.f32.gmra.mrb[0].mxu0 %v1088
          %v1090 = vpop.f32.mrb[0].mxu0
          %v1091 = vadd.f32 0.0, %v1090
          %v1092 = vpop.f32.mrb[0].mxu0
          %1093 = vmatprep.mubr.f32.mxu0 0.0
          %v1094 = vand.u32 %v1007, 4294901760
          %v1095 = vsub.f32 %v1007, %v1094
          %v1096 = vand.u32 %v1095, 4294901760
          %v1097 = vsub.f32 %v1095, %v1096
          %v1098 = vand.u32 %v1097, 4294901760
          %1099 = vmatmul.mubr.f32.gmra.mrb[0].mxu0 %v1098
          %v1100 = vpop.f32.mrb[0].mxu0
          %v1101 = vadd.f32 0.0, %v1100
          %v1102 = vpop.f32.mrb[0].mxu0
          %1103 = vmatprep.mubr.f32.mxu0 0.0
          %v1104 = vand.u32 %v1008, 4294901760
          %v1105 = vsub.f32 %v1008, %v1104
          %v1106 = vand.u32 %v1105, 4294901760
          %v1107 = vsub.f32 %v1105, %v1106
          %v1108 = vand.u32 %v1107, 4294901760
          %1109 = vmatmul.mubr.f32.gmra.mrb[0].mxu0 %v1108
          %v1110 = vpop.f32.mrb[0].mxu0
          %v1111 = vadd.f32 0.0, %v1110
          %v1112 = vpop.f32.mrb[0].mxu0
          %1113 = vdwg.mxu0
          %1114 = vmatprep.subr.mxu0 0.0
          %1115 = vmatpush1.msra.mxu0 0.0
          %1116 = vmatprep.subr.mxu0 0.0
          %1117 = vmatpush1.msra.mxu0 0.0
          %1118 = vmatprep.subr.mxu0 0.0
          %1119 = vmatpush1.msra.mxu0 0.0
          %1120 = vmatprep.subr.mxu0 0.0
          %1121 = vmatpush1.msra.mxu0 0.0
          %1122 = vmatprep.subr.mxu0 0.0
          %1123 = vmatpush1.msra.mxu0 0.0
          %1124 = vmatprep.subr.mxu0 0.0
          %1125 = vmatpush1.msra.mxu0 0.0
          %1126 = vmatprep.subr.mxu0 0.0
          %1127 = vmatpush1.msra.mxu0 0.0
          %1128 = vmatprep.subr.mxu0 0.0
          %1129 = vmatpush1.msra.mxu0 0.0
          %1130 = vmatprep.subr.mxu0 0.0
          %1131 = vmatpush1.msra.mxu0 0.0
          %1132 = vmatprep.subr.mxu0 0.0
          %1133 = vmatpush1.msra.mxu0 0.0
          %1134 = vmatprep.subr.mxu0 0.0
          %1135 = vmatpush1.msra.mxu0 0.0
          %1136 = vmatprep.subr.mxu0 0.0
          %1137 = vmatpush1.msra.mxu0 0.0
          %1138 = vmatprep.subr.mxu0 0.0
          %1139 = vmatpush1.msra.mxu0 0.0
          %1140 = vmatprep.subr.mxu0 0.0
          %1141 = vmatpush1.msra.mxu0 0.0
          %1142 = vmatprep.subr.mxu0 0.0
          %1143 = vmatpush1.msra.mxu0 0.0
          %1144 = vmatprep.subr.mxu0 0.0
          %1145 = vmatpush1.msra.mxu0 0.0
          %1146 = vmatprep.subr.mxu0 0.0
          %1147 = vmatpush1.msra.mxu0 0.0
          %1148 = vmatprep.subr.mxu0 0.0
          %1149 = vmatpush1.msra.mxu0 0.0
          %1150 = vmatprep.subr.mxu0 0.0
          %1151 = vmatpush1.msra.mxu0 0.0
          %1152 = vmatprep.subr.mxu0 0.0
          %1153 = vmatpush1.msra.mxu0 0.0
          %1154 = vmatprep.subr.mxu0 0.0
          %1155 = vmatpush1.msra.mxu0 0.0
          %1156 = vmatprep.subr.mxu0 0.0
          %1157 = vmatpush1.msra.mxu0 0.0
          %1158 = vmatprep.subr.mxu0 0.0
          %1159 = vmatpush1.msra.mxu0 0.0
          %1160 = vmatprep.subr.mxu0 0.0
          %1161 = vmatpush1.msra.mxu0 0.0
          %1162 = vmatprep.subr.mxu0 0.0
          %1163 = vmatpush1.msra.mxu0 0.0
          %1164 = vmatprep.subr.mxu0 0.0
          %1165 = vmatpush1.msra.mxu0 0.0
          %1166 = vmatprep.subr.mxu0 0.0
          %1167 = vmatpush1.msra.mxu0 0.0
          %1168 = vmatprep.subr.mxu0 0.0
          %1169 = vmatpush1.msra.mxu0 0.0
          %1170 = vmatprep.subr.mxu0 0.0
          %1171 = vmatpush1.msra.mxu0 0.0
          %1172 = vmatprep.subr.mxu0 0.0
          %1173 = vmatpush1.msra.mxu0 0.0
          %1174 = vmatprep.subr.mxu0 0.0
          %1175 = vmatpush1.msra.mxu0 0.0
          %1176 = vmatprep.subr.mxu0 0.0
          %1177 = vmatpush1.msra.mxu0 0.0
          %1178 = vmatprep.mubr.f32.mxu0 0.0
          %v1179 = vand.u32 %v1005, 4294901760
          %1180 = vmatmul.mubr.f32.gmra.mrb[0].mxu0 %v1179
          %v1181 = vpop.f32.mrb[0].mxu0
          %v1182 = vadd.f32 %v1081, %v1181
          %v1183 = vpop.f32.mrb[0].mxu0
          %1184 = vmatprep.mubr.f32.mxu0 0.0
          %v1185 = vand.u32 %v1006, 4294901760
          %1186 = vmatmul.mubr.f32.gmra.mrb[0].mxu0 %v1185
          %v1187 = vpop.f32.mrb[0].mxu0
          %v1188 = vadd.f32 %v1091, %v1187
          %v1189 = vpop.f32.mrb[0].mxu0
          %1190 = vmatprep.mubr.f32.mxu0 0.0
          %v1191 = vand.u32 %v1007, 4294901760
          %1192 = vmatmul.mubr.f32.gmra.mrb[0].mxu0 %v1191
          %v1193 = vpop.f32.mrb[0].mxu0
          %v1194 = vadd.f32 %v1101, %v1193
          %v1195 = vpop.f32.mrb[0].mxu0
          %1196 = vmatprep.mubr.f32.mxu0 0.0
          %v1197 = vand.u32 %v1008, 4294901760
          %1198 = vmatmul.mubr.f32.gmra.mrb[0].mxu0 %v1197
          %v1199 = vpop.f32.mrb[0].mxu0
          %v1200 = vadd.f32 %v1111, %v1199
          %v1201 = vpop.f32.mrb[0].mxu0
          %1202 = vdwg.mxu0
          %1203 = vmatprep.subr.mxu0 0.0
          %1204 = vmatpush1.msra.mxu0 0.0
          %1205 = vmatprep.subr.mxu0 0.0
          %1206 = vmatpush1.msra.mxu0 0.0
          %1207 = vmatprep.subr.mxu0 0.0
          %1208 = vmatpush1.msra.mxu0 0.0
          %1209 = vmatprep.subr.mxu0 0.0
          %1210 = vmatpush1.msra.mxu0 0.0
          %1211 = vmatprep.subr.mxu0 0.0
          %1212 = vmatpush1.msra.mxu0 0.0
          %1213 = vmatprep.subr.mxu0 0.0
          %1214 = vmatpush1.msra.mxu0 0.0
          %1215 = vmatprep.subr.mxu0 0.0
          %1216 = vmatpush1.msra.mxu0 0.0
          %1217 = vmatprep.subr.mxu0 0.0
          %1218 = vmatpush1.msra.mxu0 0.0
          %1219 = vmatprep.subr.mxu0 0.0
          %1220 = vmatpush1.msra.mxu0 0.0
          %1221 = vmatprep.subr.mxu0 0.0
          %1222 = vmatpush1.msra.mxu0 0.0
          %1223 = vmatprep.subr.mxu0 0.0
          %1224 = vmatpush1.msra.mxu0 0.0
          %1225 = vmatprep.subr.mxu0 0.0
          %1226 = vmatpush1.msra.mxu0 0.0
          %1227 = vmatprep.subr.mxu0 0.0
          %1228 = vmatpush1.msra.mxu0 0.0
          %1229 = vmatprep.subr.mxu0 0.0
          %1230 = vmatpush1.msra.mxu0 0.0
          %1231 = vmatprep.subr.mxu0 0.0
          %1232 = vmatpush1.msra.mxu0 0.0
          %1233 = vmatprep.subr.mxu0 0.0
          %1234 = vmatpush1.msra.mxu0 0.0
          %1235 = vmatprep.subr.mxu0 0.0
          %1236 = vmatpush1.msra.mxu0 0.0
          %1237 = vmatprep.subr.mxu0 0.0
          %1238 = vmatpush1.msra.mxu0 0.0
          %1239 = vmatprep.subr.mxu0 0.0
          %1240 = vmatpush1.msra.mxu0 0.0
          %1241 = vmatprep.subr.mxu0 0.0
          %1242 = vmatpush1.msra.mxu0 0.0
          %1243 = vmatprep.subr.mxu0 0.0
          %1244 = vmatpush1.msra.mxu0 0.0
          %1245 = vmatprep.subr.mxu0 0.0
          %1246 = vmatpush1.msra.mxu0 0.0
          %1247 = vmatprep.subr.mxu0 0.0
          %1248 = vmatpush1.msra.mxu0 0.0
          %1249 = vmatprep.subr.mxu0 0.0
          %1250 = vmatpush1.msra.mxu0 0.0
          %1251 = vmatprep.subr.mxu0 0.0
          %1252 = vmatpush1.msra.mxu0 0.0
          %1253 = vmatprep.subr.mxu0 0.0
          %1254 = vmatpush1.msra.mxu0 0.0
          %1255 = vmatprep.subr.mxu0 0.0
          %1256 = vmatpush1.msra.mxu0 0.0
          %1257 = vmatprep.subr.mxu0 0.0
          %1258 = vmatpush1.msra.mxu0 0.0
          %1259 = vmatprep.subr.mxu0 0.0
          %1260 = vmatpush1.msra.mxu0 0.0
          %1261 = vmatprep.subr.mxu0 0.0
          %1262 = vmatpush1.msra.mxu0 0.0
          %1263 = vmatprep.subr.mxu0 0.0
          %1264 = vmatpush1.msra.mxu0 0.0
          %1265 = vmatprep.subr.mxu0 0.0
          %1266 = vmatpush1.msra.mxu0 0.0
          %1267 = vmatprep.mubr.f32.mxu0 0.0
          %v1268 = vand.u32 %v1005, 4294901760
          %v1269 = vsub.f32 %v1005, %v1268
          %1270 = vmatmul.mubr.f32.gmra.mrb[0].mxu0 %v1269
          %v1271 = vpop.f32.mrb[0].mxu0
          %v1272 = vadd.f32 %v1182, %v1271
          %v1273 = vpop.f32.mrb[0].mxu0
          %1274 = vmatprep.mubr.f32.mxu0 0.0
          %v1275 = vand.u32 %v1006, 4294901760
          %v1276 = vsub.f32 %v1006, %v1275
          %1277 = vmatmul.mubr.f32.gmra.mrb[0].mxu0 %v1276
          %v1278 = vpop.f32.mrb[0].mxu0
          %v1279 = vadd.f32 %v1188, %v1278
          %v1280 = vpop.f32.mrb[0].mxu0
          %1281 = vmatprep.mubr.f32.mxu0 0.0
          %v1282 = vand.u32 %v1007, 4294901760
          %v1283 = vsub.f32 %v1007, %v1282
          %1284 = vmatmul.mubr.f32.gmra.mrb[0].mxu0 %v1283
          %v1285 = vpop.f32.mrb[0].mxu0
          %v1286 = vadd.f32 %v1194, %v1285
          %v1287 = vpop.f32.mrb[0].mxu0
          %1288 = vmatprep.mubr.f32.mxu0 0.0
          %v1289 = vand.u32 %v1008, 4294901760
          %v1290 = vsub.f32 %v1008, %v1289
          %1291 = vmatmul.mubr.f32.gmra.mrb[0].mxu0 %v1290
          %v1292 = vpop.f32.mrb[0].mxu0
          %v1293 = vadd.f32 %v1200, %v1292
          %v1294 = vpop.f32.mrb[0].mxu0
          %1295 = vdwg.mxu0
          %1296 = vmatprep.subr.mxu0 0.0
          %1297 = vmatpush1.msra.mxu0 1.0
          %1298 = vmatprep.subr.mxu0 0.0
          %1299 = vmatpush1.msra.mxu0 1.0
          %1300 = vmatprep.subr.mxu0 0.0
          %1301 = vmatpush1.msra.mxu0 1.0
          %1302 = vmatprep.subr.mxu0 0.0
          %1303 = vmatpush1.msra.mxu0 1.0
          %1304 = vmatprep.subr.mxu0 0.0
          %1305 = vmatpush1.msra.mxu0 1.0
          %1306 = vmatprep.subr.mxu0 0.0
          %1307 = vmatpush1.msra.mxu0 1.0
          %1308 = vmatprep.subr.mxu0 0.0
          %1309 = vmatpush1.msra.mxu0 1.0
          %1310 = vmatprep.subr.mxu0 0.0
          %1311 = vmatpush1.msra.mxu0 1.0
          %1312 = vmatprep.subr.mxu0 0.0
          %1313 = vmatpush1.msra.mxu0 1.0
          %1314 = vmatprep.subr.mxu0 0.0
          %1315 = vmatpush1.msra.mxu0 1.0
          %1316 = vmatprep.subr.mxu0 0.0
          %1317 = vmatpush1.msra.mxu0 1.0
          %1318 = vmatprep.subr.mxu0 0.0
          %1319 = vmatpush1.msra.mxu0 1.0
          %1320 = vmatprep.subr.mxu0 0.0
          %1321 = vmatpush1.msra.mxu0 1.0
          %1322 = vmatprep.subr.mxu0 0.0
          %1323 = vmatpush1.msra.mxu0 1.0
          %1324 = vmatprep.subr.mxu0 0.0
          %1325 = vmatpush1.msra.mxu0 1.0
          %1326 = vmatprep.subr.mxu0 0.0
          %1327 = vmatpush1.msra.mxu0 1.0
          %1328 = vmatprep.subr.mxu0 0.0
          %1329 = vmatpush1.msra.mxu0 0.0
          %1330 = vmatprep.subr.mxu0 0.0
          %1331 = vmatpush1.msra.mxu0 0.0
          %1332 = vmatprep.subr.mxu0 0.0
          %1333 = vmatpush1.msra.mxu0 0.0
          %1334 = vmatprep.subr.mxu0 0.0
          %1335 = vmatpush1.msra.mxu0 0.0
          %1336 = vmatprep.subr.mxu0 0.0
          %1337 = vmatpush1.msra.mxu0 0.0
          %1338 = vmatprep.subr.mxu0 0.0
          %1339 = vmatpush1.msra.mxu0 0.0
          %1340 = vmatprep.subr.mxu0 0.0
          %1341 = vmatpush1.msra.mxu0 0.0
          %1342 = vmatprep.subr.mxu0 0.0
          %1343 = vmatpush1.msra.mxu0 0.0
          %1344 = vmatprep.subr.mxu0 0.0
          %1345 = vmatpush1.msra.mxu0 0.0
          %1346 = vmatprep.subr.mxu0 0.0
          %1347 = vmatpush1.msra.mxu0 0.0
          %1348 = vmatprep.subr.mxu0 0.0
          %1349 = vmatpush1.msra.mxu0 0.0
          %1350 = vmatprep.subr.mxu0 0.0
          %1351 = vmatpush1.msra.mxu0 0.0
          %1352 = vmatprep.subr.mxu0 0.0
          %1353 = vmatpush1.msra.mxu0 0.0
          %1354 = vmatprep.subr.mxu0 0.0
          %1355 = vmatpush1.msra.mxu0 0.0
          %1356 = vmatprep.subr.mxu0 0.0
          %1357 = vmatpush1.msra.mxu0 0.0
          %1358 = vmatprep.subr.mxu0 0.0
          %1359 = vmatpush1.msra.mxu0 0.0
          %1360 = vmatprep.mubr.f32.mxu0 0.0
          %v1361 = vand.u32 %v1005, 4294901760
          %v1362 = vsub.f32 %v1005, %v1361
          %v1363 = vand.u32 %v1362, 4294901760
          %1364 = vmatmul.mubr.f32.gmra.mrb[0].mxu0 %v1363
          %v1365 = vpop.f32.mrb[0].mxu0
          %v1366 = vadd.f32 %v1272, %v1365
          %v1367 = vpop.f32.mrb[0].mxu0
          %1368 = vmatprep.mubr.f32.mxu0 0.0
          %v1369 = vand.u32 %v1006, 4294901760
          %v1370 = vsub.f32 %v1006, %v1369
          %v1371 = vand.u32 %v1370, 4294901760
          %1372 = vmatmul.mubr.f32.gmra.mrb[0].mxu0 %v1371
          %v1373 = vpop.f32.mrb[0].mxu0
          %v1374 = vadd.f32 %v1279, %v1373
          %v1375 = vpop.f32.mrb[0].mxu0
          %1376 = vmatprep.mubr.f32.mxu0 0.0
          %v1377 = vand.u32 %v1007, 4294901760
          %v1378 = vsub.f32 %v1007, %v1377
          %v1379 = vand.u32 %v1378, 4294901760
          %1380 = vmatmul.mubr.f32.gmra.mrb[0].mxu0 %v1379
          %v1381 = vpop.f32.mrb[0].mxu0
          %v1382 = vadd.f32 %v1286, %v1381
          %v1383 = vpop.f32.mrb[0].mxu0
          %1384 = vmatprep.mubr.f32.mxu0 0.0
          %v1385 = vand.u32 %v1008, 4294901760
          %v1386 = vsub.f32 %v1008, %v1385
          %v1387 = vand.u32 %v1386, 4294901760
          %1388 = vmatmul.mubr.f32.gmra.mrb[0].mxu0 %v1387
          %v1389 = vpop.f32.mrb[0].mxu0
          %v1390 = vadd.f32 %v1293, %v1389
          %v1391 = vpop.f32.mrb[0].mxu0
          %1392 = vdwg.mxu0
          %1393 = vmatprep.subr.mxu0 0.0
          %1394 = vmatpush1.msra.mxu0 0.0
          %1395 = vmatprep.subr.mxu0 0.0
          %1396 = vmatpush1.msra.mxu0 0.0
          %1397 = vmatprep.subr.mxu0 0.0
          %1398 = vmatpush1.msra.mxu0 0.0
          %1399 = vmatprep.subr.mxu0 0.0
          %1400 = vmatpush1.msra.mxu0 0.0
          %1401 = vmatprep.subr.mxu0 0.0
          %1402 = vmatpush1.msra.mxu0 0.0
          %1403 = vmatprep.subr.mxu0 0.0
          %1404 = vmatpush1.msra.mxu0 0.0
          %1405 = vmatprep.subr.mxu0 0.0
          %1406 = vmatpush1.msra.mxu0 0.0
          %1407 = vmatprep.subr.mxu0 0.0
          %1408 = vmatpush1.msra.mxu0 0.0
          %1409 = vmatprep.subr.mxu0 0.0
          %1410 = vmatpush1.msra.mxu0 0.0
          %1411 = vmatprep.subr.mxu0 0.0
          %1412 = vmatpush1.msra.mxu0 0.0
          %1413 = vmatprep.subr.mxu0 0.0
          %1414 = vmatpush1.msra.mxu0 0.0
          %1415 = vmatprep.subr.mxu0 0.0
          %1416 = vmatpush1.msra.mxu0 0.0
          %1417 = vmatprep.subr.mxu0 0.0
          %1418 = vmatpush1.msra.mxu0 0.0
          %1419 = vmatprep.subr.mxu0 0.0
          %1420 = vmatpush1.msra.mxu0 0.0
          %1421 = vmatprep.subr.mxu0 0.0
          %1422 = vmatpush1.msra.mxu0 0.0
          %1423 = vmatprep.subr.mxu0 0.0
          %1424 = vmatpush1.msra.mxu0 0.0
          %1425 = vmatprep.subr.mxu0 0.0
          %1426 = vmatpush1.msra.mxu0 0.0
          %1427 = vmatprep.subr.mxu0 0.0
          %1428 = vmatpush1.msra.mxu0 0.0
          %1429 = vmatprep.subr.mxu0 0.0
          %1430 = vmatpush1.msra.mxu0 0.0
          %1431 = vmatprep.subr.mxu0 0.0
          %1432 = vmatpush1.msra.mxu0 0.0
          %1433 = vmatprep.subr.mxu0 0.0
          %1434 = vmatpush1.msra.mxu0 0.0
          %1435 = vmatprep.subr.mxu0 0.0
          %1436 = vmatpush1.msra.mxu0 0.0
          %1437 = vmatprep.subr.mxu0 0.0
          %1438 = vmatpush1.msra.mxu0 0.0
          %1439 = vmatprep.subr.mxu0 0.0
          %1440 = vmatpush1.msra.mxu0 0.0
          %1441 = vmatprep.subr.mxu0 0.0
          %1442 = vmatpush1.msra.mxu0 0.0
          %1443 = vmatprep.subr.mxu0 0.0
          %1444 = vmatpush1.msra.mxu0 0.0
          %1445 = vmatprep.subr.mxu0 0.0
          %1446 = vmatpush1.msra.mxu0 0.0
          %1447 = vmatprep.subr.mxu0 0.0
          %1448 = vmatpush1.msra.mxu0 0.0
          %1449 = vmatprep.subr.mxu0 0.0
          %1450 = vmatpush1.msra.mxu0 0.0
          %1451 = vmatprep.subr.mxu0 0.0
          %1452 = vmatpush1.msra.mxu0 0.0
          %1453 = vmatprep.subr.mxu0 0.0
          %1454 = vmatpush1.msra.mxu0 0.0
          %1455 = vmatprep.subr.mxu0 0.0
          %1456 = vmatpush1.msra.mxu0 0.0
          %1457 = vmatprep.mubr.f32.mxu0 0.0
          %v1458 = vand.u32 %v1005, 4294901760
          %1459 = vmatmul.mubr.f32.gmra.mrb[0].mxu0 %v1458
          %v1460 = vpop.f32.mrb[0].mxu0
          %v1461 = vadd.f32 %v1366, %v1460
          %v1462 = vpop.f32.mrb[0].mxu0
          %1463 = vmatprep.mubr.f32.mxu0 0.0
          %v1464 = vand.u32 %v1006, 4294901760
          %1465 = vmatmul.mubr.f32.gmra.mrb[0].mxu0 %v1464
          %v1466 = vpop.f32.mrb[0].mxu0
          %v1467 = vadd.f32 %v1374, %v1466
          %v1468 = vpop.f32.mrb[0].mxu0
          %1469 = vmatprep.mubr.f32.mxu0 0.0
          %v1470 = vand.u32 %v1007, 4294901760
          %1471 = vmatmul.mubr.f32.gmra.mrb[0].mxu0 %v1470
          %v1472 = vpop.f32.mrb[0].mxu0
          %v1473 = vadd.f32 %v1382, %v1472
          %v1474 = vpop.f32.mrb[0].mxu0
          %1475 = vmatprep.mubr.f32.mxu0 0.0
          %v1476 = vand.u32 %v1008, 4294901760
          %1477 = vmatmul.mubr.f32.gmra.mrb[0].mxu0 %v1476
          %v1478 = vpop.f32.mrb[0].mxu0
          %v1479 = vadd.f32 %v1390, %v1478
          %v1480 = vpop.f32.mrb[0].mxu0
          %1481 = vdwg.mxu0
          %1482 = vmatprep.subr.mxu0 0.0
          %1483 = vmatpush1.msra.mxu0 1.0
          %1484 = vmatprep.subr.mxu0 0.0
          %1485 = vmatpush1.msra.mxu0 1.0
          %1486 = vmatprep.subr.mxu0 0.0
          %1487 = vmatpush1.msra.mxu0 1.0
          %1488 = vmatprep.subr.mxu0 0.0
          %1489 = vmatpush1.msra.mxu0 1.0
          %1490 = vmatprep.subr.mxu0 0.0
          %1491 = vmatpush1.msra.mxu0 1.0
          %1492 = vmatprep.subr.mxu0 0.0
          %1493 = vmatpush1.msra.mxu0 1.0
          %1494 = vmatprep.subr.mxu0 0.0
          %1495 = vmatpush1.msra.mxu0 1.0
          %1496 = vmatprep.subr.mxu0 0.0
          %1497 = vmatpush1.msra.mxu0 1.0
          %1498 = vmatprep.subr.mxu0 0.0
          %1499 = vmatpush1.msra.mxu0 1.0
          %1500 = vmatprep.subr.mxu0 0.0
          %1501 = vmatpush1.msra.mxu0 1.0
          %1502 = vmatprep.subr.mxu0 0.0
          %1503 = vmatpush1.msra.mxu0 1.0
          %1504 = vmatprep.subr.mxu0 0.0
          %1505 = vmatpush1.msra.mxu0 1.0
          %1506 = vmatprep.subr.mxu0 0.0
          %1507 = vmatpush1.msra.mxu0 1.0
          %1508 = vmatprep.subr.mxu0 0.0
          %1509 = vmatpush1.msra.mxu0 1.0
          %1510 = vmatprep.subr.mxu0 0.0
          %1511 = vmatpush1.msra.mxu0 1.0
          %1512 = vmatprep.subr.mxu0 0.0
          %1513 = vmatpush1.msra.mxu0 1.0
          %1514 = vmatprep.subr.mxu0 0.0
          %1515 = vmatpush1.msra.mxu0 0.0
          %1516 = vmatprep.subr.mxu0 0.0
          %1517 = vmatpush1.msra.mxu0 0.0
          %1518 = vmatprep.subr.mxu0 0.0
          %1519 = vmatpush1.msra.mxu0 0.0
          %1520 = vmatprep.subr.mxu0 0.0
          %1521 = vmatpush1.msra.mxu0 0.0
          %1522 = vmatprep.subr.mxu0 0.0
          %1523 = vmatpush1.msra.mxu0 0.0
          %1524 = vmatprep.subr.mxu0 0.0
          %1525 = vmatpush1.msra.mxu0 0.0
          %1526 = vmatprep.subr.mxu0 0.0
          %1527 = vmatpush1.msra.mxu0 0.0
          %1528 = vmatprep.subr.mxu0 0.0
          %1529 = vmatpush1.msra.mxu0 0.0
          %1530 = vmatprep.subr.mxu0 0.0
          %1531 = vmatpush1.msra.mxu0 0.0
          %1532 = vmatprep.subr.mxu0 0.0
          %1533 = vmatpush1.msra.mxu0 0.0
          %1534 = vmatprep.subr.mxu0 0.0
          %1535 = vmatpush1.msra.mxu0 0.0
          %1536 = vmatprep.subr.mxu0 0.0
          %1537 = vmatpush1.msra.mxu0 0.0
          %1538 = vmatprep.subr.mxu0 0.0
          %1539 = vmatpush1.msra.mxu0 0.0
          %1540 = vmatprep.subr.mxu0 0.0
          %1541 = vmatpush1.msra.mxu0 0.0
          %1542 = vmatprep.subr.mxu0 0.0
          %1543 = vmatpush1.msra.mxu0 0.0
          %1544 = vmatprep.subr.mxu0 0.0
          %1545 = vmatpush1.msra.mxu0 0.0
          %1546 = vmatprep.mubr.f32.mxu0 0.0
          %v1547 = vand.u32 %v1005, 4294901760
          %1548 = vmatmul.mubr.f32.gmra.mrb[0].mxu0 %v1547
          %v1549 = vpop.f32.mrb[0].mxu0
          %v1550 = vadd.f32 %v1461, %v1549
          %v1551 = vpop.f32.mrb[0].mxu0
          %1552 = vmatprep.mubr.f32.mxu0 0.0
          %v1553 = vand.u32 %v1006, 4294901760
          %1554 = vmatmul.mubr.f32.gmra.mrb[0].mxu0 %v1553
          %v1555 = vpop.f32.mrb[0].mxu0
          %v1556 = vadd.f32 %v1467, %v1555
          %v1557 = vpop.f32.mrb[0].mxu0
          %1558 = vmatprep.mubr.f32.mxu0 0.0
          %v1559 = vand.u32 %v1007, 4294901760
          %1560 = vmatmul.mubr.f32.gmra.mrb[0].mxu0 %v1559
          %v1561 = vpop.f32.mrb[0].mxu0
          %v1562 = vadd.f32 %v1473, %v1561
          %v1563 = vpop.f32.mrb[0].mxu0
          %1564 = vmatprep.mubr.f32.mxu0 0.0
          %v1565 = vand.u32 %v1008, 4294901760
          %1566 = vmatmul.mubr.f32.gmra.mrb[0].mxu0 %v1565
          %v1567 = vpop.f32.mrb[0].mxu0
          %v1568 = vadd.f32 %v1479, %v1567
          %v1569 = vpop.f32.mrb[0].mxu0
          %1570 = vdwg.mxu0
          %v1571 = vsub.f32 %v1550, %v1005
          %v1572 = vsub.f32 %v1556, %v1006
          %v1573 = vsub.f32 %v1562, %v1007
          %v1574 = vsub.f32 %v1568, %v1008
          %v1575 = vrcp.pop %v1571
          %v1576 = vrcp.pop %v1572
          %v1577 = vrcp.pop %v1573
          %v1578 = vrcp.pop %v1574
          %v1579 = vmul.f32 %v993, %v649
          %v1580 = vmul.f32 %v994, %v650
          %v1581 = vmul.f32 %v995, %v651
          %v1582 = vmul.f32 %v996, %v652
          %v1583 = vmul.f32 %v1001, %v705
          %v1584 = vmul.f32 %v1002, %v706
          %v1585 = vmul.f32 %v1003, %v707
          %v1586 = vmul.f32 %v1004, %v708
          %v1587 = vsub.f32 %v1579, %v1583
          %v1588 = vsub.f32 %v1580, %v1584
          %v1589 = vsub.f32 %v1581, %v1585
          %v1590 = vsub.f32 %v1582, %v1586
          %v1591 = vmul.f32 %v993, %v705
          %v1592 = vmul.f32 %v994, %v706
          %v1593 = vmul.f32 %v995, %v707
          %v1594 = vmul.f32 %v996, %v708
          %v1595 = vmul.f32 %v1001, %v649
          %v1596 = vmul.f32 %v1002, %v650
          %v1597 = vmul.f32 %v1003, %v651
          %v1598 = vmul.f32 %v1004, %v652
          %v1599 = vadd.f32 %v1591, %v1595
          %v1600 = vadd.f32 %v1592, %v1596
          %v1601 = vadd.f32 %v1593, %v1597
          %v1602 = vadd.f32 %v1594, %v1598
          %1603 = vmatprep.subr.mxu0 0.0
          %1604 = vmatpush1.msra.mxu0 1.0
          %1605 = vmatprep.subr.mxu0 0.0
          %1606 = vmatpush1.msra.mxu0 1.0
          %1607 = vmatprep.subr.mxu0 0.0
          %1608 = vmatpush1.msra.mxu0 1.0
          %1609 = vmatprep.subr.mxu0 0.0
          %1610 = vmatpush1.msra.mxu0 1.0
          %1611 = vmatprep.subr.mxu0 0.0
          %1612 = vmatpush1.msra.mxu0 1.0
          %1613 = vmatprep.subr.mxu0 0.0
          %1614 = vmatpush1.msra.mxu0 1.0
          %1615 = vmatprep.subr.mxu0 0.0
          %1616 = vmatpush1.msra.mxu0 1.0
          %1617 = vmatprep.subr.mxu0 0.0
          %1618 = vmatpush1.msra.mxu0 1.0
          %1619 = vmatprep.subr.mxu0 0.0
          %1620 = vmatpush1.msra.mxu0 1.0
          %1621 = vmatprep.subr.mxu0 0.0
          %1622 = vmatpush1.msra.mxu0 1.0
          %1623 = vmatprep.subr.mxu0 0.0
          %1624 = vmatpush1.msra.mxu0 1.0
          %1625 = vmatprep.subr.mxu0 0.0
          %1626 = vmatpush1.msra.mxu0 1.0
          %1627 = vmatprep.subr.mxu0 0.0
          %1628 = vmatpush1.msra.mxu0 1.0
          %1629 = vmatprep.subr.mxu0 0.0
          %1630 = vmatpush1.msra.mxu0 1.0
          %1631 = vmatprep.subr.mxu0 0.0
          %1632 = vmatpush1.msra.mxu0 1.0
          %1633 = vmatprep.subr.mxu0 0.0
          %1634 = vmatpush1.msra.mxu0 1.0
          %1635 = vmatprep.subr.mxu0 0.0
          %1636 = vmatpush1.msra.mxu0 0.0
          %1637 = vmatprep.subr.mxu0 0.0
          %1638 = vmatpush1.msra.mxu0 0.0
          %1639 = vmatprep.subr.mxu0 0.0
          %1640 = vmatpush1.msra.mxu0 0.0
          %1641 = vmatprep.subr.mxu0 0.0
          %1642 = vmatpush1.msra.mxu0 0.0
          %1643 = vmatprep.subr.mxu0 0.0
          %1644 = vmatpush1.msra.mxu0 0.0
          %1645 = vmatprep.subr.mxu0 0.0
          %1646 = vmatpush1.msra.mxu0 0.0
          %1647 = vmatprep.subr.mxu0 0.0
          %1648 = vmatpush1.msra.mxu0 0.0
          %1649 = vmatprep.subr.mxu0 0.0
          %1650 = vmatpush1.msra.mxu0 0.0
          %1651 = vmatprep.subr.mxu0 0.0
          %1652 = vmatpush1.msra.mxu0 0.0
          %1653 = vmatprep.subr.mxu0 0.0
          %1654 = vmatpush1.msra.mxu0 0.0
          %1655 = vmatprep.subr.mxu0 0.0
          %1656 = vmatpush1.msra.mxu0 0.0
          %1657 = vmatprep.subr.mxu0 0.0
          %1658 = vmatpush1.msra.mxu0 0.0
          %1659 = vmatprep.subr.mxu0 0.0
          %1660 = vmatpush1.msra.mxu0 0.0
          %1661 = vmatprep.subr.mxu0 0.0
          %1662 = vmatpush1.msra.mxu0 0.0
          %1663 = vmatprep.subr.mxu0 0.0
          %1664 = vmatpush1.msra.mxu0 0.0
          %1665 = vmatprep.subr.mxu0 0.0
          %1666 = vmatpush1.msra.mxu0 0.0
          %1667 = vmatprep.mubr.f32.mxu0 0.0
          %v1668 = vand.u32 %v1587, 4294901760
          %v1669 = vsub.f32 %v1587, %v1668
          %v1670 = vand.u32 %v1669, 4294901760
          %v1671 = vsub.f32 %v1669, %v1670
          %v1672 = vand.u32 %v1671, 4294901760
          %1673 = vmatmul.mubr.f32.gmra.mrb[0].mxu0 %v1672
          %v1674 = vpop.f32.mrb[0].mxu0
          %v1675 = vadd.f32 0.0, %v1674
          %v1676 = vpop.f32.mrb[0].mxu0
          %1677 = vmatprep.mubr.f32.mxu0 0.0
          %v1678 = vand.u32 %v1588, 4294901760
          %v1679 = vsub.f32 %v1588, %v1678
          %v1680 = vand.u32 %v1679, 4294901760
          %v1681 = vsub.f32 %v1679, %v1680
          %v1682 = vand.u32 %v1681, 4294901760
          %1683 = vmatmul.mubr.f32.gmra.mrb[0].mxu0 %v1682
          %v1684 = vpop.f32.mrb[0].mxu0
          %v1685 = vadd.f32 0.0, %v1684
          %v1686 = vpop.f32.mrb[0].mxu0
          %1687 = vmatprep.mubr.f32.mxu0 0.0
          %v1688 = vand.u32 %v1589, 4294901760
          %v1689 = vsub.f32 %v1589, %v1688
          %v1690 = vand.u32 %v1689, 4294901760
          %v1691 = vsub.f32 %v1689, %v1690
          %v1692 = vand.u32 %v1691, 4294901760
          %1693 = vmatmul.mubr.f32.gmra.mrb[0].mxu0 %v1692
          %v1694 = vpop.f32.mrb[0].mxu0
          %v1695 = vadd.f32 0.0, %v1694
          %v1696 = vpop.f32.mrb[0].mxu0
          %1697 = vmatprep.mubr.f32.mxu0 0.0
          %v1698 = vand.u32 %v1590, 4294901760
          %v1699 = vsub.f32 %v1590, %v1698
          %v1700 = vand.u32 %v1699, 4294901760
          %v1701 = vsub.f32 %v1699, %v1700
          %v1702 = vand.u32 %v1701, 4294901760
          %1703 = vmatmul.mubr.f32.gmra.mrb[0].mxu0 %v1702
          %v1704 = vpop.f32.mrb[0].mxu0
          %v1705 = vadd.f32 0.0, %v1704
          %v1706 = vpop.f32.mrb[0].mxu0
          %1707 = vdwg.mxu0
          %1708 = vmatprep.subr.mxu0 0.0
          %1709 = vmatpush1.msra.mxu0 0.0
          %1710 = vmatprep.subr.mxu0 0.0
          %1711 = vmatpush1.msra.mxu0 0.0
          %1712 = vmatprep.subr.mxu0 0.0
          %1713 = vmatpush1.msra.mxu0 0.0
          %1714 = vmatprep.subr.mxu0 0.0
          %1715 = vmatpush1.msra.mxu0 0.0
          %1716 = vmatprep.subr.mxu0 0.0
          %1717 = vmatpush1.msra.mxu0 0.0
          %1718 = vmatprep.subr.mxu0 0.0
          %1719 = vmatpush1.msra.mxu0 0.0
          %1720 = vmatprep.subr.mxu0 0.0
          %1721 = vmatpush1.msra.mxu0 0.0
          %1722 = vmatprep.subr.mxu0 0.0
          %1723 = vmatpush1.msra.mxu0 0.0
          %1724 = vmatprep.subr.mxu0 0.0
          %1725 = vmatpush1.msra.mxu0 0.0
          %1726 = vmatprep.subr.mxu0 0.0
          %1727 = vmatpush1.msra.mxu0 0.0
          %1728 = vmatprep.subr.mxu0 0.0
          %1729 = vmatpush1.msra.mxu0 0.0
          %1730 = vmatprep.subr.mxu0 0.0
          %1731 = vmatpush1.msra.mxu0 0.0
          %1732 = vmatprep.subr.mxu0 0.0
          %1733 = vmatpush1.msra.mxu0 0.0
          %1734 = vmatprep.subr.mxu0 0.0
          %1735 = vmatpush1.msra.mxu0 0.0
          %1736 = vmatprep.subr.mxu0 0.0
          %1737 = vmatpush1.msra.mxu0 0.0
          %1738 = vmatprep.subr.mxu0 0.0
          %1739 = vmatpush1.msra.mxu0 0.0
          %1740 = vmatprep.subr.mxu0 0.0
          %1741 = vmatpush1.msra.mxu0 0.0
          %1742 = vmatprep.subr.mxu0 0.0
          %1743 = vmatpush1.msra.mxu0 0.0
          %1744 = vmatprep.subr.mxu0 0.0
          %1745 = vmatpush1.msra.mxu0 0.0
          %1746 = vmatprep.subr.mxu0 0.0
          %1747 = vmatpush1.msra.mxu0 0.0
          %1748 = vmatprep.subr.mxu0 0.0
          %1749 = vmatpush1.msra.mxu0 0.0
          %1750 = vmatprep.subr.mxu0 0.0
          %1751 = vmatpush1.msra.mxu0 0.0
          %1752 = vmatprep.subr.mxu0 0.0
          %1753 = vmatpush1.msra.mxu0 0.0
          %1754 = vmatprep.subr.mxu0 0.0
          %1755 = vmatpush1.msra.mxu0 0.0
          %1756 = vmatprep.subr.mxu0 0.0
          %1757 = vmatpush1.msra.mxu0 0.0
          %1758 = vmatprep.subr.mxu0 0.0
          %1759 = vmatpush1.msra.mxu0 0.0
          %1760 = vmatprep.subr.mxu0 0.0
          %1761 = vmatpush1.msra.mxu0 0.0
          %1762 = vmatprep.subr.mxu0 0.0
          %1763 = vmatpush1.msra.mxu0 0.0
          %1764 = vmatprep.subr.mxu0 0.0
          %1765 = vmatpush1.msra.mxu0 0.0
          %1766 = vmatprep.subr.mxu0 0.0
          %1767 = vmatpush1.msra.mxu0 0.0
          %1768 = vmatprep.subr.mxu0 0.0
          %1769 = vmatpush1.msra.mxu0 0.0
          %1770 = vmatprep.subr.mxu0 0.0
          %1771 = vmatpush1.msra.mxu0 0.0
          %1772 = vmatprep.mubr.f32.mxu0 0.0
          %v1773 = vand.u32 %v1587, 4294901760
          %1774 = vmatmul.mubr.f32.gmra.mrb[0].mxu0 %v1773
          %v1775 = vpop.f32.mrb[0].mxu0
          %v1776 = vadd.f32 %v1675, %v1775
          %v1777 = vpop.f32.mrb[0].mxu0
          %1778 = vmatprep.mubr.f32.mxu0 0.0
          %v1779 = vand.u32 %v1588, 4294901760
          %1780 = vmatmul.mubr.f32.gmra.mrb[0].mxu0 %v1779
          %v1781 = vpop.f32.mrb[0].mxu0
          %v1782 = vadd.f32 %v1685, %v1781
          %v1783 = vpop.f32.mrb[0].mxu0
          %1784 = vmatprep.mubr.f32.mxu0 0.0
          %v1785 = vand.u32 %v1589, 4294901760
          %1786 = vmatmul.mubr.f32.gmra.mrb[0].mxu0 %v1785
          %v1787 = vpop.f32.mrb[0].mxu0
          %v1788 = vadd.f32 %v1695, %v1787
          %v1789 = vpop.f32.mrb[0].mxu0
          %1790 = vmatprep.mubr.f32.mxu0 0.0
          %v1791 = vand.u32 %v1590, 4294901760
          %1792 = vmatmul.mubr.f32.gmra.mrb[0].mxu0 %v1791
          %v1793 = vpop.f32.mrb[0].mxu0
          %v1794 = vadd.f32 %v1705, %v1793
          %v1795 = vpop.f32.mrb[0].mxu0
          %1796 = vdwg.mxu0
          %1797 = vmatprep.subr.mxu0 0.0
          %1798 = vmatpush1.msra.mxu0 0.0
          %1799 = vmatprep.subr.mxu0 0.0
          %1800 = vmatpush1.msra.mxu0 0.0
          %1801 = vmatprep.subr.mxu0 0.0
          %1802 = vmatpush1.msra.mxu0 0.0
          %1803 = vmatprep.subr.mxu0 0.0
          %1804 = vmatpush1.msra.mxu0 0.0
          %1805 = vmatprep.subr.mxu0 0.0
          %1806 = vmatpush1.msra.mxu0 0.0
          %1807 = vmatprep.subr.mxu0 0.0
          %1808 = vmatpush1.msra.mxu0 0.0
          %1809 = vmatprep.subr.mxu0 0.0
          %1810 = vmatpush1.msra.mxu0 0.0
          %1811 = vmatprep.subr.mxu0 0.0
          %1812 = vmatpush1.msra.mxu0 0.0
          %1813 = vmatprep.subr.mxu0 0.0
          %1814 = vmatpush1.msra.mxu0 0.0
          %1815 = vmatprep.subr.mxu0 0.0
          %1816 = vmatpush1.msra.mxu0 0.0
          %1817 = vmatprep.subr.mxu0 0.0
          %1818 = vmatpush1.msra.mxu0 0.0
          %1819 = vmatprep.subr.mxu0 0.0
          %1820 = vmatpush1.msra.mxu0 0.0
          %1821 = vmatprep.subr.mxu0 0.0
          %1822 = vmatpush1.msra.mxu0 0.0
          %1823 = vmatprep.subr.mxu0 0.0
          %1824 = vmatpush1.msra.mxu0 0.0
          %1825 = vmatprep.subr.mxu0 0.0
          %1826 = vmatpush1.msra.mxu0 0.0
          %1827 = vmatprep.subr.mxu0 0.0
          %1828 = vmatpush1.msra.mxu0 0.0
          %1829 = vmatprep.subr.mxu0 0.0
          %1830 = vmatpush1.msra.mxu0 0.0
          %1831 = vmatprep.subr.mxu0 0.0
          %1832 = vmatpush1.msra.mxu0 0.0
          %1833 = vmatprep.subr.mxu0 0.0
          %1834 = vmatpush1.msra.mxu0 0.0
          %1835 = vmatprep.subr.mxu0 0.0
          %1836 = vmatpush1.msra.mxu0 0.0
          %1837 = vmatprep.subr.mxu0 0.0
          %1838 = vmatpush1.msra.mxu0 0.0
          %1839 = vmatprep.subr.mxu0 0.0
          %1840 = vmatpush1.msra.mxu0 0.0
          %1841 = vmatprep.subr.mxu0 0.0
          %1842 = vmatpush1.msra.mxu0 0.0
          %1843 = vmatprep.subr.mxu0 0.0
          %1844 = vmatpush1.msra.mxu0 0.0
          %1845 = vmatprep.subr.mxu0 0.0
          %1846 = vmatpush1.msra.mxu0 0.0
          %1847 = vmatprep.subr.mxu0 0.0
          %1848 = vmatpush1.msra.mxu0 0.0
          %1849 = vmatprep.subr.mxu0 0.0
          %1850 = vmatpush1.msra.mxu0 0.0
          %1851 = vmatprep.subr.mxu0 0.0
          %1852 = vmatpush1.msra.mxu0 0.0
          %1853 = vmatprep.subr.mxu0 0.0
          %1854 = vmatpush1.msra.mxu0 0.0
          %1855 = vmatprep.subr.mxu0 0.0
          %1856 = vmatpush1.msra.mxu0 0.0
          %1857 = vmatprep.subr.mxu0 0.0
          %1858 = vmatpush1.msra.mxu0 0.0
          %1859 = vmatprep.subr.mxu0 0.0
          %1860 = vmatpush1.msra.mxu0 0.0
          %1861 = vmatprep.mubr.f32.mxu0 0.0
          %v1862 = vand.u32 %v1587, 4294901760
          %v1863 = vsub.f32 %v1587, %v1862
          %1864 = vmatmul.mubr.f32.gmra.mrb[0].mxu0 %v1863
          %v1865 = vpop.f32.mrb[0].mxu0
          %v1866 = vadd.f32 %v1776, %v1865
          %v1867 = vpop.f32.mrb[0].mxu0
          %1868 = vmatprep.mubr.f32.mxu0 0.0
          %v1869 = vand.u32 %v1588, 4294901760
          %v1870 = vsub.f32 %v1588, %v1869
          %1871 = vmatmul.mubr.f32.gmra.mrb[0].mxu0 %v1870
          %v1872 = vpop.f32.mrb[0].mxu0
          %v1873 = vadd.f32 %v1782, %v1872
          %v1874 = vpop.f32.mrb[0].mxu0
          %1875 = vmatprep.mubr.f32.mxu0 0.0
          %v1876 = vand.u32 %v1589, 4294901760
          %v1877 = vsub.f32 %v1589, %v1876
          %1878 = vmatmul.mubr.f32.gmra.mrb[0].mxu0 %v1877
          %v1879 = vpop.f32.mrb[0].mxu0
          %v1880 = vadd.f32 %v1788, %v1879
          %v1881 = vpop.f32.mrb[0].mxu0
          %1882 = vmatprep.mubr.f32.mxu0 0.0
          %v1883 = vand.u32 %v1590, 4294901760
          %v1884 = vsub.f32 %v1590, %v1883
          %1885 = vmatmul.mubr.f32.gmra.mrb[0].mxu0 %v1884
          %v1886 = vpop.f32.mrb[0].mxu0
          %v1887 = vadd.f32 %v1794, %v1886
          %v1888 = vpop.f32.mrb[0].mxu0
          %1889 = vdwg.mxu0
          %1890 = vmatprep.subr.mxu0 0.0
          %1891 = vmatpush1.msra.mxu0 1.0
          %1892 = vmatprep.subr.mxu0 0.0
          %1893 = vmatpush1.msra.mxu0 1.0
          %1894 = vmatprep.subr.mxu0 0.0
          %1895 = vmatpush1.msra.mxu0 1.0
          %1896 = vmatprep.subr.mxu0 0.0
          %1897 = vmatpush1.msra.mxu0 1.0
          %1898 = vmatprep.subr.mxu0 0.0
          %1899 = vmatpush1.msra.mxu0 1.0
          %1900 = vmatprep.subr.mxu0 0.0
          %1901 = vmatpush1.msra.mxu0 1.0
          %1902 = vmatprep.subr.mxu0 0.0
          %1903 = vmatpush1.msra.mxu0 1.0
          %1904 = vmatprep.subr.mxu0 0.0
          %1905 = vmatpush1.msra.mxu0 1.0
          %1906 = vmatprep.subr.mxu0 0.0
          %1907 = vmatpush1.msra.mxu0 1.0
          %1908 = vmatprep.subr.mxu0 0.0
          %1909 = vmatpush1.msra.mxu0 1.0
          %1910 = vmatprep.subr.mxu0 0.0
          %1911 = vmatpush1.msra.mxu0 1.0
          %1912 = vmatprep.subr.mxu0 0.0
          %1913 = vmatpush1.msra.mxu0 1.0
          %1914 = vmatprep.subr.mxu0 0.0
          %1915 = vmatpush1.msra.mxu0 1.0
          %1916 = vmatprep.subr.mxu0 0.0
          %1917 = vmatpush1.msra.mxu0 1.0
          %1918 = vmatprep.subr.mxu0 0.0
          %1919 = vmatpush1.msra.mxu0 1.0
          %1920 = vmatprep.subr.mxu0 0.0
          %1921 = vmatpush1.msra.mxu0 1.0
          %1922 = vmatprep.subr.mxu0 0.0
          %1923 = vmatpush1.msra.mxu0 0.0
          %1924 = vmatprep.subr.mxu0 0.0
          %1925 = vmatpush1.msra.mxu0 0.0
          %1926 = vmatprep.subr.mxu0 0.0
          %1927 = vmatpush1.msra.mxu0 0.0
          %1928 = vmatprep.subr.mxu0 0.0
          %1929 = vmatpush1.msra.mxu0 0.0
          %1930 = vmatprep.subr.mxu0 0.0
          %1931 = vmatpush1.msra.mxu0 0.0
          %1932 = vmatprep.subr.mxu0 0.0
          %1933 = vmatpush1.msra.mxu0 0.0
          %1934 = vmatprep.subr.mxu0 0.0
          %1935 = vmatpush1.msra.mxu0 0.0
          %1936 = vmatprep.subr.mxu0 0.0
          %1937 = vmatpush1.msra.mxu0 0.0
          %1938 = vmatprep.subr.mxu0 0.0
          %1939 = vmatpush1.msra.mxu0 0.0
          %1940 = vmatprep.subr.mxu0 0.0
          %1941 = vmatpush1.msra.mxu0 0.0
          %1942 = vmatprep.subr.mxu0 0.0
          %1943 = vmatpush1.msra.mxu0 0.0
          %1944 = vmatprep.subr.mxu0 0.0
          %1945 = vmatpush1.msra.mxu0 0.0
          %1946 = vmatprep.subr.mxu0 0.0
          %1947 = vmatpush1.msra.mxu0 0.0
          %1948 = vmatprep.subr.mxu0 0.0
          %1949 = vmatpush1.msra.mxu0 0.0
          %1950 = vmatprep.subr.mxu0 0.0
          %1951 = vmatpush1.msra.mxu0 0.0
          %1952 = vmatprep.subr.mxu0 0.0
          %1953 = vmatpush1.msra.mxu0 0.0
          %1954 = vmatprep.mubr.f32.mxu0 0.0
          %v1955 = vand.u32 %v1587, 4294901760
          %v1956 = vsub.f32 %v1587, %v1955
          %v1957 = vand.u32 %v1956, 4294901760
          %1958 = vmatmul.mubr.f32.gmra.mrb[0].mxu0 %v1957
          %v1959 = vpop.f32.mrb[0].mxu0
          %v1960 = vadd.f32 %v1866, %v1959
          %v1961 = vpop.f32.mrb[0].mxu0
          %1962 = vmatprep.mubr.f32.mxu0 0.0
          %v1963 = vand.u32 %v1588, 4294901760
          %v1964 = vsub.f32 %v1588, %v1963
          %v1965 = vand.u32 %v1964, 4294901760
          %1966 = vmatmul.mubr.f32.gmra.mrb[0].mxu0 %v1965
          %v1967 = vpop.f32.mrb[0].mxu0
          %v1968 = vadd.f32 %v1873, %v1967
          %v1969 = vpop.f32.mrb[0].mxu0
          %1970 = vmatprep.mubr.f32.mxu0 0.0
          %v1971 = vand.u32 %v1589, 4294901760
          %v1972 = vsub.f32 %v1589, %v1971
          %v1973 = vand.u32 %v1972, 4294901760
          %1974 = vmatmul.mubr.f32.gmra.mrb[0].mxu0 %v1973
          %v1975 = vpop.f32.mrb[0].mxu0
          %v1976 = vadd.f32 %v1880, %v1975
          %v1977 = vpop.f32.mrb[0].mxu0
          %1978 = vmatprep.mubr.f32.mxu0 0.0
          %v1979 = vand.u32 %v1590, 4294901760
          %v1980 = vsub.f32 %v1590, %v1979
          %v1981 = vand.u32 %v1980, 4294901760
          %1982 = vmatmul.mubr.f32.gmra.mrb[0].mxu0 %v1981
          %v1983 = vpop.f32.mrb[0].mxu0
          %v1984 = vadd.f32 %v1887, %v1983
          %v1985 = vpop.f32.mrb[0].mxu0
          %1986 = vdwg.mxu0
          %1987 = vmatprep.subr.mxu0 0.0
          %1988 = vmatpush1.msra.mxu0 0.0
          %1989 = vmatprep.subr.mxu0 0.0
          %1990 = vmatpush1.msra.mxu0 0.0
          %1991 = vmatprep.subr.mxu0 0.0
          %1992 = vmatpush1.msra.mxu0 0.0
          %1993 = vmatprep.subr.mxu0 0.0
          %1994 = vmatpush1.msra.mxu0 0.0
          %1995 = vmatprep.subr.mxu0 0.0
          %1996 = vmatpush1.msra.mxu0 0.0
          %1997 = vmatprep.subr.mxu0 0.0
          %1998 = vmatpush1.msra.mxu0 0.0
          %1999 = vmatprep.subr.mxu0 0.0
          %2000 = vmatpush1.msra.mxu0 0.0
          %2001 = vmatprep.subr.mxu0 0.0
          %2002 = vmatpush1.msra.mxu0 0.0
          %2003 = vmatprep.subr.mxu0 0.0
          %2004 = vmatpush1.msra.mxu0 0.0
          %2005 = vmatprep.subr.mxu0 0.0
          %2006 = vmatpush1.msra.mxu0 0.0
          %2007 = vmatprep.subr.mxu0 0.0
          %2008 = vmatpush1.msra.mxu0 0.0
          %2009 = vmatprep.subr.mxu0 0.0
          %2010 = vmatpush1.msra.mxu0 0.0
          %2011 = vmatprep.subr.mxu0 0.0
          %2012 = vmatpush1.msra.mxu0 0.0
          %2013 = vmatprep.subr.mxu0 0.0
          %2014 = vmatpush1.msra.mxu0 0.0
          %2015 = vmatprep.subr.mxu0 0.0
          %2016 = vmatpush1.msra.mxu0 0.0
          %2017 = vmatprep.subr.mxu0 0.0
          %2018 = vmatpush1.msra.mxu0 0.0
          %2019 = vmatprep.subr.mxu0 0.0
          %2020 = vmatpush1.msra.mxu0 0.0
          %2021 = vmatprep.subr.mxu0 0.0
          %2022 = vmatpush1.msra.mxu0 0.0
          %2023 = vmatprep.subr.mxu0 0.0
          %2024 = vmatpush1.msra.mxu0 0.0
          %2025 = vmatprep.subr.mxu0 0.0
          %2026 = vmatpush1.msra.mxu0 0.0
          %2027 = vmatprep.subr.mxu0 0.0
          %2028 = vmatpush1.msra.mxu0 0.0
          %2029 = vmatprep.subr.mxu0 0.0
          %2030 = vmatpush1.msra.mxu0 0.0
          %2031 = vmatprep.subr.mxu0 0.0
          %2032 = vmatpush1.msra.mxu0 0.0
          %2033 = vmatprep.subr.mxu0 0.0
          %2034 = vmatpush1.msra.mxu0 0.0
          %2035 = vmatprep.subr.mxu0 0.0
          %2036 = vmatpush1.msra.mxu0 0.0
          %2037 = vmatprep.subr.mxu0 0.0
          %2038 = vmatpush1.msra.mxu0 0.0
          %2039 = vmatprep.subr.mxu0 0.0
          %2040 = vmatpush1.msra.mxu0 0.0
          %2041 = vmatprep.subr.mxu0 0.0
          %2042 = vmatpush1.msra.mxu0 0.0
          %2043 = vmatprep.subr.mxu0 0.0
          %2044 = vmatpush1.msra.mxu0 0.0
          %2045 = vmatprep.subr.mxu0 0.0
          %2046 = vmatpush1.msra.mxu0 0.0
          %2047 = vmatprep.subr.mxu0 0.0
          %2048 = vmatpush1.msra.mxu0 0.0
          %2049 = vmatprep.subr.mxu0 0.0
          %2050 = vmatpush1.msra.mxu0 0.0
          %2051 = vmatprep.mubr.f32.mxu0 0.0
          %v2052 = vand.u32 %v1587, 4294901760
          %2053 = vmatmul.mubr.f32.gmra.mrb[0].mxu0 %v2052
          %v2054 = vpop.f32.mrb[0].mxu0
          %v2055 = vadd.f32 %v1960, %v2054
          %v2056 = vpop.f32.mrb[0].mxu0
          %2057 = vmatprep.mubr.f32.mxu0 0.0
          %v2058 = vand.u32 %v1588, 4294901760
          %2059 = vmatmul.mubr.f32.gmra.mrb[0].mxu0 %v2058
          %v2060 = vpop.f32.mrb[0].mxu0
          %v2061 = vadd.f32 %v1968, %v2060
          %v2062 = vpop.f32.mrb[0].mxu0
          %2063 = vmatprep.mubr.f32.mxu0 0.0
          %v2064 = vand.u32 %v1589, 4294901760
          %2065 = vmatmul.mubr.f32.gmra.mrb[0].mxu0 %v2064
          %v2066 = vpop.f32.mrb[0].mxu0
          %v2067 = vadd.f32 %v1976, %v2066
          %v2068 = vpop.f32.mrb[0].mxu0
          %2069 = vmatprep.mubr.f32.mxu0 0.0
          %v2070 = vand.u32 %v1590, 4294901760
          %2071 = vmatmul.mubr.f32.gmra.mrb[0].mxu0 %v2070
          %v2072 = vpop.f32.mrb[0].mxu0
          %v2073 = vadd.f32 %v1984, %v2072
          %v2074 = vpop.f32.mrb[0].mxu0
          %2075 = vdwg.mxu0
          %2076 = vmatprep.subr.mxu0 0.0
          %2077 = vmatpush1.msra.mxu0 1.0
          %2078 = vmatprep.subr.mxu0 0.0
          %2079 = vmatpush1.msra.mxu0 1.0
          %2080 = vmatprep.subr.mxu0 0.0
          %2081 = vmatpush1.msra.mxu0 1.0
          %2082 = vmatprep.subr.mxu0 0.0
          %2083 = vmatpush1.msra.mxu0 1.0
          %2084 = vmatprep.subr.mxu0 0.0
          %2085 = vmatpush1.msra.mxu0 1.0
          %2086 = vmatprep.subr.mxu0 0.0
          %2087 = vmatpush1.msra.mxu0 1.0
          %2088 = vmatprep.subr.mxu0 0.0
          %2089 = vmatpush1.msra.mxu0 1.0
          %2090 = vmatprep.subr.mxu0 0.0
          %2091 = vmatpush1.msra.mxu0 1.0
          %2092 = vmatprep.subr.mxu0 0.0
          %2093 = vmatpush1.msra.mxu0 1.0
          %2094 = vmatprep.subr.mxu0 0.0
          %2095 = vmatpush1.msra.mxu0 1.0
          %2096 = vmatprep.subr.mxu0 0.0
          %2097 = vmatpush1.msra.mxu0 1.0
          %2098 = vmatprep.subr.mxu0 0.0
          %2099 = vmatpush1.msra.mxu0 1.0
          %2100 = vmatprep.subr.mxu0 0.0
          %2101 = vmatpush1.msra.mxu0 1.0
          %2102 = vmatprep.subr.mxu0 0.0
          %2103 = vmatpush1.msra.mxu0 1.0
          %2104 = vmatprep.subr.mxu0 0.0
          %2105 = vmatpush1.msra.mxu0 1.0
          %2106 = vmatprep.subr.mxu0 0.0
          %2107 = vmatpush1.msra.mxu0 1.0
          %2108 = vmatprep.subr.mxu0 0.0
          %2109 = vmatpush1.msra.mxu0 0.0
          %2110 = vmatprep.subr.mxu0 0.0
          %2111 = vmatpush1.msra.mxu0 0.0
          %2112 = vmatprep.subr.mxu0 0.0
          %2113 = vmatpush1.msra.mxu0 0.0
          %2114 = vmatprep.subr.mxu0 0.0
          %2115 = vmatpush1.msra.mxu0 0.0
          %2116 = vmatprep.subr.mxu0 0.0
          %2117 = vmatpush1.msra.mxu0 0.0
          %2118 = vmatprep.subr.mxu0 0.0
          %2119 = vmatpush1.msra.mxu0 0.0
          %2120 = vmatprep.subr.mxu0 0.0
          %2121 = vmatpush1.msra.mxu0 0.0
          %2122 = vmatprep.subr.mxu0 0.0
          %2123 = vmatpush1.msra.mxu0 0.0
          %2124 = vmatprep.subr.mxu0 0.0
          %2125 = vmatpush1.msra.mxu0 0.0
          %2126 = vmatprep.subr.mxu0 0.0
          %2127 = vmatpush1.msra.mxu0 0.0
          %2128 = vmatprep.subr.mxu0 0.0
          %2129 = vmatpush1.msra.mxu0 0.0
          %2130 = vmatprep.subr.mxu0 0.0
          %2131 = vmatpush1.msra.mxu0 0.0
          %2132 = vmatprep.subr.mxu0 0.0
          %2133 = vmatpush1.msra.mxu0 0.0
          %2134 = vmatprep.subr.mxu0 0.0
          %2135 = vmatpush1.msra.mxu0 0.0
          %2136 = vmatprep.subr.mxu0 0.0
          %2137 = vmatpush1.msra.mxu0 0.0
          %2138 = vmatprep.subr.mxu0 0.0
          %2139 = vmatpush1.msra.mxu0 0.0
          %2140 = vmatprep.mubr.f32.mxu0 0.0
          %v2141 = vand.u32 %v1587, 4294901760
          %2142 = vmatmul.mubr.f32.gmra.mrb[0].mxu0 %v2141
          %v2143 = vpop.f32.mrb[0].mxu0
          %v2144 = vadd.f32 %v2055, %v2143
          %v2145 = vpop.f32.mrb[0].mxu0
          %2146 = vmatprep.mubr.f32.mxu0 0.0
          %v2147 = vand.u32 %v1588, 4294901760
          %2148 = vmatmul.mubr.f32.gmra.mrb[0].mxu0 %v2147
          %v2149 = vpop.f32.mrb[0].mxu0
          %v2150 = vadd.f32 %v2061, %v2149
          %v2151 = vpop.f32.mrb[0].mxu0
          %2152 = vmatprep.mubr.f32.mxu0 0.0
          %v2153 = vand.u32 %v1589, 4294901760
          %2154 = vmatmul.mubr.f32.gmra.mrb[0].mxu0 %v2153
          %v2155 = vpop.f32.mrb[0].mxu0
          %v2156 = vadd.f32 %v2067, %v2155
          %v2157 = vpop.f32.mrb[0].mxu0
          %2158 = vmatprep.mubr.f32.mxu0 0.0
          %v2159 = vand.u32 %v1590, 4294901760
          %2160 = vmatmul.mubr.f32.gmra.mrb[0].mxu0 %v2159
          %v2161 = vpop.f32.mrb[0].mxu0
          %v2162 = vadd.f32 %v2073, %v2161
          %v2163 = vpop.f32.mrb[0].mxu0
          %2164 = vdwg.mxu0
          %v2165 = vsub.f32 %v2144, %v1587
          %v2166 = vsub.f32 %v2150, %v1588
          %v2167 = vsub.f32 %v2156, %v1589
          %v2168 = vsub.f32 %v2162, %v1590
          %v2169 = vmul.f32 %v2165, %v1575
          %v2170 = vmul.f32 %v2166, %v1576
          %v2171 = vmul.f32 %v2167, %v1577
          %v2172 = vmul.f32 %v2168, %v1578
          %2173 = vmatprep.subr.mxu0 0.0
          %2174 = vmatpush1.msra.mxu0 1.0
          %2175 = vmatprep.subr.mxu0 0.0
          %2176 = vmatpush1.msra.mxu0 1.0
          %2177 = vmatprep.subr.mxu0 0.0
          %2178 = vmatpush1.msra.mxu0 1.0
          %2179 = vmatprep.subr.mxu0 0.0
          %2180 = vmatpush1.msra.mxu0 1.0
          %2181 = vmatprep.subr.mxu0 0.0
          %2182 = vmatpush1.msra.mxu0 1.0
          %2183 = vmatprep.subr.mxu0 0.0
          %2184 = vmatpush1.msra.mxu0 1.0
          %2185 = vmatprep.subr.mxu0 0.0
          %2186 = vmatpush1.msra.mxu0 1.0
          %2187 = vmatprep.subr.mxu0 0.0
          %2188 = vmatpush1.msra.mxu0 1.0
          %2189 = vmatprep.subr.mxu0 0.0
          %2190 = vmatpush1.msra.mxu0 1.0
          %2191 = vmatprep.subr.mxu0 0.0
          %2192 = vmatpush1.msra.mxu0 1.0
          %2193 = vmatprep.subr.mxu0 0.0
          %2194 = vmatpush1.msra.mxu0 1.0
          %2195 = vmatprep.subr.mxu0 0.0
          %2196 = vmatpush1.msra.mxu0 1.0
          %2197 = vmatprep.subr.mxu0 0.0
          %2198 = vmatpush1.msra.mxu0 1.0
          %2199 = vmatprep.subr.mxu0 0.0
          %2200 = vmatpush1.msra.mxu0 1.0
          %2201 = vmatprep.subr.mxu0 0.0
          %2202 = vmatpush1.msra.mxu0 1.0
          %2203 = vmatprep.subr.mxu0 0.0
          %2204 = vmatpush1.msra.mxu0 1.0
          %2205 = vmatprep.subr.mxu0 0.0
          %2206 = vmatpush1.msra.mxu0 0.0
          %2207 = vmatprep.subr.mxu0 0.0
          %2208 = vmatpush1.msra.mxu0 0.0
          %2209 = vmatprep.subr.mxu0 0.0
          %2210 = vmatpush1.msra.mxu0 0.0
          %2211 = vmatprep.subr.mxu0 0.0
          %2212 = vmatpush1.msra.mxu0 0.0
          %2213 = vmatprep.subr.mxu0 0.0
          %2214 = vmatpush1.msra.mxu0 0.0
          %2215 = vmatprep.subr.mxu0 0.0
          %2216 = vmatpush1.msra.mxu0 0.0
          %2217 = vmatprep.subr.mxu0 0.0
          %2218 = vmatpush1.msra.mxu0 0.0
          %2219 = vmatprep.subr.mxu0 0.0
          %2220 = vmatpush1.msra.mxu0 0.0
          %2221 = vmatprep.subr.mxu0 0.0
          %2222 = vmatpush1.msra.mxu0 0.0
          %2223 = vmatprep.subr.mxu0 0.0
          %2224 = vmatpush1.msra.mxu0 0.0
          %2225 = vmatprep.subr.mxu0 0.0
          %2226 = vmatpush1.msra.mxu0 0.0
          %2227 = vmatprep.subr.mxu0 0.0
          %2228 = vmatpush1.msra.mxu0 0.0
          %2229 = vmatprep.subr.mxu0 0.0
          %2230 = vmatpush1.msra.mxu0 0.0
          %2231 = vmatprep.subr.mxu0 0.0
          %2232 = vmatpush1.msra.mxu0 0.0
          %2233 = vmatprep.subr.mxu0 0.0
          %2234 = vmatpush1.msra.mxu0 0.0
          %2235 = vmatprep.subr.mxu0 0.0
          %2236 = vmatpush1.msra.mxu0 0.0
          %2237 = vmatprep.mubr.f32.mxu0 0.0
          %v2238 = vand.u32 %v1599, 4294901760
          %v2239 = vsub.f32 %v1599, %v2238
          %v2240 = vand.u32 %v2239, 4294901760
          %v2241 = vsub.f32 %v2239, %v2240
          %v2242 = vand.u32 %v2241, 4294901760
          %2243 = vmatmul.mubr.f32.gmra.mrb[0].mxu0 %v2242
          %v2244 = vpop.f32.mrb[0].mxu0
          %v2245 = vadd.f32 0.0, %v2244
          %v2246 = vpop.f32.mrb[0].mxu0
          %2247 = vmatprep.mubr.f32.mxu0 0.0
          %v2248 = vand.u32 %v1600, 4294901760
          %v2249 = vsub.f32 %v1600, %v2248
          %v2250 = vand.u32 %v2249, 4294901760
          %v2251 = vsub.f32 %v2249, %v2250
          %v2252 = vand.u32 %v2251, 4294901760
          %2253 = vmatmul.mubr.f32.gmra.mrb[0].mxu0 %v2252
          %v2254 = vpop.f32.mrb[0].mxu0
          %v2255 = vadd.f32 0.0, %v2254
          %v2256 = vpop.f32.mrb[0].mxu0
          %2257 = vmatprep.mubr.f32.mxu0 0.0
          %v2258 = vand.u32 %v1601, 4294901760
          %v2259 = vsub.f32 %v1601, %v2258
          %v2260 = vand.u32 %v2259, 4294901760
          %v2261 = vsub.f32 %v2259, %v2260
          %v2262 = vand.u32 %v2261, 4294901760
          %2263 = vmatmul.mubr.f32.gmra.mrb[0].mxu0 %v2262
          %v2264 = vpop.f32.mrb[0].mxu0
          %v2265 = vadd.f32 0.0, %v2264
          %v2266 = vpop.f32.mrb[0].mxu0
          %2267 = vmatprep.mubr.f32.mxu0 0.0
          %v2268 = vand.u32 %v1602, 4294901760
          %v2269 = vsub.f32 %v1602, %v2268
          %v2270 = vand.u32 %v2269, 4294901760
          %v2271 = vsub.f32 %v2269, %v2270
          %v2272 = vand.u32 %v2271, 4294901760
          %2273 = vmatmul.mubr.f32.gmra.mrb[0].mxu0 %v2272
          %v2274 = vpop.f32.mrb[0].mxu0
          %v2275 = vadd.f32 0.0, %v2274
          %v2276 = vpop.f32.mrb[0].mxu0
          %2277 = vdwg.mxu0
          %2278 = vmatprep.subr.mxu0 0.0
          %2279 = vmatpush1.msra.mxu0 0.0
          %2280 = vmatprep.subr.mxu0 0.0
          %2281 = vmatpush1.msra.mxu0 0.0
          %2282 = vmatprep.subr.mxu0 0.0
          %2283 = vmatpush1.msra.mxu0 0.0
          %2284 = vmatprep.subr.mxu0 0.0
          %2285 = vmatpush1.msra.mxu0 0.0
          %2286 = vmatprep.subr.mxu0 0.0
          %2287 = vmatpush1.msra.mxu0 0.0
          %2288 = vmatprep.subr.mxu0 0.0
          %2289 = vmatpush1.msra.mxu0 0.0
          %2290 = vmatprep.subr.mxu0 0.0
          %2291 = vmatpush1.msra.mxu0 0.0
          %2292 = vmatprep.subr.mxu0 0.0
          %2293 = vmatpush1.msra.mxu0 0.0
          %2294 = vmatprep.subr.mxu0 0.0
          %2295 = vmatpush1.msra.mxu0 0.0
          %2296 = vmatprep.subr.mxu0 0.0
          %2297 = vmatpush1.msra.mxu0 0.0
          %2298 = vmatprep.subr.mxu0 0.0
          %2299 = vmatpush1.msra.mxu0 0.0
          %2300 = vmatprep.subr.mxu0 0.0
          %2301 = vmatpush1.msra.mxu0 0.0
          %2302 = vmatprep.subr.mxu0 0.0
          %2303 = vmatpush1.msra.mxu0 0.0
          %2304 = vmatprep.subr.mxu0 0.0
          %2305 = vmatpush1.msra.mxu0 0.0
          %2306 = vmatprep.subr.mxu0 0.0
          %2307 = vmatpush1.msra.mxu0 0.0
          %2308 = vmatprep.subr.mxu0 0.0
          %2309 = vmatpush1.msra.mxu0 0.0
          %2310 = vmatprep.subr.mxu0 0.0
          %2311 = vmatpush1.msra.mxu0 0.0
          %2312 = vmatprep.subr.mxu0 0.0
          %2313 = vmatpush1.msra.mxu0 0.0
          %2314 = vmatprep.subr.mxu0 0.0
          %2315 = vmatpush1.msra.mxu0 0.0
          %2316 = vmatprep.subr.mxu0 0.0
          %2317 = vmatpush1.msra.mxu0 0.0
          %2318 = vmatprep.subr.mxu0 0.0
          %2319 = vmatpush1.msra.mxu0 0.0
          %2320 = vmatprep.subr.mxu0 0.0
          %2321 = vmatpush1.msra.mxu0 0.0
          %2322 = vmatprep.subr.mxu0 0.0
          %2323 = vmatpush1.msra.mxu0 0.0
          %2324 = vmatprep.subr.mxu0 0.0
          %2325 = vmatpush1.msra.mxu0 0.0
          %2326 = vmatprep.subr.mxu0 0.0
          %2327 = vmatpush1.msra.mxu0 0.0
          %2328 = vmatprep.subr.mxu0 0.0
          %2329 = vmatpush1.msra.mxu0 0.0
          %2330 = vmatprep.subr.mxu0 0.0
          %2331 = vmatpush1.msra.mxu0 0.0
          %2332 = vmatprep.subr.mxu0 0.0
          %2333 = vmatpush1.msra.mxu0 0.0
          %2334 = vmatprep.subr.mxu0 0.0
          %2335 = vmatpush1.msra.mxu0 0.0
          %2336 = vmatprep.subr.mxu0 0.0
          %2337 = vmatpush1.msra.mxu0 0.0
          %2338 = vmatprep.subr.mxu0 0.0
          %2339 = vmatpush1.msra.mxu0 0.0
          %2340 = vmatprep.subr.mxu0 0.0
          %2341 = vmatpush1.msra.mxu0 0.0
          %2342 = vmatprep.mubr.f32.mxu0 0.0
          %v2343 = vand.u32 %v1599, 4294901760
          %2344 = vmatmul.mubr.f32.gmra.mrb[0].mxu0 %v2343
          %v2345 = vpop.f32.mrb[0].mxu0
          %v2346 = vadd.f32 %v2245, %v2345
          %v2347 = vpop.f32.mrb[0].mxu0
          %2348 = vmatprep.mubr.f32.mxu0 0.0
          %v2349 = vand.u32 %v1600, 4294901760
          %2350 = vmatmul.mubr.f32.gmra.mrb[0].mxu0 %v2349
          %v2351 = vpop.f32.mrb[0].mxu0
          %v2352 = vadd.f32 %v2255, %v2351
          %v2353 = vpop.f32.mrb[0].mxu0
          %2354 = vmatprep.mubr.f32.mxu0 0.0
          %v2355 = vand.u32 %v1601, 4294901760
          %2356 = vmatmul.mubr.f32.gmra.mrb[0].mxu0 %v2355
          %v2357 = vpop.f32.mrb[0].mxu0
          %v2358 = vadd.f32 %v2265, %v2357
          %v2359 = vpop.f32.mrb[0].mxu0
          %2360 = vmatprep.mubr.f32.mxu0 0.0
          %v2361 = vand.u32 %v1602, 4294901760
          %2362 = vmatmul.mubr.f32.gmra.mrb[0].mxu0 %v2361
          %v2363 = vpop.f32.mrb[0].mxu0
          %v2364 = vadd.f32 %v2275, %v2363
          %v2365 = vpop.f32.mrb[0].mxu0
          %2366 = vdwg.mxu0
          %2367 = vmatprep.subr.mxu0 0.0
          %2368 = vmatpush1.msra.mxu0 0.0
          %2369 = vmatprep.subr.mxu0 0.0
          %2370 = vmatpush1.msra.mxu0 0.0
          %2371 = vmatprep.subr.mxu0 0.0
          %2372 = vmatpush1.msra.mxu0 0.0
          %2373 = vmatprep.subr.mxu0 0.0
          %2374 = vmatpush1.msra.mxu0 0.0
          %2375 = vmatprep.subr.mxu0 0.0
          %2376 = vmatpush1.msra.mxu0 0.0
          %2377 = vmatprep.subr.mxu0 0.0
          %2378 = vmatpush1.msra.mxu0 0.0
          %2379 = vmatprep.subr.mxu0 0.0
          %2380 = vmatpush1.msra.mxu0 0.0
          %2381 = vmatprep.subr.mxu0 0.0
          %2382 = vmatpush1.msra.mxu0 0.0
          %2383 = vmatprep.subr.mxu0 0.0
          %2384 = vmatpush1.msra.mxu0 0.0
          %2385 = vmatprep.subr.mxu0 0.0
          %2386 = vmatpush1.msra.mxu0 0.0
          %2387 = vmatprep.subr.mxu0 0.0
          %2388 = vmatpush1.msra.mxu0 0.0
          %2389 = vmatprep.subr.mxu0 0.0
          %2390 = vmatpush1.msra.mxu0 0.0
          %2391 = vmatprep.subr.mxu0 0.0
          %2392 = vmatpush1.msra.mxu0 0.0
          %2393 = vmatprep.subr.mxu0 0.0
          %2394 = vmatpush1.msra.mxu0 0.0
          %2395 = vmatprep.subr.mxu0 0.0
          %2396 = vmatpush1.msra.mxu0 0.0
          %2397 = vmatprep.subr.mxu0 0.0
          %2398 = vmatpush1.msra.mxu0 0.0
          %2399 = vmatprep.subr.mxu0 0.0
          %2400 = vmatpush1.msra.mxu0 0.0
          %2401 = vmatprep.subr.mxu0 0.0
          %2402 = vmatpush1.msra.mxu0 0.0
          %2403 = vmatprep.subr.mxu0 0.0
          %2404 = vmatpush1.msra.mxu0 0.0
          %2405 = vmatprep.subr.mxu0 0.0
          %2406 = vmatpush1.msra.mxu0 0.0
          %2407 = vmatprep.subr.mxu0 0.0
          %2408 = vmatpush1.msra.mxu0 0.0
          %2409 = vmatprep.subr.mxu0 0.0
          %2410 = vmatpush1.msra.mxu0 0.0
          %2411 = vmatprep.subr.mxu0 0.0
          %2412 = vmatpush1.msra.mxu0 0.0
          %2413 = vmatprep.subr.mxu0 0.0
          %2414 = vmatpush1.msra.mxu0 0.0
          %2415 = vmatprep.subr.mxu0 0.0
          %2416 = vmatpush1.msra.mxu0 0.0
          %2417 = vmatprep.subr.mxu0 0.0
          %2418 = vmatpush1.msra.mxu0 0.0
          %2419 = vmatprep.subr.mxu0 0.0
          %2420 = vmatpush1.msra.mxu0 0.0
          %2421 = vmatprep.subr.mxu0 0.0
          %2422 = vmatpush1.msra.mxu0 0.0
          %2423 = vmatprep.subr.mxu0 0.0
          %2424 = vmatpush1.msra.mxu0 0.0
          %2425 = vmatprep.subr.mxu0 0.0
          %2426 = vmatpush1.msra.mxu0 0.0
          %2427 = vmatprep.subr.mxu0 0.0
          %2428 = vmatpush1.msra.mxu0 0.0
          %2429 = vmatprep.subr.mxu0 0.0
          %2430 = vmatpush1.msra.mxu0 0.0
          %2431 = vmatprep.mubr.f32.mxu0 0.0
          %v2432 = vand.u32 %v1599, 4294901760
          %v2433 = vsub.f32 %v1599, %v2432
          %2434 = vmatmul.mubr.f32.gmra.mrb[0].mxu0 %v2433
          %v2435 = vpop.f32.mrb[0].mxu0
          %v2436 = vadd.f32 %v2346, %v2435
          %v2437 = vpop.f32.mrb[0].mxu0
          %2438 = vmatprep.mubr.f32.mxu0 0.0
          %v2439 = vand.u32 %v1600, 4294901760
          %v2440 = vsub.f32 %v1600, %v2439
          %2441 = vmatmul.mubr.f32.gmra.mrb[0].mxu0 %v2440
          %v2442 = vpop.f32.mrb[0].mxu0
          %v2443 = vadd.f32 %v2352, %v2442
          %v2444 = vpop.f32.mrb[0].mxu0
          %2445 = vmatprep.mubr.f32.mxu0 0.0
          %v2446 = vand.u32 %v1601, 4294901760
          %v2447 = vsub.f32 %v1601, %v2446
          %2448 = vmatmul.mubr.f32.gmra.mrb[0].mxu0 %v2447
          %v2449 = vpop.f32.mrb[0].mxu0
          %v2450 = vadd.f32 %v2358, %v2449
          %v2451 = vpop.f32.mrb[0].mxu0
          %2452 = vmatprep.mubr.f32.mxu0 0.0
          %v2453 = vand.u32 %v1602, 4294901760
          %v2454 = vsub.f32 %v1602, %v2453
          %2455 = vmatmul.mubr.f32.gmra.mrb[0].mxu0 %v2454
          %v2456 = vpop.f32.mrb[0].mxu0
          %v2457 = vadd.f32 %v2364, %v2456
          %v2458 = vpop.f32.mrb[0].mxu0
          %2459 = vdwg.mxu0
          %2460 = vmatprep.subr.mxu0 0.0
          %2461 = vmatpush1.msra.mxu0 1.0
          %2462 = vmatprep.subr.mxu0 0.0
          %2463 = vmatpush1.msra.mxu0 1.0
          %2464 = vmatprep.subr.mxu0 0.0
          %2465 = vmatpush1.msra.mxu0 1.0
          %2466 = vmatprep.subr.mxu0 0.0
          %2467 = vmatpush1.msra.mxu0 1.0
          %2468 = vmatprep.subr.mxu0 0.0
          %2469 = vmatpush1.msra.mxu0 1.0
          %2470 = vmatprep.subr.mxu0 0.0
          %2471 = vmatpush1.msra.mxu0 1.0
          %2472 = vmatprep.subr.mxu0 0.0
          %2473 = vmatpush1.msra.mxu0 1.0
          %2474 = vmatprep.subr.mxu0 0.0
          %2475 = vmatpush1.msra.mxu0 1.0
          %2476 = vmatprep.subr.mxu0 0.0
          %2477 = vmatpush1.msra.mxu0 1.0
          %2478 = vmatprep.subr.mxu0 0.0
          %2479 = vmatpush1.msra.mxu0 1.0
          %2480 = vmatprep.subr.mxu0 0.0
          %2481 = vmatpush1.msra.mxu0 1.0
          %2482 = vmatprep.subr.mxu0 0.0
          %2483 = vmatpush1.msra.mxu0 1.0
          %2484 = vmatprep.subr.mxu0 0.0
          %2485 = vmatpush1.msra.mxu0 1.0
          %2486 = vmatprep.subr.mxu0 0.0
          %2487 = vmatpush1.msra.mxu0 1.0
          %2488 = vmatprep.subr.mxu0 0.0
          %2489 = vmatpush1.msra.mxu0 1.0
          %2490 = vmatprep.subr.mxu0 0.0
          %2491 = vmatpush1.msra.mxu0 1.0
          %2492 = vmatprep.subr.mxu0 0.0
          %2493 = vmatpush1.msra.mxu0 0.0
          %2494 = vmatprep.subr.mxu0 0.0
          %2495 = vmatpush1.msra.mxu0 0.0
          %2496 = vmatprep.subr.mxu0 0.0
          %2497 = vmatpush1.msra.mxu0 0.0
          %2498 = vmatprep.subr.mxu0 0.0
          %2499 = vmatpush1.msra.mxu0 0.0
          %2500 = vmatprep.subr.mxu0 0.0
          %2501 = vmatpush1.msra.mxu0 0.0
          %2502 = vmatprep.subr.mxu0 0.0
          %2503 = vmatpush1.msra.mxu0 0.0
          %2504 = vmatprep.subr.mxu0 0.0
          %2505 = vmatpush1.msra.mxu0 0.0
          %2506 = vmatprep.subr.mxu0 0.0
          %2507 = vmatpush1.msra.mxu0 0.0
          %2508 = vmatprep.subr.mxu0 0.0
          %2509 = vmatpush1.msra.mxu0 0.0
          %2510 = vmatprep.subr.mxu0 0.0
          %2511 = vmatpush1.msra.mxu0 0.0
          %2512 = vmatprep.subr.mxu0 0.0
          %2513 = vmatpush1.msra.mxu0 0.0
          %2514 = vmatprep.subr.mxu0 0.0
          %2515 = vmatpush1.msra.mxu0 0.0
          %2516 = vmatprep.subr.mxu0 0.0
          %2517 = vmatpush1.msra.mxu0 0.0
          %2518 = vmatprep.subr.mxu0 0.0
          %2519 = vmatpush1.msra.mxu0 0.0
          %2520 = vmatprep.subr.mxu0 0.0
          %2521 = vmatpush1.msra.mxu0 0.0
          %2522 = vmatprep.subr.mxu0 0.0
          %2523 = vmatpush1.msra.mxu0 0.0
          %2524 = vmatprep.mubr.f32.mxu0 0.0
          %v2525 = vand.u32 %v1599, 4294901760
          %v2526 = vsub.f32 %v1599, %v2525
          %v2527 = vand.u32 %v2526, 4294901760
          %2528 = vmatmul.mubr.f32.gmra.mrb[0].mxu0 %v2527
          %v2529 = vpop.f32.mrb[0].mxu0
          %v2530 = vadd.f32 %v2436, %v2529
          %v2531 = vpop.f32.mrb[0].mxu0
          %2532 = vmatprep.mubr.f32.mxu0 0.0
          %v2533 = vand.u32 %v1600, 4294901760
          %v2534 = vsub.f32 %v1600, %v2533
          %v2535 = vand.u32 %v2534, 4294901760
          %2536 = vmatmul.mubr.f32.gmra.mrb[0].mxu0 %v2535
          %v2537 = vpop.f32.mrb[0].mxu0
          %v2538 = vadd.f32 %v2443, %v2537
          %v2539 = vpop.f32.mrb[0].mxu0
          %2540 = vmatprep.mubr.f32.mxu0 0.0
          %v2541 = vand.u32 %v1601, 4294901760
          %v2542 = vsub.f32 %v1601, %v2541
          %v2543 = vand.u32 %v2542, 4294901760
          %2544 = vmatmul.mubr.f32.gmra.mrb[0].mxu0 %v2543
          %v2545 = vpop.f32.mrb[0].mxu0
          %v2546 = vadd.f32 %v2450, %v2545
          %v2547 = vpop.f32.mrb[0].mxu0
          %2548 = vmatprep.mubr.f32.mxu0 0.0
          %v2549 = vand.u32 %v1602, 4294901760
          %v2550 = vsub.f32 %v1602, %v2549
          %v2551 = vand.u32 %v2550, 4294901760
          %2552 = vmatmul.mubr.f32.gmra.mrb[0].mxu0 %v2551
          %v2553 = vpop.f32.mrb[0].mxu0
          %v2554 = vadd.f32 %v2457, %v2553
          %v2555 = vpop.f32.mrb[0].mxu0
          %2556 = vdwg.mxu0
          %2557 = vmatprep.subr.mxu0 0.0
          %2558 = vmatpush1.msra.mxu0 0.0
          %2559 = vmatprep.subr.mxu0 0.0
          %2560 = vmatpush1.msra.mxu0 0.0
          %2561 = vmatprep.subr.mxu0 0.0
          %2562 = vmatpush1.msra.mxu0 0.0
          %2563 = vmatprep.subr.mxu0 0.0
          %2564 = vmatpush1.msra.mxu0 0.0
          %2565 = vmatprep.subr.mxu0 0.0
          %2566 = vmatpush1.msra.mxu0 0.0
          %2567 = vmatprep.subr.mxu0 0.0
          %2568 = vmatpush1.msra.mxu0 0.0
          %2569 = vmatprep.subr.mxu0 0.0
          %2570 = vmatpush1.msra.mxu0 0.0
          %2571 = vmatprep.subr.mxu0 0.0
          %2572 = vmatpush1.msra.mxu0 0.0
          %2573 = vmatprep.subr.mxu0 0.0
          %2574 = vmatpush1.msra.mxu0 0.0
          %2575 = vmatprep.subr.mxu0 0.0
          %2576 = vmatpush1.msra.mxu0 0.0
          %2577 = vmatprep.subr.mxu0 0.0
          %2578 = vmatpush1.msra.mxu0 0.0
          %2579 = vmatprep.subr.mxu0 0.0
          %2580 = vmatpush1.msra.mxu0 0.0
          %2581 = vmatprep.subr.mxu0 0.0
          %2582 = vmatpush1.msra.mxu0 0.0
          %2583 = vmatprep.subr.mxu0 0.0
          %2584 = vmatpush1.msra.mxu0 0.0
          %2585 = vmatprep.subr.mxu0 0.0
          %2586 = vmatpush1.msra.mxu0 0.0
          %2587 = vmatprep.subr.mxu0 0.0
          %2588 = vmatpush1.msra.mxu0 0.0
          %2589 = vmatprep.subr.mxu0 0.0
          %2590 = vmatpush1.msra.mxu0 0.0
          %2591 = vmatprep.subr.mxu0 0.0
          %2592 = vmatpush1.msra.mxu0 0.0
          %2593 = vmatprep.subr.mxu0 0.0
          %2594 = vmatpush1.msra.mxu0 0.0
          %2595 = vmatprep.subr.mxu0 0.0
          %2596 = vmatpush1.msra.mxu0 0.0
          %2597 = vmatprep.subr.mxu0 0.0
          %2598 = vmatpush1.msra.mxu0 0.0
          %2599 = vmatprep.subr.mxu0 0.0
          %2600 = vmatpush1.msra.mxu0 0.0
          %2601 = vmatprep.subr.mxu0 0.0
          %2602 = vmatpush1.msra.mxu0 0.0
          %2603 = vmatprep.subr.mxu0 0.0
          %2604 = vmatpush1.msra.mxu0 0.0
          %2605 = vmatprep.subr.mxu0 0.0
          %2606 = vmatpush1.msra.mxu0 0.0
          %2607 = vmatprep.subr.mxu0 0.0
          %2608 = vmatpush1.msra.mxu0 0.0
          %2609 = vmatprep.subr.mxu0 0.0
          %2610 = vmatpush1.msra.mxu0 0.0
          %2611 = vmatprep.subr.mxu0 0.0
          %2612 = vmatpush1.msra.mxu0 0.0
          %2613 = vmatprep.subr.mxu0 0.0
          %2614 = vmatpush1.msra.mxu0 0.0
          %2615 = vmatprep.subr.mxu0 0.0
          %2616 = vmatpush1.msra.mxu0 0.0
          %2617 = vmatprep.subr.mxu0 0.0
          %2618 = vmatpush1.msra.mxu0 0.0
          %2619 = vmatprep.subr.mxu0 0.0
          %2620 = vmatpush1.msra.mxu0 0.0
          %2621 = vmatprep.mubr.f32.mxu0 0.0
          %v2622 = vand.u32 %v1599, 4294901760
          %2623 = vmatmul.mubr.f32.gmra.mrb[0].mxu0 %v2622
          %v2624 = vpop.f32.mrb[0].mxu0
          %v2625 = vadd.f32 %v2530, %v2624
          %v2626 = vpop.f32.mrb[0].mxu0
          %2627 = vmatprep.mubr.f32.mxu0 0.0
          %v2628 = vand.u32 %v1600, 4294901760
          %2629 = vmatmul.mubr.f32.gmra.mrb[0].mxu0 %v2628
          %v2630 = vpop.f32.mrb[0].mxu0
          %v2631 = vadd.f32 %v2538, %v2630
          %v2632 = vpop.f32.mrb[0].mxu0
          %2633 = vmatprep.mubr.f32.mxu0 0.0
          %v2634 = vand.u32 %v1601, 4294901760
          %2635 = vmatmul.mubr.f32.gmra.mrb[0].mxu0 %v2634
          %v2636 = vpop.f32.mrb[0].mxu0
          %v2637 = vadd.f32 %v2546, %v2636
          %v2638 = vpop.f32.mrb[0].mxu0
          %2639 = vmatprep.mubr.f32.mxu0 0.0
          %v2640 = vand.u32 %v1602, 4294901760
          %2641 = vmatmul.mubr.f32.gmra.mrb[0].mxu0 %v2640
          %v2642 = vpop.f32.mrb[0].mxu0
          %v2643 = vadd.f32 %v2554, %v2642
          %v2644 = vpop.f32.mrb[0].mxu0
          %2645 = vdwg.mxu0
          %2646 = vmatprep.subr.mxu0 0.0
          %2647 = vmatpush1.msra.mxu0 1.0
          %2648 = vmatprep.subr.mxu0 0.0
          %2649 = vmatpush1.msra.mxu0 1.0
          %2650 = vmatprep.subr.mxu0 0.0
          %2651 = vmatpush1.msra.mxu0 1.0
          %2652 = vmatprep.subr.mxu0 0.0
          %2653 = vmatpush1.msra.mxu0 1.0
          %2654 = vmatprep.subr.mxu0 0.0
          %2655 = vmatpush1.msra.mxu0 1.0
          %2656 = vmatprep.subr.mxu0 0.0
          %2657 = vmatpush1.msra.mxu0 1.0
          %2658 = vmatprep.subr.mxu0 0.0
          %2659 = vmatpush1.msra.mxu0 1.0
          %2660 = vmatprep.subr.mxu0 0.0
          %2661 = vmatpush1.msra.mxu0 1.0
          %2662 = vmatprep.subr.mxu0 0.0
          %2663 = vmatpush1.msra.mxu0 1.0
          %2664 = vmatprep.subr.mxu0 0.0
          %2665 = vmatpush1.msra.mxu0 1.0
          %2666 = vmatprep.subr.mxu0 0.0
          %2667 = vmatpush1.msra.mxu0 1.0
          %2668 = vmatprep.subr.mxu0 0.0
          %2669 = vmatpush1.msra.mxu0 1.0
          %2670 = vmatprep.subr.mxu0 0.0
          %2671 = vmatpush1.msra.mxu0 1.0
          %2672 = vmatprep.subr.mxu0 0.0
          %2673 = vmatpush1.msra.mxu0 1.0
          %2674 = vmatprep.subr.mxu0 0.0
          %2675 = vmatpush1.msra.mxu0 1.0
          %2676 = vmatprep.subr.mxu0 0.0
          %2677 = vmatpush1.msra.mxu0 1.0
          %2678 = vmatprep.subr.mxu0 0.0
          %2679 = vmatpush1.msra.mxu0 0.0
          %2680 = vmatprep.subr.mxu0 0.0
          %2681 = vmatpush1.msra.mxu0 0.0
          %2682 = vmatprep.subr.mxu0 0.0
          %2683 = vmatpush1.msra.mxu0 0.0
          %2684 = vmatprep.subr.mxu0 0.0
          %2685 = vmatpush1.msra.mxu0 0.0
          %2686 = vmatprep.subr.mxu0 0.0
          %2687 = vmatpush1.msra.mxu0 0.0
          %2688 = vmatprep.subr.mxu0 0.0
          %2689 = vmatpush1.msra.mxu0 0.0
          %2690 = vmatprep.subr.mxu0 0.0
          %2691 = vmatpush1.msra.mxu0 0.0
          %2692 = vmatprep.subr.mxu0 0.0
          %2693 = vmatpush1.msra.mxu0 0.0
          %2694 = vmatprep.subr.mxu0 0.0
          %2695 = vmatpush1.msra.mxu0 0.0
          %2696 = vmatprep.subr.mxu0 0.0
          %2697 = vmatpush1.msra.mxu0 0.0
          %2698 = vmatprep.subr.mxu0 0.0
          %2699 = vmatpush1.msra.mxu0 0.0
          %2700 = vmatprep.subr.mxu0 0.0
          %2701 = vmatpush1.msra.mxu0 0.0
          %2702 = vmatprep.subr.mxu0 0.0
          %2703 = vmatpush1.msra.mxu0 0.0
          %2704 = vmatprep.subr.mxu0 0.0
          %2705 = vmatpush1.msra.mxu0 0.0
          %2706 = vmatprep.subr.mxu0 0.0
          %2707 = vmatpush1.msra.mxu0 0.0
          %2708 = vmatprep.subr.mxu0 0.0
          %2709 = vmatpush1.msra.mxu0 0.0
          %2710 = vmatprep.mubr.f32.mxu0 0.0
          %v2711 = vand.u32 %v1599, 4294901760
          %2712 = vmatmul.mubr.f32.gmra.mrb[0].mxu0 %v2711
          %v2713 = vpop.f32.mrb[0].mxu0
          %v2714 = vadd.f32 %v2625, %v2713
          %v2715 = vpop.f32.mrb[0].mxu0
          %2716 = vmatprep.mubr.f32.mxu0 0.0
          %v2717 = vand.u32 %v1600, 4294901760
          %2718 = vmatmul.mubr.f32.gmra.mrb[0].mxu0 %v2717
          %v2719 = vpop.f32.mrb[0].mxu0
          %v2720 = vadd.f32 %v2631, %v2719
          %v2721 = vpop.f32.mrb[0].mxu0
          %2722 = vmatprep.mubr.f32.mxu0 0.0
          %v2723 = vand.u32 %v1601, 4294901760
          %2724 = vmatmul.mubr.f32.gmra.mrb[0].mxu0 %v2723
          %v2725 = vpop.f32.mrb[0].mxu0
          %v2726 = vadd.f32 %v2637, %v2725
          %v2727 = vpop.f32.mrb[0].mxu0
          %2728 = vmatprep.mubr.f32.mxu0 0.0
          %v2729 = vand.u32 %v1602, 4294901760
          %2730 = vmatmul.mubr.f32.gmra.mrb[0].mxu0 %v2729
          %v2731 = vpop.f32.mrb[0].mxu0
          %v2732 = vadd.f32 %v2643, %v2731
          %v2733 = vpop.f32.mrb[0].mxu0
          %2734 = vdwg.mxu0
          %v2735 = vsub.f32 %v2714, %v1599
          %v2736 = vsub.f32 %v2720, %v1600
          %v2737 = vsub.f32 %v2726, %v1601
          %v2738 = vsub.f32 %v2732, %v1602
          %v2739 = vmul.f32 %v2735, %v1575
          %v2740 = vmul.f32 %v2736, %v1576
          %v2741 = vmul.f32 %v2737, %v1577
          %v2742 = vmul.f32 %v2738, %v1578
          %v2743 = vadd.f32 %v786, %v1575
          %v2744 = vadd.f32 %v786, %v1576
          %v2745 = vadd.f32 %v786, %v1577
          %v2746 = vadd.f32 %v786, %v1578
          %v2747 = vrcp.pop %v2743
          %v2748 = vrcp.pop %v2744
          %v2749 = vrcp.pop %v2745
          %v2750 = vrcp.pop %v2746
          %v2751 = vmul.f32 %v786, %v2747
          %v2752 = vmul.f32 %v786, %v2748
          %v2753 = vmul.f32 %v786, %v2749
          %v2754 = vmul.f32 %v786, %v2750
          %v2755 = vmul.f32 %v2751, %v2169
          %v2756 = vmul.f32 %v2752, %v2170
          %v2757 = vmul.f32 %v2753, %v2171
          %v2758 = vmul.f32 %v2754, %v2172
          %v2759 = vsub.f32 %v2755, %v525
          %v2760 = vsub.f32 %v2756, %v526
          %v2761 = vsub.f32 %v2757, %v527
          %v2762 = vsub.f32 %v2758, %v528
          %v2763 = vmul.f32 %v2759, %v913
          %v2764 = vmul.f32 %v2760, %v913
          %v2765 = vmul.f32 %v2761, %v913
          %v2766 = vmul.f32 %v2762, %v913
          %v2767 = vadd.f32 %v525, %v2763
          %v2768 = vadd.f32 %v526, %v2764
          %v2769 = vadd.f32 %v527, %v2765
          %v2770 = vadd.f32 %v528, %v2766
          %s2771 = scalar_lea.vmem %s502, %s523 [#allocation6]
          %2772 = vst [vmem:[%s2771] sm:$0xff] %v2767
          %2773 = vst [vmem:[%s2771 + $0x8] sm:$0xff] %v2768
          %2774 = vst [vmem:[%s2771 + $0x10] sm:$0xff] %v2769
          %2775 = vst [vmem:[%s2771 + $0x18] sm:$0xff] %v2770
          %v2776 = vmul.f32 %v2751, %v2739
          %v2777 = vmul.f32 %v2752, %v2740
          %v2778 = vmul.f32 %v2753, %v2741
          %v2779 = vmul.f32 %v2754, %v2742
          %v2780 = vsub.f32 %v2776, %v531
          %v2781 = vsub.f32 %v2777, %v532
          %v2782 = vsub.f32 %v2778, %v533
          %v2783 = vsub.f32 %v2779, %v534
          %v2784 = vmul.f32 %v2780, %v913
          %v2785 = vmul.f32 %v2781, %v913
          %v2786 = vmul.f32 %v2782, %v913
          %v2787 = vmul.f32 %v2783, %v913
          %v2788 = vadd.f32 %v531, %v2784
          %v2789 = vadd.f32 %v532, %v2785
          %v2790 = vadd.f32 %v533, %v2786
          %v2791 = vadd.f32 %v534, %v2787
          %s2792 = scalar_lea.vmem %s502, 64 [#allocation6]
          %s2793 = scalar_lea.vmem %s2792, %s523 [#allocation6]
          %2794 = vst [vmem:[%s2793] sm:$0xff] %v2788
          %2795 = vst [vmem:[%s2793 + $0x8] sm:$0xff] %v2789
          %2796 = vst [vmem:[%s2793 + $0x10] sm:$0xff] %v2790
          %2797 = vst [vmem:[%s2793 + $0x18] sm:$0xff] %v2791
          %v2798 = vmul.f32 %v2751, %v1575
          %v2799 = vmul.f32 %v2752, %v1576
          %v2800 = vmul.f32 %v2753, %v1577
          %v2801 = vmul.f32 %v2754, %v1578
          %v2802 = vsub.f32 %v2798, %v555
          %v2803 = vsub.f32 %v2799, %v556
          %v2804 = vsub.f32 %v2800, %v557
          %v2805 = vsub.f32 %v2801, %v558
          %v2806 = vmul.f32 %v2802, %v913
          %v2807 = vmul.f32 %v2803, %v913
          %v2808 = vmul.f32 %v2804, %v913
          %v2809 = vmul.f32 %v2805, %v913
          %v2810 = vadd.f32 %v555, %v2806
          %v2811 = vadd.f32 %v556, %v2807
          %v2812 = vadd.f32 %v557, %v2808
          %v2813 = vadd.f32 %v558, %v2809
          %s2814 = scalar_lea.vmem %s502, 320 [#allocation6]
          %s2815 = scalar_lea.vmem %s2814, %s523 [#allocation6]
          %2816 = vst [vmem:[%s2815] sm:$0xff] %v2810
          %2817 = vst [vmem:[%s2815 + $0x8] sm:$0xff] %v2811
          %2818 = vst [vmem:[%s2815 + $0x10] sm:$0xff] %v2812
          %2819 = vst [vmem:[%s2815 + $0x18] sm:$0xff] %v2813
        $region121: #{bigabp_unfolding_iter.1} parent=103 // loop_footer
          %s522 = sadd.s32 1, %s518
        $region122: #{bigabp_unfolding_iter.1} parent=103 // loop_footer_branch
          %517 = sbr.rel target = $region118
        $region123: #{bigabp_unfolding_iter.1} parent=103 // loop_exit
          _
        %s2820 = sand.u32 %s123, 1
        %s2821 = sand.u32 %s123, 1
        %s2822 = smul.addr %s2821, 384
        %s2823 = scalar_lea.vmem [#allocation6], %s2822
        // Predicated region
        $region124: #{bigabp_unfolding_iter.1} parent=103 // pred_check
          %p2824 = pneg %p133
        $region125: #{bigabp_unfolding_iter.1} parent=103 // pred_check_branch
          %2826 = sbr.rel (%p2824) target = $region127
        $region126: #{bigabp_unfolding_iter.1} parent=103 // pred_region
          %s2827 = smul.u32 2, %s16
          %s2828 = smul.addr %s2827, 4
          %s2829 = smul.addr %s2828, 8
          %s2830 = scalar_lea.vmem %s4, %s2829
          // Predicated region
          $region128: #{bigabp_unfolding_iter.1} parent=126 // pred_check
            _
          $region129: #{bigabp_unfolding_iter.1} parent=126 // pred_check_branch
            %2832 = sbr.rel (0) target = $region131
          $region130: #{bigabp_unfolding_iter.1} parent=126 // pred_region
            // Predicated region
            $region132: #{bigabp_unfolding_iter.1} parent=130 // pred_check
              _
            $region133: #{bigabp_unfolding_iter.1} parent=130 // pred_check_branch
              %2834 = sbr.rel (0) target = $region135
            $region134: #{bigabp_unfolding_iter.1} parent=130 // pred_region
              // Predicated region
              $region147: #{bigabp_unfolding_iter.1} parent=134 // pred_check
                _
              $region148: #{bigabp_unfolding_iter.1} parent=134 // pred_check_branch
                %2943 = sbr.rel (0) target = $region150
              $region149: #{bigabp_unfolding_iter.1} parent=134 // pred_region
                loop: start=0, step=1, limit=1
                $region151: #{bigabp_unfolding_iter.1} parent=149 // loop_pre_header
                  _
                $region152: #{bigabp_unfolding_iter.1} parent=149 // loop_header
                  %s2945 = sphi 0, %s2949
                  %p2946 = scmp.ge.s32.totalorder %s2945, 1
                  %s2950 = sphi %s2823, %s2823
                  %s2951 = sphi %s2830, %s2830
                $region153: #{bigabp_unfolding_iter.1} parent=149 // loop_header_branch
                  %2948 = sbr.rel (%p2946) target = $region157
                $region154: #{bigabp_unfolding_iter.1} parent=149 // loop_body
                  %v2952 = vld [vmem:[%s2950] sm:$0xff]
                  %2953 = vst [vmem:[%s2951] sm:$0xff] %v2952
                  %v2954 = vld [vmem:[%s2950 + $0x8] sm:$0xff]
                  %2955 = vst [vmem:[%s2951 + $0x8] sm:$0xff] %v2954
                  %v2956 = vld [vmem:[%s2950 + $0x10] sm:$0xff]
                  %2957 = vst [vmem:[%s2951 + $0x10] sm:$0xff] %v2956
                  %v2958 = vld [vmem:[%s2950 + $0x18] sm:$0xff]
                  %2959 = vst [vmem:[%s2951 + $0x18] sm:$0xff] %v2958
                  %v2960 = vld [vmem:[%s2950 + $0x20] sm:$0xff]
                  %2961 = vst [vmem:[%s2951 + $0x20] sm:$0xff] %v2960
                  %v2962 = vld [vmem:[%s2950 + $0x28] sm:$0xff]
                  %2963 = vst [vmem:[%s2951 + $0x28] sm:$0xff] %v2962
                  %v2964 = vld [vmem:[%s2950 + $0x30] sm:$0xff]
                  %2965 = vst [vmem:[%s2951 + $0x30] sm:$0xff] %v2964
                  %v2966 = vld [vmem:[%s2950 + $0x38] sm:$0xff]
                  %2967 = vst [vmem:[%s2951 + $0x38] sm:$0xff] %v2966
                  %v2968 = vld [vmem:[%s2950 + $0x40] sm:$0xff]
                  %2969 = vst [vmem:[%s2951 + $0x80] sm:$0xff] %v2968
                  %v2970 = vld [vmem:[%s2950 + $0x48] sm:$0xff]
                  %2971 = vst [vmem:[%s2951 + $0x88] sm:$0xff] %v2970
                  %v2972 = vld [vmem:[%s2950 + $0x50] sm:$0xff]
                  %2973 = vst [vmem:[%s2951 + $0x90] sm:$0xff] %v2972
                  %v2974 = vld [vmem:[%s2950 + $0x58] sm:$0xff]
                  %2975 = vst [vmem:[%s2951 + $0x98] sm:$0xff] %v2974
                  %v2976 = vld [vmem:[%s2950 + $0x60] sm:$0xff]
                  %2977 = vst [vmem:[%s2951 + $0xa0] sm:$0xff] %v2976
                  %v2978 = vld [vmem:[%s2950 + $0x68] sm:$0xff]
                  %2979 = vst [vmem:[%s2951 + $0xa8] sm:$0xff] %v2978
                  %v2980 = vld [vmem:[%s2950 + $0x70] sm:$0xff]
                  %2981 = vst [vmem:[%s2951 + $0xb0] sm:$0xff] %v2980
                  %v2982 = vld [vmem:[%s2950 + $0x78] sm:$0xff]
                  %2983 = vst [vmem:[%s2951 + $0xb8] sm:$0xff] %v2982
                  %v2984 = vld [vmem:[%s2950 + $0x80] sm:$0xff]
                  %2985 = vst [vmem:[%s2951 + $0x100] sm:$0xff] %v2984
                  %v2986 = vld [vmem:[%s2950 + $0x88] sm:$0xff]
                  %2987 = vst [vmem:[%s2951 + $0x108] sm:$0xff] %v2986
                  %v2988 = vld [vmem:[%s2950 + $0x90] sm:$0xff]
                  %2989 = vst [vmem:[%s2951 + $0x110] sm:$0xff] %v2988
                  %v2990 = vld [vmem:[%s2950 + $0x98] sm:$0xff]
                  %2991 = vst [vmem:[%s2951 + $0x118] sm:$0xff] %v2990
                  %v2992 = vld [vmem:[%s2950 + $0xa0] sm:$0xff]
                  %2993 = vst [vmem:[%s2951 + $0x120] sm:$0xff] %v2992
                  %v2994 = vld [vmem:[%s2950 + $0xa8] sm:$0xff]
                  %2995 = vst [vmem:[%s2951 + $0x128] sm:$0xff] %v2994
                  %v2996 = vld [vmem:[%s2950 + $0xb0] sm:$0xff]
                  %2997 = vst [vmem:[%s2951 + $0x130] sm:$0xff] %v2996
                  %v2998 = vld [vmem:[%s2950 + $0xb8] sm:$0xff]
                  %2999 = vst [vmem:[%s2951 + $0x138] sm:$0xff] %v2998
                  %v3000 = vld [vmem:[%s2950 + $0xc0] sm:$0xff]
                  %3001 = vst [vmem:[%s2951 + $0x180] sm:$0xff] %v3000
                  %v3002 = vld [vmem:[%s2950 + $0xc8] sm:$0xff]
                  %3003 = vst [vmem:[%s2951 + $0x188] sm:$0xff] %v3002
                  %v3004 = vld [vmem:[%s2950 + $0xd0] sm:$0xff]
                  %3005 = vst [vmem:[%s2951 + $0x190] sm:$0xff] %v3004
                  %v3006 = vld [vmem:[%s2950 + $0xd8] sm:$0xff]
                  %3007 = vst [vmem:[%s2951 + $0x198] sm:$0xff] %v3006
                  %v3008 = vld [vmem:[%s2950 + $0xe0] sm:$0xff]
                  %3009 = vst [vmem:[%s2951 + $0x1a0] sm:$0xff] %v3008
                  %v3010 = vld [vmem:[%s2950 + $0xe8] sm:$0xff]
                  %3011 = vst [vmem:[%s2951 + $0x1a8] sm:$0xff] %v3010
                  %v3012 = vld [vmem:[%s2950 + $0xf0] sm:$0xff]
                  %3013 = vst [vmem:[%s2951 + $0x1b0] sm:$0xff] %v3012
                  %v3014 = vld [vmem:[%s2950 + $0xf8] sm:$0xff]
                  %3015 = vst [vmem:[%s2951 + $0x1b8] sm:$0xff] %v3014
                  %v3016 = vld [vmem:[%s2950 + $0x100] sm:$0xff]
                  %3017 = vst [vmem:[%s2951 + $0x200] sm:$0xff] %v3016
                  %v3018 = vld [vmem:[%s2950 + $0x108] sm:$0xff]
                  %3019 = vst [vmem:[%s2951 + $0x208] sm:$0xff] %v3018
                  %v3020 = vld [vmem:[%s2950 + $0x110] sm:$0xff]
                  %3021 = vst [vmem:[%s2951 + $0x210] sm:$0xff] %v3020
                  %v3022 = vld [vmem:[%s2950 + $0x118] sm:$0xff]
                  %3023 = vst [vmem:[%s2951 + $0x218] sm:$0xff] %v3022
                  %v3024 = vld [vmem:[%s2950 + $0x120] sm:$0xff]
                  %3025 = vst [vmem:[%s2951 + $0x220] sm:$0xff] %v3024
                  %v3026 = vld [vmem:[%s2950 + $0x128] sm:$0xff]
                  %3027 = vst [vmem:[%s2951 + $0x228] sm:$0xff] %v3026
                  %v3028 = vld [vmem:[%s2950 + $0x130] sm:$0xff]
                  %3029 = vst [vmem:[%s2951 + $0x230] sm:$0xff] %v3028
                  %v3030 = vld [vmem:[%s2950 + $0x138] sm:$0xff]
                  %3031 = vst [vmem:[%s2951 + $0x238] sm:$0xff] %v3030
                  %v3032 = vld [vmem:[%s2950 + $0x140] sm:$0xff]
                  %3033 = vst [vmem:[%s2951 + $0x280] sm:$0xff] %v3032
                  %v3034 = vld [vmem:[%s2950 + $0x148] sm:$0xff]
                  %3035 = vst [vmem:[%s2951 + $0x288] sm:$0xff] %v3034
                  %v3036 = vld [vmem:[%s2950 + $0x150] sm:$0xff]
                  %3037 = vst [vmem:[%s2951 + $0x290] sm:$0xff] %v3036
                  %v3038 = vld [vmem:[%s2950 + $0x158] sm:$0xff]
                  %3039 = vst [vmem:[%s2951 + $0x298] sm:$0xff] %v3038
                  %v3040 = vld [vmem:[%s2950 + $0x160] sm:$0xff]
                  %3041 = vst [vmem:[%s2951 + $0x2a0] sm:$0xff] %v3040
                  %v3042 = vld [vmem:[%s2950 + $0x168] sm:$0xff]
                  %3043 = vst [vmem:[%s2951 + $0x2a8] sm:$0xff] %v3042
                  %v3044 = vld [vmem:[%s2950 + $0x170] sm:$0xff]
                  %3045 = vst [vmem:[%s2951 + $0x2b0] sm:$0xff] %v3044
                  %v3046 = vld [vmem:[%s2950 + $0x178] sm:$0xff]
                  %3047 = vst [vmem:[%s2951 + $0x2b8] sm:$0xff] %v3046
                $region155: #{bigabp_unfolding_iter.1} parent=149 // loop_footer
                  %s2949 = sadd.s32 1, %s2945
                $region156: #{bigabp_unfolding_iter.1} parent=149 // loop_footer_branch
                  %2944 = sbr.rel target = $region152
                $region157: #{bigabp_unfolding_iter.1} parent=149 // loop_exit
                  _
              $region150: #{bigabp_unfolding_iter.1} parent=134 // pred_fallthru
                _
              // Predicated region
              $region158: #{bigabp_unfolding_iter.1} parent=134 // pred_check
                _
              $region159: #{bigabp_unfolding_iter.1} parent=134 // pred_check_branch
                %3049 = sbr.rel target = $region161
              $region160: #{bigabp_unfolding_iter.1} parent=134 // pred_region
                _
              $region161: #{bigabp_unfolding_iter.1} parent=134 // pred_fallthru
                _
            $region135: #{bigabp_unfolding_iter.1} parent=130 // pred_fallthru
              _
            // Predicated region
            $region136: #{bigabp_unfolding_iter.1} parent=130 // pred_check
              _
            $region137: #{bigabp_unfolding_iter.1} parent=130 // pred_check_branch
              %2836 = sbr.rel target = $region139
            $region138: #{bigabp_unfolding_iter.1} parent=130 // pred_region
              loop: start=0, step=1, limit=1
              $region140: #{bigabp_unfolding_iter.1} parent=138 // loop_pre_header
                _
              $region141: #{bigabp_unfolding_iter.1} parent=138 // loop_header
                %s2839 = sphi 0, %s2843
                %p2840 = scmp.ge.s32.totalorder %s2839, 1
                %s2844 = sphi %s2823, %s2823
                %s2845 = sphi %s2830, %s2830
              $region142: #{bigabp_unfolding_iter.1} parent=138 // loop_header_branch
                %2842 = sbr.rel (%p2840) target = $region146
              $region143: #{bigabp_unfolding_iter.1} parent=138 // loop_body
                %v2846 = vld [vmem:[%s2844] sm:$0xff]
                %2847 = vst [vmem:[%s2845] sm:$0xff] %v2846
                %v2848 = vld [vmem:[%s2844 + $0x8] sm:$0xff]
                %2849 = vst [vmem:[%s2845 + $0x8] sm:$0xff] %v2848
                %v2850 = vld [vmem:[%s2844 + $0x10] sm:$0xff]
                %2851 = vst [vmem:[%s2845 + $0x10] sm:$0xff] %v2850
                %v2852 = vld [vmem:[%s2844 + $0x18] sm:$0xff]
                %2853 = vst [vmem:[%s2845 + $0x18] sm:$0xff] %v2852
                %v2854 = vld [vmem:[%s2844 + $0x20] sm:$0xff]
                %2855 = vst [vmem:[%s2845 + $0x20] sm:$0xff] %v2854
                %v2856 = vld [vmem:[%s2844 + $0x28] sm:$0xff]
                %2857 = vst [vmem:[%s2845 + $0x28] sm:$0xff] %v2856
                %v2858 = vld [vmem:[%s2844 + $0x30] sm:$0xff]
                %2859 = vst [vmem:[%s2845 + $0x30] sm:$0xff] %v2858
                %v2860 = vld [vmem:[%s2844 + $0x38] sm:$0xff]
                %2861 = vst [vmem:[%s2845 + $0x38] sm:$0xff] %v2860
                %v2862 = vld [vmem:[%s2844 + $0x40] sm:$0xff]
                %2863 = vst [vmem:[%s2845 + $0x80] sm:$0xff] %v2862
                %v2864 = vld [vmem:[%s2844 + $0x48] sm:$0xff]
                %2865 = vst [vmem:[%s2845 + $0x88] sm:$0xff] %v2864
                %v2866 = vld [vmem:[%s2844 + $0x50] sm:$0xff]
                %2867 = vst [vmem:[%s2845 + $0x90] sm:$0xff] %v2866
                %v2868 = vld [vmem:[%s2844 + $0x58] sm:$0xff]
                %2869 = vst [vmem:[%s2845 + $0x98] sm:$0xff] %v2868
                %v2870 = vld [vmem:[%s2844 + $0x60] sm:$0xff]
                %2871 = vst [vmem:[%s2845 + $0xa0] sm:$0xff] %v2870
                %v2872 = vld [vmem:[%s2844 + $0x68] sm:$0xff]
                %2873 = vst [vmem:[%s2845 + $0xa8] sm:$0xff] %v2872
                %v2874 = vld [vmem:[%s2844 + $0x70] sm:$0xff]
                %2875 = vst [vmem:[%s2845 + $0xb0] sm:$0xff] %v2874
                %v2876 = vld [vmem:[%s2844 + $0x78] sm:$0xff]
                %2877 = vst [vmem:[%s2845 + $0xb8] sm:$0xff] %v2876
                %v2878 = vld [vmem:[%s2844 + $0x80] sm:$0xff]
                %2879 = vst [vmem:[%s2845 + $0x100] sm:$0xff] %v2878
                %v2880 = vld [vmem:[%s2844 + $0x88] sm:$0xff]
                %2881 = vst [vmem:[%s2845 + $0x108] sm:$0xff] %v2880
                %v2882 = vld [vmem:[%s2844 + $0x90] sm:$0xff]
                %2883 = vst [vmem:[%s2845 + $0x110] sm:$0xff] %v2882
                %v2884 = vld [vmem:[%s2844 + $0x98] sm:$0xff]
                %2885 = vst [vmem:[%s2845 + $0x118] sm:$0xff] %v2884
                %v2886 = vld [vmem:[%s2844 + $0xa0] sm:$0xff]
                %2887 = vst [vmem:[%s2845 + $0x120] sm:$0xff] %v2886
                %v2888 = vld [vmem:[%s2844 + $0xa8] sm:$0xff]
                %2889 = vst [vmem:[%s2845 + $0x128] sm:$0xff] %v2888
                %v2890 = vld [vmem:[%s2844 + $0xb0] sm:$0xff]
                %2891 = vst [vmem:[%s2845 + $0x130] sm:$0xff] %v2890
                %v2892 = vld [vmem:[%s2844 + $0xb8] sm:$0xff]
                %2893 = vst [vmem:[%s2845 + $0x138] sm:$0xff] %v2892
                %v2894 = vld [vmem:[%s2844 + $0xc0] sm:$0xff]
                %2895 = vst [vmem:[%s2845 + $0x180] sm:$0xff] %v2894
                %v2896 = vld [vmem:[%s2844 + $0xc8] sm:$0xff]
                %2897 = vst [vmem:[%s2845 + $0x188] sm:$0xff] %v2896
                %v2898 = vld [vmem:[%s2844 + $0xd0] sm:$0xff]
                %2899 = vst [vmem:[%s2845 + $0x190] sm:$0xff] %v2898
                %v2900 = vld [vmem:[%s2844 + $0xd8] sm:$0xff]
                %2901 = vst [vmem:[%s2845 + $0x198] sm:$0xff] %v2900
                %v2902 = vld [vmem:[%s2844 + $0xe0] sm:$0xff]
                %2903 = vst [vmem:[%s2845 + $0x1a0] sm:$0xff] %v2902
                %v2904 = vld [vmem:[%s2844 + $0xe8] sm:$0xff]
                %2905 = vst [vmem:[%s2845 + $0x1a8] sm:$0xff] %v2904
                %v2906 = vld [vmem:[%s2844 + $0xf0] sm:$0xff]
                %2907 = vst [vmem:[%s2845 + $0x1b0] sm:$0xff] %v2906
                %v2908 = vld [vmem:[%s2844 + $0xf8] sm:$0xff]
                %2909 = vst [vmem:[%s2845 + $0x1b8] sm:$0xff] %v2908
                %v2910 = vld [vmem:[%s2844 + $0x100] sm:$0xff]
                %2911 = vst [vmem:[%s2845 + $0x200] sm:$0xff] %v2910
                %v2912 = vld [vmem:[%s2844 + $0x108] sm:$0xff]
                %2913 = vst [vmem:[%s2845 + $0x208] sm:$0xff] %v2912
                %v2914 = vld [vmem:[%s2844 + $0x110] sm:$0xff]
                %2915 = vst [vmem:[%s2845 + $0x210] sm:$0xff] %v2914
                %v2916 = vld [vmem:[%s2844 + $0x118] sm:$0xff]
                %2917 = vst [vmem:[%s2845 + $0x218] sm:$0xff] %v2916
                %v2918 = vld [vmem:[%s2844 + $0x120] sm:$0xff]
                %2919 = vst [vmem:[%s2845 + $0x220] sm:$0xff] %v2918
                %v2920 = vld [vmem:[%s2844 + $0x128] sm:$0xff]
                %2921 = vst [vmem:[%s2845 + $0x228] sm:$0xff] %v2920
                %v2922 = vld [vmem:[%s2844 + $0x130] sm:$0xff]
                %2923 = vst [vmem:[%s2845 + $0x230] sm:$0xff] %v2922
                %v2924 = vld [vmem:[%s2844 + $0x138] sm:$0xff]
                %2925 = vst [vmem:[%s2845 + $0x238] sm:$0xff] %v2924
                %v2926 = vld [vmem:[%s2844 + $0x140] sm:$0xff]
                %2927 = vst [vmem:[%s2845 + $0x280] sm:$0xff] %v2926
                %v2928 = vld [vmem:[%s2844 + $0x148] sm:$0xff]
                %2929 = vst [vmem:[%s2845 + $0x288] sm:$0xff] %v2928
                %v2930 = vld [vmem:[%s2844 + $0x150] sm:$0xff]
                %2931 = vst [vmem:[%s2845 + $0x290] sm:$0xff] %v2930
                %v2932 = vld [vmem:[%s2844 + $0x158] sm:$0xff]
                %2933 = vst [vmem:[%s2845 + $0x298] sm:$0xff] %v2932
                %v2934 = vld [vmem:[%s2844 + $0x160] sm:$0xff]
                %2935 = vst [vmem:[%s2845 + $0x2a0] sm:$0xff] %v2934
                %v2936 = vld [vmem:[%s2844 + $0x168] sm:$0xff]
                %2937 = vst [vmem:[%s2845 + $0x2a8] sm:$0xff] %v2936
                %v2938 = vld [vmem:[%s2844 + $0x170] sm:$0xff]
                %2939 = vst [vmem:[%s2845 + $0x2b0] sm:$0xff] %v2938
                %v2940 = vld [vmem:[%s2844 + $0x178] sm:$0xff]
                %2941 = vst [vmem:[%s2845 + $0x2b8] sm:$0xff] %v2940
              $region144: #{bigabp_unfolding_iter.1} parent=138 // loop_footer
                %s2843 = sadd.s32 1, %s2839
              $region145: #{bigabp_unfolding_iter.1} parent=138 // loop_footer_branch
                %2838 = sbr.rel target = $region141
              $region146: #{bigabp_unfolding_iter.1} parent=138 // loop_exit
                _
            $region139: #{bigabp_unfolding_iter.1} parent=130 // pred_fallthru
              _
          $region131: #{bigabp_unfolding_iter.1} parent=126 // pred_fallthru
            _
          %3050 = vnop
        $region127: #{bigabp_unfolding_iter.1} parent=103 // pred_fallthru
          _
      $region104: #{bigabp_unfolding_iter.1} parent=5 // pred_fallthru
        _
      %p3051 = scmp.le.s32.totalorder 2, %s11
      // Predicated region
      $region162: #{bigabp_unfolding_iter.1} parent=5 // pred_check
        %p3052 = pneg %p3051
      $region163: #{bigabp_unfolding_iter.1} parent=5 // pred_check_branch
        %3054 = sbr.rel (%p3052) target = $region165
      $region164: #{bigabp_unfolding_iter.1} parent=5 // pred_region
        %s3055 = ssub.s32 %s11, 2
        // Predicated region
        $region166: #{bigabp_unfolding_iter.1} parent=164 // pred_check
          %p3056 = pneg %p139
        $region167: #{bigabp_unfolding_iter.1} parent=164 // pred_check_branch
          %3058 = sbr.rel (%p3056) target = $region169
        $region168: #{bigabp_unfolding_iter.1} parent=164 // pred_region
          %s3059 = sand.u32 %s124, 1
          %s3060 = sand.u32 %s124, 1
          %s3061 = smul.addr %s3060, 384
          %s3062 = scalar_lea.vmem [#allocation6], %s3061
        $region169: #{bigabp_unfolding_iter.1} parent=164 // pred_fallthru
          _
      $region165: #{bigabp_unfolding_iter.1} parent=5 // pred_fallthru
        _
    $region6: #{bigabp_unfolding_iter.1} parent=1 // loop_footer
      %s15 = sadd.s32 1, %s11
    $region7: #{bigabp_unfolding_iter.1} parent=1 // loop_footer_branch
      %10 = sbr.rel target = $region3
    $region8: #{bigabp_unfolding_iter.1} parent=1 // loop_exit
      _
    %3063 = vsyncpa [#allocation3], 1
    %s3064 = scalar_lea.sflag [#allocation3], 1
    %3065 = vsyncpa %s3064, 1

</llo_original>
